<compile_context>
chip_gen: v5e
topology: v5e:2x2
jax: 0.10.0
libtpu: 0.0.40
codegen_flags: <defaults>
</compile_context>

<pallas_src>
import jax
import jax.numpy as jnp
from jax.experimental import pallas as pl
from jax.experimental.pallas import tpu as pltpu


# ----------------------------- Pallas kernels ------------------------------

def _conv3x3_relu_kernel(xp_ref, w_ref, b_ref, o_ref, acc_ref):
    """3x3 'same' conv + bias + ReLU for one row-block of one image.

    xp_ref : (1, H+2, W+2, Cin) f32   whole padded image (resident across row-blocks)
    w_ref  : (9, Cin, Cout)     bf16  tap-major weights (resident)
    b_ref  : (1, Cout)          f32
    o_ref  : (1, RB, W, Cout)   f32   one row-block of the output
    acc_ref: (RB*W, Cout)       f32   VMEM scratch accumulator
    """
    r = pl.program_id(1)
    _, RB, W, Cout = o_ref.shape
    Cin = xp_ref.shape[3]
    row0 = pl.multiple_of(r * RB, RB)
    # In-kernel im2col: 9 shifted slices of the resident padded image,
    # 9 accumulated bf16 MXU matmuls (f32 accumulation).
    for t in range(9):
        dy, dx = divmod(t, 3)
        tap = xp_ref[0, pl.ds(row0 + dy, RB), dx:dx + W, :]
        tap = tap.reshape(RB * W, Cin).astype(jnp.bfloat16)
        part = jnp.dot(tap, w_ref[t], preferred_element_type=jnp.float32)
        if t == 0:
            acc_ref[...] = part
        else:
            acc_ref[...] += part
    out = jnp.maximum(acc_ref[...] + b_ref[...], 0.0)        # f32 epilogue (v5e-safe)
    o_ref[0] = out.reshape(RB, W, Cout)


def _roi_pool_kernel(feat_ref, hmask_ref, wmask_ref, o_ref):
    """roi_pool(output=(P,P)) for one (image, box) pair via separable masked maxes.

    feat_ref : (1, H, W, C)    f32, post-ReLU features (>= 0), C on the lane axis
    hmask_ref: (1, 1, P, H)    f32 {0,1}  bin-row membership
    wmask_ref: (1, 1, P, W)    f32 {0,1}  bin-col membership
    o_ref    : (1, 1, P, P, C) f32
    """
    feat = feat_ref[0]                       # (H, W, C)
    hm = hmask_ref[0, 0]                     # (P, H)
    wm = wmask_ref[0, 0]                     # (P, W)
    neg = jnp.float32(-3.0e38)
    # Stage 1: per column-bin q, masked max over W (sublane reduce) -> (H, P, C).
    m1 = wm[None, :, :, None] > 0.0                                      # (1, P, W, 1)
    colmax = jnp.max(jnp.where(m1, feat[:, None, :, :], neg), axis=2)    # (H, P, C)
    # Stage 2: per row-bin p, masked max over H (leading-dim reduce) -> (P, P, C).
    m2 = hm[:, :, None, None] > 0.0                                      # (P, H, 1, 1)
    pooled = jnp.max(jnp.where(m2, colmax[None, :, :, :], neg), axis=1)  # (P, P, C)
    # Features are post-ReLU (>= 0), so clamping at 0 reproduces torchvision
    # roi_pool's zero output for empty bins exactly.
    o_ref[0, 0] = jnp.maximum(pooled, 0.0)


def _mlp_kernel(x_ref, w1_ref, b1_ref, w2_ref, b2_ref, w3_ref, b3_ref, o_ref):
    # bf16 operands into the MXU, f32 accumulation / bias / ReLU.
    h = jnp.dot(x_ref[...], w1_ref[...], preferred_element_type=jnp.float32)
    h = jnp.maximum(h + b1_ref[...], 0.0)
    h = jnp.dot(h.astype(jnp.bfloat16), w2_ref[...], preferred_element_type=jnp.float32)
    h = jnp.maximum(h + b2_ref[...], 0.0)
    o_ref[...] = (jnp.dot(h.astype(jnp.bfloat16), w3_ref[...],
                          preferred_element_type=jnp.float32) + b3_ref[...])


# ------------------------------ kernel wrappers -----------------------------

def conv3x3_relu(x_nhwc, w, b):
    """3x3 'same' conv + ReLU; im2col + matmul fused inside one Pallas kernel."""
    B, H, W, Cin = x_nhwc.shape
    Cout = w.shape[-1]
    xp = jnp.pad(x_nhwc, ((0, 0), (1, 1), (1, 1), (0, 0)))
    w9 = w.reshape(9, Cin, Cout).astype(jnp.bfloat16)
    b2 = b.reshape(1, Cout).astype(jnp.float32)

    # ~256 output rows per grid step; RB always divides H (no tail, no assert).
    RB = min(H, max(1, 256 // W))
    while H % RB:
        RB -= 1
    NR = H // RB

    return pl.pallas_call(
        _conv3x3_relu_kernel,
        out_shape=jax.ShapeDtypeStruct((B, H, W, Cout), jnp.float32),
        grid=(B, NR),
        in_specs=[
            pl.BlockSpec((1, H + 2, W + 2, Cin), lambda bi, r: (bi, 0, 0, 0)),
            pl.BlockSpec((9, Cin, Cout), lambda bi, r: (0, 0, 0)),
            pl.BlockSpec((1, Cout), lambda bi, r: (0, 0)),
        ],
        out_specs=pl.BlockSpec((1, RB, W, Cout), lambda bi, r: (bi, r, 0, 0)),
        scratch_shapes=[pltpu.VMEM((RB * W, Cout), jnp.float32)],
        compiler_params=pltpu.CompilerParams(
            dimension_semantics=("parallel", "parallel")),
    )(xp, w9, b2)


def roi_max_pool(conv_features_nhwc, hmask, wmask):
    """ops.roi_pool(output_size=(7,7), spatial_scale=1.0) with separable bin masks.

    conv_features_nhwc: [B, H, W, C]; hmask: [B, NB, 7, H]; wmask: [B, NB, 7, W].
    Returns [B, NB, 7, 7, C].
    """
    B, H, W, C = conv_features_nhwc.shape
    NB, P = hmask.shape[1], hmask.shape[2]
    return pl.pallas_call(
        _roi_pool_kernel,
        out_shape=jax.ShapeDtypeStruct((B, NB, P, P, C), jnp.float32),
        grid=(B, NB),
        in_specs=[
            pl.BlockSpec((1, H, W, C), lambda bi, n: (bi, 0, 0, 0)),
            pl.BlockSpec((1, 1, P, H), lambda bi, n: (bi, n, 0, 0)),
            pl.BlockSpec((1, 1, P, W), lambda bi, n: (bi, n, 0, 0)),
        ],
        out_specs=pl.BlockSpec((1, 1, P, P, C), lambda bi, n: (bi, n, 0, 0, 0)),
        compiler_params=pltpu.CompilerParams(
            dimension_semantics=("parallel", "parallel")),
    )(conv_features_nhwc, hmask, wmask)


def mlp(x, params):
    """torch.nn.Sequential(Linear, ReLU, Linear, ReLU, Linear) — one fused Pallas call
    for all ROIs at once (weight-DMA bound; bf16 weights halve the traffic)."""
    (w1, b1), (w2, b2), (w3, b3) = params
    N = x.shape[0]
    return pl.pallas_call(
        _mlp_kernel,
        out_shape=jax.ShapeDtypeStruct((N, w3.shape[1]), jnp.float32),
    )(x.astype(jnp.bfloat16),
      w1.astype(jnp.bfloat16), b1.reshape(1, -1),
      w2.astype(jnp.bfloat16), b2.reshape(1, -1),
      w3.astype(jnp.bfloat16), b3.reshape(1, -1))


# ------------------------------ plain-JAX glue -------------------------------

def maxpool2(x_nhwc):
    B, H, W, C = x_nhwc.shape
    return x_nhwc.reshape(B, H // 2, 2, W // 2, 2, C).max(axis=(2, 4))


def get_mapped_bounding_box(xyxyn):
    """Exact port of getMappedBoundingBox for one image: [NB,4] normalized xyxy."""
    s = xyxyn * 7.0
    return jnp.stack(
        [jnp.floor(s[:, 0]), jnp.floor(s[:, 1]), jnp.ceil(s[:, 2]), jnp.ceil(s[:, 3])],
        axis=1,
    )


def roi_sep_masks(boxes, H, W, P=7):
    """torchvision roi_pool bin membership, factored into row/col masks.

    boxes: [NB, 4] (x1,y1,x2,y2) in feature coordinates (spatial_scale=1.0).
    Returns hmask [NB, P, H] and wmask [NB, P, W], float {0,1}.
    (Full bin mask = outer product hmask[p] x wmask[q], as in torchvision roi_pool.)
    """
    x1 = jnp.round(boxes[:, 0]).astype(jnp.int32)
    y1 = jnp.round(boxes[:, 1]).astype(jnp.int32)
    x2 = jnp.round(boxes[:, 2]).astype(jnp.int32)
    y2 = jnp.round(boxes[:, 3]).astype(jnp.int32)
    roi_w = jnp.maximum(x2 - x1 + 1, 1).astype(jnp.float32)
    roi_h = jnp.maximum(y2 - y1 + 1, 1).astype(jnp.float32)
    bin_w = roi_w / P
    bin_h = roi_h / P
    p = jnp.arange(P, dtype=jnp.float32)
    hstart = jnp.clip(jnp.floor(p[None, :] * bin_h[:, None]).astype(jnp.int32) + y1[:, None], 0, H)
    hend = jnp.clip(jnp.ceil((p[None, :] + 1) * bin_h[:, None]).astype(jnp.int32) + y1[:, None], 0, H)
    wstart = jnp.clip(jnp.floor(p[None, :] * bin_w[:, None]).astype(jnp.int32) + x1[:, None], 0, W)
    wend = jnp.clip(jnp.ceil((p[None, :] + 1) * bin_w[:, None]).astype(jnp.int32) + x1[:, None], 0, W)
    hh = jnp.arange(H)[None, None, :]
    ww = jnp.arange(W)[None, None, :]
    hmask = ((hh >= hstart[:, :, None]) & (hh < hend[:, :, None])).astype(jnp.float32)
    wmask = ((ww >= wstart[:, :, None]) & (ww < wend[:, :, None])).astype(jnp.float32)
    return hmask, wmask


def init_params(key, num_rois, feat_c=64, h1=256, h2=128):
    ks = jax.random.split(key, 14)
    w = lambda k, shape: 0.05 * jax.random.normal(k, shape, jnp.float32)
    conv = [
        (w(ks[0], (3, 3, 3, 16)), w(ks[1], (16,))),
        (w(ks[2], (3, 3, 16, 16)), w(ks[3], (16,))),
        (w(ks[4], (3, 3, 16, 32)), w(ks[5], (32,))),
        (w(ks[6], (3, 3, 32, feat_c)), w(ks[7], (feat_c,))),
    ]
    d_in = feat_c * 7 * 7  # analogue of 25088 = 512*7*7
    mlp_p = [
        (w(ks[8], (d_in, h1)), w(ks[9], (h1,))),
        (w(ks[10], (h1, h2)), w(ks[11], (h2,))),
        (w(ks[12], (h2, num_rois)), w(ks[13], (num_rois,))),
    ]
    return {"conv": conv, "mlp": mlp_p}


def roi_vgg_yolo_forward(img_nchw, boxes_xyxyn, params):
    """Forward pass of roiVGGYoloWithGradCam (scaled-down, synthetic weights/boxes)."""
    # --- vggConvFeatures: conv+ReLU stack ending in ReLU (analogue of features[:35]) ---
    x = jnp.transpose(img_nchw, (0, 2, 3, 1))               # NCHW -> NHWC
    c = params["conv"]
    x = conv3x3_relu(x, *c[0])
    x = conv3x3_relu(x, *c[1])
    x = maxpool2(x)
    x = conv3x3_relu(x, *c[2])
    x = maxpool2(x)
    conv_features = conv3x3_relu(x, *c[3])                  # [B, Hf, Wf, C], >= 0
    B, Hf, Wf, C = conv_features.shape

    # --- yolo boxes -> 7x7 grid cells (getMappedBoundingBox) ---
    mapped = jax.vmap(get_mapped_bounding_box)(boxes_xyxyn)                 # [B, NB, 4]
    NB = mapped.shape[1]
    hmask, wmask = jax.vmap(lambda bx: roi_sep_masks(bx, Hf, Wf))(mapped)   # tiny masks

    # --- ops.roi_pool(output_size=(7,7)) as a Pallas separable masked-max kernel ---
    pooled = roi_max_pool(conv_features, hmask, wmask)       # [B, NB, 7, 7, C]

    # torch.flatten of a [C,7,7] ROI pool is channel-major -> [C*49]
    flat = jnp.transpose(pooled, (0, 1, 4, 2, 3)).reshape(B * NB, C * 49)

    # --- per-ROI MLP (single batched call), then sum over ROIs per image ---
    pieces = mlp(flat, params["mlp"])                        # [B*NB, num_rois]
    num_rois = pieces.shape[-1]
    final_fmris = pieces.reshape(B, NB, num_rois).sum(axis=1)

    # every synthetic image has >= 1 box, so no image is skipped
    indices = list(range(B))
    return final_fmris, indices


# ----------------------------------- main -----------------------------------

if __name__ == "__main__":
    key = jax.random.PRNGKey(0)
    k_img, k_box, k_par = jax.random.split(key, 3)

    B, NB, NUM_ROIS = 2, 3, 8
    img = jax.random.normal(k_img, (B, 3, 32, 32), jnp.float32)   # NCHW, like PyTorch

    # synthetic normalized xyxyn boxes with x1<x2, y1<y2 (stand-in for YOLO output)
    raw = jax.random.uniform(k_box, (B, NB, 4), jnp.float32)
    lo = jnp.minimum(raw[..., :2], raw[..., 2:])
    hi = jnp.maximum(raw[..., :2], raw[..., 2:])
    boxes_xyxyn = jnp.concatenate([lo * 0.8, jnp.clip(hi * 0.8 + 0.1, 0.0, 1.0)], axis=-1)

    params = init_params(k_par, NUM_ROIS)

    final_fmris, indices = roi_vgg_yolo_forward(img, boxes_xyxyn, params)
    jax.block_until_ready(final_fmris)
    assert final_fmris.shape == (B, NUM_ROIS)
    assert indices == list(range(B))
    print("KERNEL_OK")
</pallas_src>

<mosaic_0001>
module attributes {stable_mosaic.version = 11 : i64} {
  func.func @_conv3x3_relu_kernel(%arg0: i32, %arg1: i32, %arg2: memref<1x34x34x3xf32, #tpu.memory_space<vmem>>, %arg3: memref<9x3x16xbf16, #tpu.memory_space<vmem>>, %arg4: memref<1x16xf32, #tpu.memory_space<vmem>>, %arg5: memref<1x8x32x16xf32, #tpu.memory_space<vmem>>, %arg6: memref<256x16xf32, #tpu.memory_space<vmem>>) attributes {dimension_semantics = [#tpu.dimension_semantics<parallel>, #tpu.dimension_semantics<parallel>], iteration_bounds = array<i64: 2, 4>, scalar_prefetch = 0 : i64, scratch_operands = 1 : i64, tpu.core_type = #tpu.core_type<tc>, window_params = [{transform_indices = @transform_0, window_bounds = array<i64: 1, 34, 34, 3>}, {pipeline_mode = #tpu.pipeline_mode<synchronous>, transform_indices = @transform_1, window_bounds = array<i64: 9, 3, 16>}, {pipeline_mode = #tpu.pipeline_mode<synchronous>, transform_indices = @transform_2, window_bounds = array<i64: 1, 16>}, {transform_indices = @transform_3, window_bounds = array<i64: 1, 8, 32, 16>}]} {
    %c8_i32 = arith.constant 8 : i32
    %0 = arith.muli %arg1, %c8_i32 : i32
    %1 = tpu.assume_multiple %0, 8 : i32
    %c0_i32 = arith.constant 0 : i32
    %2 = arith.addi %1, %c0_i32 : i32
    %c0 = arith.constant 0 : index
    %3 = arith.index_cast %2 : i32 to index
    %c0_0 = arith.constant 0 : index
    %c0_1 = arith.constant 0 : index
    %4 = vector.load %arg2[%c0, %3, %c0_0, %c0_1] : memref<1x34x34x3xf32, #tpu.memory_space<vmem>>, vector<1x8x32x3xf32>
    %5 = vector.shape_cast %4 : vector<1x8x32x3xf32> to vector<8x32x3xf32>
    %6 = vector.shape_cast %5 : vector<8x32x3xf32> to vector<256x3xf32>
    %7 = arith.truncf %6 : vector<256x3xf32> to vector<256x3xbf16>
    %c0_2 = arith.constant 0 : index
    %c0_3 = arith.constant 0 : index
    %c0_4 = arith.constant 0 : index
    %8 = vector.load %arg3[%c0_2, %c0_3, %c0_4] : memref<9x3x16xbf16, #tpu.memory_space<vmem>>, vector<1x3x16xbf16>
    %9 = vector.shape_cast %8 : vector<1x3x16xbf16> to vector<3x16xbf16>
    %cst = arith.constant dense<0.000000e+00> : vector<256x16xf32>
    %10 = tpu.matmul %7, %9, %cst {dimension_numbers = #tpu.dot_dimension_numbers<[1], [0], [0], [1], [0, 0, 1, 1], [], []>} : vector<256x3xbf16>, vector<3x16xbf16>, vector<256x16xf32> -> vector<256x16xf32>
    %c0_5 = arith.constant 0 : index
    %c0_6 = arith.constant 0 : index
    %11 = vector.load %arg6[%c0_5, %c0_6] : memref<256x16xf32, #tpu.memory_space<vmem>>, vector<256x16xf32>
    tpu.vector_store %arg6[%c0_5, %c0_6], %10 {strides = array<i32>} : memref<256x16xf32, #tpu.memory_space<vmem>>, vector<256x16xf32>,
    %c0_i32_7 = arith.constant 0 : i32
    %12 = arith.addi %1, %c0_i32_7 : i32
    %c0_8 = arith.constant 0 : index
    %13 = arith.index_cast %12 : i32 to index
    %c1 = arith.constant 1 : index
    %c0_9 = arith.constant 0 : index
    %14 = vector.load %arg2[%c0_8, %13, %c1, %c0_9] : memref<1x34x34x3xf32, #tpu.memory_space<vmem>>, vector<1x8x32x3xf32>
    %15 = vector.shape_cast %14 : vector<1x8x32x3xf32> to vector<8x32x3xf32>
    %16 = vector.shape_cast %15 : vector<8x32x3xf32> to vector<256x3xf32>
    %17 = arith.truncf %16 : vector<256x3xf32> to vector<256x3xbf16>
    %c1_10 = arith.constant 1 : index
    %c0_11 = arith.constant 0 : index
    %c0_12 = arith.constant 0 : index
    %18 = vector.load %arg3[%c1_10, %c0_11, %c0_12] : memref<9x3x16xbf16, #tpu.memory_space<vmem>>, vector<1x3x16xbf16>
    %19 = vector.shape_cast %18 : vector<1x3x16xbf16> to vector<3x16xbf16>
    %cst_13 = arith.constant dense<0.000000e+00> : vector<256x16xf32>
    %20 = tpu.matmul %17, %19, %cst_13 {dimension_numbers = #tpu.dot_dimension_numbers<[1], [0], [0], [1], [0, 0, 1, 1], [], []>} : vector<256x3xbf16>, vector<3x16xbf16>, vector<256x16xf32> -> vector<256x16xf32>
    %c0_14 = arith.constant 0 : index
    %c0_15 = arith.constant 0 : index
    %21 = vector.load %arg6[%c0_14, %c0_15] : memref<256x16xf32, #tpu.memory_space<vmem>>, vector<256x16xf32>
    %22 = arith.addf %21, %20 : vector<256x16xf32>
    %c0_16 = arith.constant 0 : index
    %c0_17 = arith.constant 0 : index
    %23 = vector.load %arg6[%c0_16, %c0_17] : memref<256x16xf32, #tpu.memory_space<vmem>>, vector<256x16xf32>
    tpu.vector_store %arg6[%c0_16, %c0_17], %22 {strides = array<i32>} : memref<256x16xf32, #tpu.memory_space<vmem>>, vector<256x16xf32>,
    %c0_i32_18 = arith.constant 0 : i32
    %24 = arith.addi %1, %c0_i32_18 : i32
    %c0_19 = arith.constant 0 : index
    %25 = arith.index_cast %24 : i32 to index
    %c2 = arith.constant 2 : index
    %c0_20 = arith.constant 0 : index
    %26 = vector.load %arg2[%c0_19, %25, %c2, %c0_20] : memref<1x34x34x3xf32, #tpu.memory_space<vmem>>, vector<1x8x32x3xf32>
    %27 = vector.shape_cast %26 : vector<1x8x32x3xf32> to vector<8x32x3xf32>
    %28 = vector.shape_cast %27 : vector<8x32x3xf32> to vector<256x3xf32>
    %29 = arith.truncf %28 : vector<256x3xf32> to vector<256x3xbf16>
    %c2_21 = arith.constant 2 : index
    %c0_22 = arith.constant 0 : index
    %c0_23 = arith.constant 0 : index
    %30 = vector.load %arg3[%c2_21, %c0_22, %c0_23] : memref<9x3x16xbf16, #tpu.memory_space<vmem>>, vector<1x3x16xbf16>
    %31 = vector.shape_cast %30 : vector<1x3x16xbf16> to vector<3x16xbf16>
    %cst_24 = arith.constant dense<0.000000e+00> : vector<256x16xf32>
    %32 = tpu.matmul %29, %31, %cst_24 {dimension_numbers = #tpu.dot_dimension_numbers<[1], [0], [0], [1], [0, 0, 1, 1], [], []>} : vector<256x3xbf16>, vector<3x16xbf16>, vector<256x16xf32> -> vector<256x16xf32>
    %c0_25 = arith.constant 0 : index
    %c0_26 = arith.constant 0 : index
    %33 = vector.load %arg6[%c0_25, %c0_26] : memref<256x16xf32, #tpu.memory_space<vmem>>, vector<256x16xf32>
    %34 = arith.addf %33, %32 : vector<256x16xf32>
    %c0_27 = arith.constant 0 : index
    %c0_28 = arith.constant 0 : index
    %35 = vector.load %arg6[%c0_27, %c0_28] : memref<256x16xf32, #tpu.memory_space<vmem>>, vector<256x16xf32>
    tpu.vector_store %arg6[%c0_27, %c0_28], %34 {strides = array<i32>} : memref<256x16xf32, #tpu.memory_space<vmem>>, vector<256x16xf32>,
    %c1_i32 = arith.constant 1 : i32
    %36 = arith.addi %1, %c1_i32 : i32
    %c0_29 = arith.constant 0 : index
    %37 = arith.index_cast %36 : i32 to index
    %c0_30 = arith.constant 0 : index
    %c0_31 = arith.constant 0 : index
    %38 = vector.load %arg2[%c0_29, %37, %c0_30, %c0_31] : memref<1x34x34x3xf32, #tpu.memory_space<vmem>>, vector<1x8x32x3xf32>
    %39 = vector.shape_cast %38 : vector<1x8x32x3xf32> to vector<8x32x3xf32>
    %40 = vector.shape_cast %39 : vector<8x32x3xf32> to vector<256x3xf32>
    %41 = arith.truncf %40 : vector<256x3xf32> to vector<256x3xbf16>
    %c3 = arith.constant 3 : index
    %c0_32 = arith.constant 0 : index
    %c0_33 = arith.constant 0 : index
    %42 = vector.load %arg3[%c3, %c0_32, %c0_33] : memref<9x3x16xbf16, #tpu.memory_space<vmem>>, vector<1x3x16xbf16>
    %43 = vector.shape_cast %42 : vector<1x3x16xbf16> to vector<3x16xbf16>
    %cst_34 = arith.constant dense<0.000000e+00> : vector<256x16xf32>
    %44 = tpu.matmul %41, %43, %cst_34 {dimension_numbers = #tpu.dot_dimension_numbers<[1], [0], [0], [1], [0, 0, 1, 1], [], []>} : vector<256x3xbf16>, vector<3x16xbf16>, vector<256x16xf32> -> vector<256x16xf32>
    %c0_35 = arith.constant 0 : index
    %c0_36 = arith.constant 0 : index
    %45 = vector.load %arg6[%c0_35, %c0_36] : memref<256x16xf32, #tpu.memory_space<vmem>>, vector<256x16xf32>
    %46 = arith.addf %45, %44 : vector<256x16xf32>
    %c0_37 = arith.constant 0 : index
    %c0_38 = arith.constant 0 : index
    %47 = vector.load %arg6[%c0_37, %c0_38] : memref<256x16xf32, #tpu.memory_space<vmem>>, vector<256x16xf32>
    tpu.vector_store %arg6[%c0_37, %c0_38], %46 {strides = array<i32>} : memref<256x16xf32, #tpu.memory_space<vmem>>, vector<256x16xf32>,
    %c1_i32_39 = arith.constant 1 : i32
    %48 = arith.addi %1, %c1_i32_39 : i32
    %c0_40 = arith.constant 0 : index
    %49 = arith.index_cast %48 : i32 to index
    %c1_41 = arith.constant 1 : index
    %c0_42 = arith.constant 0 : index
    %50 = vector.load %arg2[%c0_40, %49, %c1_41, %c0_42] : memref<1x34x34x3xf32, #tpu.memory_space<vmem>>, vector<1x8x32x3xf32>
    %51 = vector.shape_cast %50 : vector<1x8x32x3xf32> to vector<8x32x3xf32>
    %52 = vector.shape_cast %51 : vector<8x32x3xf32> to vector<256x3xf32>
    %53 = arith.truncf %52 : vector<256x3xf32> to vector<256x3xbf16>
    %c4 = arith.constant 4 : index
    %c0_43 = arith.constant 0 : index
    %c0_44 = arith.constant 0 : index
    %54 = vector.load %arg3[%c4, %c0_43, %c0_44] : memref<9x3x16xbf16, #tpu.memory_space<vmem>>, vector<1x3x16xbf16>
    %55 = vector.shape_cast %54 : vector<1x3x16xbf16> to vector<3x16xbf16>
    %cst_45 = arith.constant dense<0.000000e+00> : vector<256x16xf32>
    %56 = tpu.matmul %53, %55, %cst_45 {dimension_numbers = #tpu.dot_dimension_numbers<[1], [0], [0], [1], [0, 0, 1, 1], [], []>} : vector<256x3xbf16>, vector<3x16xbf16>, vector<256x16xf32> -> vector<256x16xf32>
    %c0_46 = arith.constant 0 : index
    %c0_47 = arith.constant 0 : index
    %57 = vector.load %arg6[%c0_46, %c0_47] : memref<256x16xf32, #tpu.memory_space<vmem>>, vector<256x16xf32>
    %58 = arith.addf %57, %56 : vector<256x16xf32>
    %c0_48 = arith.constant 0 : index
    %c0_49 = arith.constant 0 : index
    %59 = vector.load %arg6[%c0_48, %c0_49] : memref<256x16xf32, #tpu.memory_space<vmem>>, vector<256x16xf32>
    tpu.vector_store %arg6[%c0_48, %c0_49], %58 {strides = array<i32>} : memref<256x16xf32, #tpu.memory_space<vmem>>, vector<256x16xf32>,
    %c1_i32_50 = arith.constant 1 : i32
    %60 = arith.addi %1, %c1_i32_50 : i32
    %c0_51 = arith.constant 0 : index
    %61 = arith.index_cast %60 : i32 to index
    %c2_52 = arith.constant 2 : index
    %c0_53 = arith.constant 0 : index
    %62 = vector.load %arg2[%c0_51, %61, %c2_52, %c0_53] : memref<1x34x34x3xf32, #tpu.memory_space<vmem>>, vector<1x8x32x3xf32>
    %63 = vector.shape_cast %62 : vector<1x8x32x3xf32> to vector<8x32x3xf32>
    %64 = vector.shape_cast %63 : vector<8x32x3xf32> to vector<256x3xf32>
    %65 = arith.truncf %64 : vector<256x3xf32> to vector<256x3xbf16>
    %c5 = arith.constant 5 : index
    %c0_54 = arith.constant 0 : index
    %c0_55 = arith.constant 0 : index
    %66 = vector.load %arg3[%c5, %c0_54, %c0_55] : memref<9x3x16xbf16, #tpu.memory_space<vmem>>, vector<1x3x16xbf16>
    %67 = vector.shape_cast %66 : vector<1x3x16xbf16> to vector<3x16xbf16>
    %cst_56 = arith.constant dense<0.000000e+00> : vector<256x16xf32>
    %68 = tpu.matmul %65, %67, %cst_56 {dimension_numbers = #tpu.dot_dimension_numbers<[1], [0], [0], [1], [0, 0, 1, 1], [], []>} : vector<256x3xbf16>, vector<3x16xbf16>, vector<256x16xf32> -> vector<256x16xf32>
    %c0_57 = arith.constant 0 : index
    %c0_58 = arith.constant 0 : index
    %69 = vector.load %arg6[%c0_57, %c0_58] : memref<256x16xf32, #tpu.memory_space<vmem>>, vector<256x16xf32>
    %70 = arith.addf %69, %68 : vector<256x16xf32>
    %c0_59 = arith.constant 0 : index
    %c0_60 = arith.constant 0 : index
    %71 = vector.load %arg6[%c0_59, %c0_60] : memref<256x16xf32, #tpu.memory_space<vmem>>, vector<256x16xf32>
    tpu.vector_store %arg6[%c0_59, %c0_60], %70 {strides = array<i32>} : memref<256x16xf32, #tpu.memory_space<vmem>>, vector<256x16xf32>,
    %c2_i32 = arith.constant 2 : i32
    %72 = arith.addi %1, %c2_i32 : i32
    %c0_61 = arith.constant 0 : index
    %73 = arith.index_cast %72 : i32 to index
    %c0_62 = arith.constant 0 : index
    %c0_63 = arith.constant 0 : index
    %74 = vector.load %arg2[%c0_61, %73, %c0_62, %c0_63] : memref<1x34x34x3xf32, #tpu.memory_space<vmem>>, vector<1x8x32x3xf32>
    %75 = vector.shape_cast %74 : vector<1x8x32x3xf32> to vector<8x32x3xf32>
    %76 = vector.shape_cast %75 : vector<8x32x3xf32> to vector<256x3xf32>
    %77 = arith.truncf %76 : vector<256x3xf32> to vector<256x3xbf16>
    %c6 = arith.constant 6 : index
    %c0_64 = arith.constant 0 : index
    %c0_65 = arith.constant 0 : index
    %78 = vector.load %arg3[%c6, %c0_64, %c0_65] : memref<9x3x16xbf16, #tpu.memory_space<vmem>>, vector<1x3x16xbf16>
    %79 = vector.shape_cast %78 : vector<1x3x16xbf16> to vector<3x16xbf16>
    %cst_66 = arith.constant dense<0.000000e+00> : vector<256x16xf32>
    %80 = tpu.matmul %77, %79, %cst_66 {dimension_numbers = #tpu.dot_dimension_numbers<[1], [0], [0], [1], [0, 0, 1, 1], [], []>} : vector<256x3xbf16>, vector<3x16xbf16>, vector<256x16xf32> -> vector<256x16xf32>
    %c0_67 = arith.constant 0 : index
    %c0_68 = arith.constant 0 : index
    %81 = vector.load %arg6[%c0_67, %c0_68] : memref<256x16xf32, #tpu.memory_space<vmem>>, vector<256x16xf32>
    %82 = arith.addf %81, %80 : vector<256x16xf32>
    %c0_69 = arith.constant 0 : index
    %c0_70 = arith.constant 0 : index
    %83 = vector.load %arg6[%c0_69, %c0_70] : memref<256x16xf32, #tpu.memory_space<vmem>>, vector<256x16xf32>
    tpu.vector_store %arg6[%c0_69, %c0_70], %82 {strides = array<i32>} : memref<256x16xf32, #tpu.memory_space<vmem>>, vector<256x16xf32>,
    %c2_i32_71 = arith.constant 2 : i32
    %84 = arith.addi %1, %c2_i32_71 : i32
    %c0_72 = arith.constant 0 : index
    %85 = arith.index_cast %84 : i32 to index
    %c1_73 = arith.constant 1 : index
    %c0_74 = arith.constant 0 : index
    %86 = vector.load %arg2[%c0_72, %85, %c1_73, %c0_74] : memref<1x34x34x3xf32, #tpu.memory_space<vmem>>, vector<1x8x32x3xf32>
    %87 = vector.shape_cast %86 : vector<1x8x32x3xf32> to vector<8x32x3xf32>
    %88 = vector.shape_cast %87 : vector<8x32x3xf32> to vector<256x3xf32>
    %89 = arith.truncf %88 : vector<256x3xf32> to vector<256x3xbf16>
    %c7 = arith.constant 7 : index
    %c0_75 = arith.constant 0 : index
    %c0_76 = arith.constant 0 : index
    %90 = vector.load %arg3[%c7, %c0_75, %c0_76] : memref<9x3x16xbf16, #tpu.memory_space<vmem>>, vector<1x3x16xbf16>
    %91 = vector.shape_cast %90 : vector<1x3x16xbf16> to vector<3x16xbf16>
    %cst_77 = arith.constant dense<0.000000e+00> : vector<256x16xf32>
    %92 = tpu.matmul %89, %91, %cst_77 {dimension_numbers = #tpu.dot_dimension_numbers<[1], [0], [0], [1], [0, 0, 1, 1], [], []>} : vector<256x3xbf16>, vector<3x16xbf16>, vector<256x16xf32> -> vector<256x16xf32>
    %c0_78 = arith.constant 0 : index
    %c0_79 = arith.constant 0 : index
    %93 = vector.load %arg6[%c0_78, %c0_79] : memref<256x16xf32, #tpu.memory_space<vmem>>, vector<256x16xf32>
    %94 = arith.addf %93, %92 : vector<256x16xf32>
    %c0_80 = arith.constant 0 : index
    %c0_81 = arith.constant 0 : index
    %95 = vector.load %arg6[%c0_80, %c0_81] : memref<256x16xf32, #tpu.memory_space<vmem>>, vector<256x16xf32>
    tpu.vector_store %arg6[%c0_80, %c0_81], %94 {strides = array<i32>} : memref<256x16xf32, #tpu.memory_space<vmem>>, vector<256x16xf32>,
    %c2_i32_82 = arith.constant 2 : i32
    %96 = arith.addi %1, %c2_i32_82 : i32
    %c0_83 = arith.constant 0 : index
    %97 = arith.index_cast %96 : i32 to index
    %c2_84 = arith.constant 2 : index
    %c0_85 = arith.constant 0 : index
    %98 = vector.load %arg2[%c0_83, %97, %c2_84, %c0_85] : memref<1x34x34x3xf32, #tpu.memory_space<vmem>>, vector<1x8x32x3xf32>
    %99 = vector.shape_cast %98 : vector<1x8x32x3xf32> to vector<8x32x3xf32>
    %100 = vector.shape_cast %99 : vector<8x32x3xf32> to vector<256x3xf32>
    %101 = arith.truncf %100 : vector<256x3xf32> to vector<256x3xbf16>
    %c8 = arith.constant 8 : index
    %c0_86 = arith.constant 0 : index
    %c0_87 = arith.constant 0 : index
    %102 = vector.load %arg3[%c8, %c0_86, %c0_87] : memref<9x3x16xbf16, #tpu.memory_space<vmem>>, vector<1x3x16xbf16>
    %103 = vector.shape_cast %102 : vector<1x3x16xbf16> to vector<3x16xbf16>
    %cst_88 = arith.constant dense<0.000000e+00> : vector<256x16xf32>
    %104 = tpu.matmul %101, %103, %cst_88 {dimension_numbers = #tpu.dot_dimension_numbers<[1], [0], [0], [1], [0, 0, 1, 1], [], []>} : vector<256x3xbf16>, vector<3x16xbf16>, vector<256x16xf32> -> vector<256x16xf32>
    %c0_89 = arith.constant 0 : index
    %c0_90 = arith.constant 0 : index
    %105 = vector.load %arg6[%c0_89, %c0_90] : memref<256x16xf32, #tpu.memory_space<vmem>>, vector<256x16xf32>
    %106 = arith.addf %105, %104 : vector<256x16xf32>
    %c0_91 = arith.constant 0 : index
    %c0_92 = arith.constant 0 : index
    %107 = vector.load %arg6[%c0_91, %c0_92] : memref<256x16xf32, #tpu.memory_space<vmem>>, vector<256x16xf32>
    tpu.vector_store %arg6[%c0_91, %c0_92], %106 {strides = array<i32>} : memref<256x16xf32, #tpu.memory_space<vmem>>, vector<256x16xf32>,
    %c0_93 = arith.constant 0 : index
    %c0_94 = arith.constant 0 : index
    %108 = vector.load %arg6[%c0_93, %c0_94] : memref<256x16xf32, #tpu.memory_space<vmem>>, vector<256x16xf32>
    %c0_95 = arith.constant 0 : index
    %c0_96 = arith.constant 0 : index
    %109 = vector.load %arg4[%c0_95, %c0_96] : memref<1x16xf32, #tpu.memory_space<vmem>>, vector<1x16xf32>
    %110 = vector.broadcast %109 : vector<1x16xf32> to vector<256x16xf32>
    %111 = arith.addf %108, %110 : vector<256x16xf32>
    %cst_97 = arith.constant 0.000000e+00 : f32
    %112 = vector.broadcast %cst_97 : f32 to vector<256x16xf32>
    %113 = arith.maximumf %111, %112 : vector<256x16xf32>
    %114 = vector.shape_cast %113 : vector<256x16xf32> to vector<8x32x16xf32>
    %c0_98 = arith.constant 0 : index
    %c0_99 = arith.constant 0 : index
    %c0_100 = arith.constant 0 : index
    %c0_101 = arith.constant 0 : index
    %115 = vector.load %arg5[%c0_98, %c0_99, %c0_100, %c0_101] : memref<1x8x32x16xf32, #tpu.memory_space<vmem>>, vector<1x8x32x16xf32>
    %116 = vector.shape_cast %115 : vector<1x8x32x16xf32> to vector<8x32x16xf32>
    %117 = vector.shape_cast %114 : vector<8x32x16xf32> to vector<1x8x32x16xf32>
    tpu.vector_store %arg5[%c0_98, %c0_99, %c0_100, %c0_101], %117 {strides = array<i32>} : memref<1x8x32x16xf32, #tpu.memory_space<vmem>>, vector<1x8x32x16xf32>,
    return
  }
  func.func @transform_0(%arg0: i32, %arg1: i32) -> (i32, i32, i32, i32) {
    %c0_i32 = arith.constant 0 : i32
    %c0_i32_0 = arith.constant 0 : i32
    %c0_i32_1 = arith.constant 0 : i32
    %c0_i32_2 = arith.constant 0 : i32
    return %arg0, %c0_i32, %c0_i32_0, %c0_i32_1 : i32, i32, i32, i32
  }
  func.func @transform_1(%arg0: i32, %arg1: i32) -> (i32, i32, i32) {
    %c0_i32 = arith.constant 0 : i32
    %c0_i32_0 = arith.constant 0 : i32
    %c0_i32_1 = arith.constant 0 : i32
    %c0_i32_2 = arith.constant 0 : i32
    return %c0_i32, %c0_i32_0, %c0_i32_1 : i32, i32, i32
  }
  func.func @transform_2(%arg0: i32, %arg1: i32) -> (i32, i32) {
    %c0_i32 = arith.constant 0 : i32
    %c0_i32_0 = arith.constant 0 : i32
    %c0_i32_1 = arith.constant 0 : i32
    return %c0_i32, %c0_i32_0 : i32, i32
  }
  func.func @transform_3(%arg0: i32, %arg1: i32) -> (i32, i32, i32, i32) {
    %c0_i32 = arith.constant 0 : i32
    %c0_i32_0 = arith.constant 0 : i32
    %c0_i32_1 = arith.constant 0 : i32
    return %arg0, %arg1, %c0_i32, %c0_i32_0 : i32, i32, i32, i32
  }
}

</mosaic_0001>

<llo_original>
// kernel: tpu_custom_call.1
$region0: #{tpu_custom_call.1}
  #allocation0 [shape = 'u32[]', space=smem, size = 0x4, offset = 0x4, fixed_abs, tag = 'smem constant byte address 0x4 - core index']
  #allocation1 [shape = 'u32[72,128]{1,0:T(1,128)}', space=vmem, size = 0x9000, scoped, tag = 'internal scratch']
  #allocation2 [shape = 'f32[256,16]{1,0:T(8,128)}', space=vmem, size = 0x20000, scoped, tag = 'scratch operand']
  %s0 = inlined_call_operand.vmem [shape: f32[2,34,34,3], index: 0, kind: input, shape index: {}]
  %s1 = inlined_call_operand.vmem [shape: bf16[9,3,16], index: 1, kind: input, shape index: {}]
  %s2 = inlined_call_operand.vmem [shape: f32[1,16], index: 2, kind: input, shape index: {}]
  %s3 = inlined_call_operand.vmem [shape: f32[2,32,32,16], index: 3, kind: output, shape index: {}]
  %s4 = sld [smem:[#allocation0]]
  $region45: #{tpu_custom_call.1} parent=0
    _
  %s6 = ssub.s32 1, %s4
  %s7 = scalar_select 0, %s6, %s4
  loop: start=0, step=1, limit=10
  $region2: #{tpu_custom_call.1} parent=0 // loop_pre_header
    _
  $region3: #{tpu_custom_call.1} parent=0 // loop_header
    %s9 = sphi 0, %s13
    %p10 = scmp.ge.s32.totalorder %s9, 10
    %s16 = sphi 0, %s28
    %s17 = sphi 0, %s24
    %s18 = sphi 0, %s16
    %s19 = sphi 0, %s17
    %s20 = sphi 0, %s18
    %s21 = sphi 0, %s19
    %s31 = sphi 0, %s33
    %s34 = sphi 0, %s31
    %s35 = sphi 0, %s34
    %s51 = sphi 0, %s35
    %s55 = sphi 0, %s55
    %s57 = sphi 0, %s55
    %s58 = sphi 0, %s57
    %s72 = sphi 0, %s58
    %s76 = sphi 0, %s76
    %s78 = sphi 0, %s76
    %s79 = sphi 0, %s78
    %s93 = sphi 0, %s79
    %s101 = sphi 0, %s103
    %s104 = sphi 0, %s101
    %s105 = sphi 0, %s104
    %s121 = sphi 0, %s105
  $region4: #{tpu_custom_call.1} parent=0 // loop_header_branch
    %12 = sbr.rel (%p10) target = $region8
  $region5: #{tpu_custom_call.1} parent=0 // loop_body
    %s14 = ssub.s32 %s9, 1
    %s15 = ssub.s32 %s9, 2
    %s22 = sadd.s32 1, %s17
    %p23 = scmp.ge.s32.totalorder %s22, 4
    %s24 = scalar_select %p23, 0, %s22
    %s25 = sadd.s32 1, %s16
    %s26 = scalar_select %p23, %s25, %s16
    %p27 = scmp.ge.s32.totalorder %s26, 2
    %s28 = scalar_select %p27, 0, %s26
    %s29 = ssub.s32 %s16, %s28
    %p30 = scmp.eq.s32.totalorder %s29, 0
    %s32 = sadd.s32 %s31, 1
    %s33 = scalar_select %p30, %s31, %s32
    %p36 = pneg %p30
    %p37 = scmp.eq.s32.totalorder %s9, 7
    %p38 = por %p36, %p37
    %p39 = scmp.ne.s32.totalorder %s31, %s34
    %p40 = scmp.eq.s32.totalorder %s9, 0
    %p41 = por %p39, %p40
    %p42 = scmp.ne.s32.totalorder %s31, %s34
    %p43 = scmp.eq.s32.totalorder %s14, 7
    %p44 = por %p42, %p43
    %p45 = scmp.ne.s32.totalorder %s34, %s35
    %p46 = scmp.eq.s32.totalorder %s14, 0
    %p47 = por %p45, %p46
    %p48 = scmp.ne.s32.totalorder %s34, %s35
    %p49 = scmp.eq.s32.totalorder %s15, 7
    %p50 = por %p48, %p49
    %p52 = scmp.ne.s32.totalorder %s35, %s51
    %p53 = scmp.eq.s32.totalorder %s15, 0
    %p54 = por %p52, %p53
    %s56 = sadd.s32 %s55, 1
    %p59 = scmp.eq.s32.totalorder %s9, 7
    %p60 = scmp.ne.s32.totalorder %s55, %s57
    %p61 = scmp.eq.s32.totalorder %s9, 0
    %p62 = por %p60, %p61
    %p63 = scmp.ne.s32.totalorder %s55, %s57
    %p64 = scmp.eq.s32.totalorder %s14, 7
    %p65 = por %p63, %p64
    %p66 = scmp.ne.s32.totalorder %s57, %s58
    %p67 = scmp.eq.s32.totalorder %s14, 0
    %p68 = por %p66, %p67
    %p69 = scmp.ne.s32.totalorder %s57, %s58
    %p70 = scmp.eq.s32.totalorder %s15, 7
    %p71 = por %p69, %p70
    %p73 = scmp.ne.s32.totalorder %s58, %s72
    %p74 = scmp.eq.s32.totalorder %s15, 0
    %p75 = por %p73, %p74
    %s77 = sadd.s32 %s76, 1
    %p80 = scmp.eq.s32.totalorder %s9, 7
    %p81 = scmp.ne.s32.totalorder %s76, %s78
    %p82 = scmp.eq.s32.totalorder %s9, 0
    %p83 = por %p81, %p82
    %p84 = scmp.ne.s32.totalorder %s76, %s78
    %p85 = scmp.eq.s32.totalorder %s14, 7
    %p86 = por %p84, %p85
    %p87 = scmp.ne.s32.totalorder %s78, %s79
    %p88 = scmp.eq.s32.totalorder %s14, 0
    %p89 = por %p87, %p88
    %p90 = scmp.ne.s32.totalorder %s78, %s79
    %p91 = scmp.eq.s32.totalorder %s15, 7
    %p92 = por %p90, %p91
    %p94 = scmp.ne.s32.totalorder %s79, %s93
    %p95 = scmp.eq.s32.totalorder %s15, 0
    %p96 = por %p94, %p95
    %s97 = ssub.s32 %s16, %s28
    %s98 = ssub.s32 %s17, %s24
    %s99 = sor.u32 %s97, %s98
    %p100 = scmp.eq.s32.totalorder %s99, 0
    %s102 = sadd.s32 %s101, 1
    %s103 = scalar_select %p100, %s101, %s102
    %p106 = pneg %p100
    %p107 = scmp.eq.s32.totalorder %s9, 7
    %p108 = por %p106, %p107
    %p109 = scmp.ne.s32.totalorder %s101, %s104
    %p110 = scmp.eq.s32.totalorder %s9, 0
    %p111 = por %p109, %p110
    %p112 = scmp.ne.s32.totalorder %s101, %s104
    %p113 = scmp.eq.s32.totalorder %s14, 7
    %p114 = por %p112, %p113
    %p115 = scmp.ne.s32.totalorder %s104, %s105
    %p116 = scmp.eq.s32.totalorder %s14, 0
    %p117 = por %p115, %p116
    %p118 = scmp.ne.s32.totalorder %s104, %s105
    %p119 = scmp.eq.s32.totalorder %s15, 7
    %p120 = por %p118, %p119
    %p122 = scmp.ne.s32.totalorder %s105, %s121
    %p123 = scmp.eq.s32.totalorder %s15, 0
    %p124 = por %p122, %p123
    %p125 = scmp.le.s32.totalorder 1, %s9
    %p126 = scmp.lt.s32.totalorder %s9, 9
    %p127 = pnand %p125, %p126
    %p128 = pneg %p127
    // Predicated region
    $region9: #{tpu_custom_call.1} parent=5 // pred_check
      _
    $region10: #{tpu_custom_call.1} parent=5 // pred_check_branch
      %130 = sbr.rel (%p127) target = $region12
    $region11: #{tpu_custom_call.1} parent=5 // pred_region
      %s131 = ssub.s32 %s9, 1
      // Predicated region
      $region13: #{tpu_custom_call.1} parent=11 // pred_check
        %p132 = pneg %p68
      $region14: #{tpu_custom_call.1} parent=11 // pred_check_branch
        %134 = sbr.rel (%p132) target = $region16
      $region15: #{tpu_custom_call.1} parent=11 // pred_region
        _
      $region16: #{tpu_custom_call.1} parent=11 // pred_fallthru
        _
      // Predicated region
      $region17: #{tpu_custom_call.1} parent=11 // pred_check
        %p135 = pneg %p89
      $region18: #{tpu_custom_call.1} parent=11 // pred_check_branch
        %137 = sbr.rel (%p135) target = $region20
      $region19: #{tpu_custom_call.1} parent=11 // pred_region
        _
      $region20: #{tpu_custom_call.1} parent=11 // pred_fallthru
        _
    $region12: #{tpu_custom_call.1} parent=5 // pred_fallthru
      _
    %p138 = scmp.lt.s32.totalorder %s9, 8
    // Predicated region
    $region21: #{tpu_custom_call.1} parent=5 // pred_check
      %p139 = pneg %p138
    $region22: #{tpu_custom_call.1} parent=5 // pred_check_branch
      %141 = sbr.rel (%p139) target = $region24
    $region23: #{tpu_custom_call.1} parent=5 // pred_region
      // Predicated region
      $region25: #{tpu_custom_call.1} parent=23 // pred_check
        %p142 = pneg %p41
      $region26: #{tpu_custom_call.1} parent=23 // pred_check_branch
        %144 = sbr.rel (%p142) target = $region28
      $region27: #{tpu_custom_call.1} parent=23 // pred_region
        %p145 = scmp.lt.s32.totalorder %s16, 1
        %s146 = scalar_select %p145, %s16, 1
        %s147 = smul.addr %s146, 170
        %s148 = smul.addr %s147, 8
        %s149 = scalar_lea.vmem %s0, %s148
      $region28: #{tpu_custom_call.1} parent=23 // pred_fallthru
        _
    $region24: #{tpu_custom_call.1} parent=5 // pred_fallthru
      _
    %p150 = scmp.le.s32.totalorder 1, %s9
    %p151 = scmp.lt.s32.totalorder %s9, 9
    %p152 = pnand %p150, %p151
    %p153 = pneg %p152
    // Predicated region
    $region29: #{tpu_custom_call.1} parent=5 // pred_check
      _
    $region30: #{tpu_custom_call.1} parent=5 // pred_check_branch
      %155 = sbr.rel (%p152) target = $region32
    $region31: #{tpu_custom_call.1} parent=5 // pred_region
      %s156 = ssub.s32 %s9, 1
      %p157 = scmp.lt.s32.totalorder %s18, 1
      %s158 = scalar_select %p157, %s18, 1
      %s159 = smul.addr %s158, 170
      %s160 = smul.addr %s159, 8
      %s161 = scalar_lea.vmem %s0, %s160
      %p162 = pneg %p47
      %p163 = pneg %p44
      %p164 = pneg %p68
      %p165 = pneg %p65
      %p166 = pneg %p89
      %p167 = pneg %p86
      %p168 = pneg %p117
      %p169 = pneg %p114
      %s170 = smul.u32 8, %s19
      %p171 = scmp.lt.s32.totalorder %s18, 1
      %s172 = scalar_select %p171, %s18, 1
      %p173 = scmp.lt.s32.totalorder %s170, 31
      %s174 = scalar_select %p173, %s170, 31
      %s175 = smul.addr %s174, 4
      %s176 = smul.addr %s172, 128
      %s177 = sadd.s32 %s175, %s176
      %s178 = smul.addr %s177, 8
      %s179 = scalar_lea.vmem %s3, %s178
      %p180 = scmp.lt.s32.totalorder %s18, 1
      %s181 = scalar_select %p180, %s18, 1
      %s182 = smul.addr %s181, 170
      %s183 = smul.addr %s182, 8
      %s184 = scalar_lea.vmem %s0, %s183
      %s185 = smul.u32 8, %s19
      %p186 = scmp.lt.s32.totalorder %s18, 1
      %s187 = scalar_select %p186, %s18, 1
      %p188 = scmp.lt.s32.totalorder %s185, 31
      %s189 = scalar_select %p188, %s185, 31
      %s190 = smul.addr %s189, 4
      %s191 = smul.addr %s187, 128
      %s192 = sadd.s32 %s190, %s191
      %s193 = smul.addr %s192, 8
      %s194 = scalar_lea.vmem %s3, %s193
      %s195 = smul.u32 8, %s19
      %s197 = smul.u32 %s19, 8
      %s198 = smul.u32 %s197, 40
      %s199 = scalar_lea.vmem %s184, %s198
      %v200 = vld [vmem:[%s199] sm:$0xff]
      %v201 = vld [vmem:[%s199 + $0x8] sm:$0xff]
      %v202 = vld [vmem:[%s199 + $0x10] sm:$0xff]
      %v203 = vld [vmem:[%s199 + $0x18] sm:$0xff]
      %v204 = vld [vmem:[%s199 + $0x28] sm:$0xff]
      %v205 = vld [vmem:[%s199 + $0x30] sm:$0xff]
      %v206 = vld [vmem:[%s199 + $0x38] sm:$0xff]
      %v207 = vld [vmem:[%s199 + $0x40] sm:$0xff]
      %v208 = vld [vmem:[%s199 + $0x50] sm:$0xff]
      %v209 = vld [vmem:[%s199 + $0x58] sm:$0xff]
      %v210 = vld [vmem:[%s199 + $0x60] sm:$0xff]
      %v211 = vld [vmem:[%s199 + $0x68] sm:$0xff]
      %v212 = vld [vmem:[%s199 + $0x78] sm:$0xff]
      %v213 = vld [vmem:[%s199 + $0x80] sm:$0xff]
      %v214 = vld [vmem:[%s199 + $0x88] sm:$0xff]
      %v215 = vld [vmem:[%s199 + $0x90] sm:$0xff]
      %v216 = vld [vmem:[%s199 + $0xa0] sm:$0xff]
      %v217 = vld [vmem:[%s199 + $0xa8] sm:$0xff]
      %v218 = vld [vmem:[%s199 + $0xb0] sm:$0xff]
      %v219 = vld [vmem:[%s199 + $0xb8] sm:$0xff]
      %v220 = vld [vmem:[%s199 + $0xc8] sm:$0xff]
      %v221 = vld [vmem:[%s199 + $0xd0] sm:$0xff]
      %v222 = vld [vmem:[%s199 + $0xd8] sm:$0xff]
      %v223 = vld [vmem:[%s199 + $0xe0] sm:$0xff]
      %v224 = vld [vmem:[%s199 + $0xf0] sm:$0xff]
      %v225 = vld [vmem:[%s199 + $0xf8] sm:$0xff]
      %v226 = vld [vmem:[%s199 + $0x100] sm:$0xff]
      %v227 = vld [vmem:[%s199 + $0x108] sm:$0xff]
      %v228 = vld [vmem:[%s199 + $0x118] sm:$0xff]
      %v229 = vld [vmem:[%s199 + $0x120] sm:$0xff]
      %v230 = vld [vmem:[%s199 + $0x128] sm:$0xff]
      %v231 = vld [vmem:[%s199 + $0x130] sm:$0xff]
      %v232 = vpack.c.bf16 %v201, %v200
      %v233 = vpack.c.bf16 %v203, %v202
      %v234 = vpack.c.bf16 %v205, %v204
      %v235 = vpack.c.bf16 %v207, %v206
      %v236 = vpack.c.bf16 %v209, %v208
      %v237 = vpack.c.bf16 %v211, %v210
      %v238 = vpack.c.bf16 %v213, %v212
      %v239 = vpack.c.bf16 %v215, %v214
      %v240 = vpack.c.bf16 %v217, %v216
      %v241 = vpack.c.bf16 %v219, %v218
      %v242 = vpack.c.bf16 %v221, %v220
      %v243 = vpack.c.bf16 %v223, %v222
      %v244 = vpack.c.bf16 %v225, %v224
      %v245 = vpack.c.bf16 %v227, %v226
      %v246 = vpack.c.bf16 %v229, %v228
      %v247 = vpack.c.bf16 %v231, %v230
      %v248 = vld [vmem:[%s1] sm:$0x3]
      %vm249 = vcmask 23552
      %v251 = vsel %vm249, %v232, 0
      %v254 = vsel %vm249, %v233, 0
      %v257 = vsel %vm249, %v234, 0
      %v260 = vsel %vm249, %v235, 0
      %v263 = vsel %vm249, %v236, 0
      %v266 = vsel %vm249, %v237, 0
      %v269 = vsel %vm249, %v238, 0
      %v272 = vsel %vm249, %v239, 0
      %v275 = vsel %vm249, %v240, 0
      %v278 = vsel %vm249, %v241, 0
      %v281 = vsel %vm249, %v242, 0
      %v284 = vsel %vm249, %v243, 0
      %v287 = vsel %vm249, %v244, 0
      %v290 = vsel %vm249, %v245, 0
      %v293 = vsel %vm249, %v246, 0
      %v296 = vsel %vm249, %v247, 0
      %vm298 = vcmask 1040384
      %vm299 = vcmask 1041408
      %v300 = vsel %vm298, 4294967295, 65535
      %v301 = vsel %vm299, %v300, 0
      %v303 = vand.u32 %v248, %v301
      %305 = vmatpush.bf16.msra.mxu0 0
      %306 = vmatpush.bf16.msra.mxu0 0
      %307 = vmatpush.bf16.msra.mxu0 0
      %308 = vmatpush.bf16.msra.mxu0 0
      %309 = vmatpush.bf16.msra.mxu0 0
      %310 = vmatpush.bf16.msra.mxu0 0
      %311 = vmatpush.bf16.msra.mxu0 0
      %312 = vmatpush.bf16.msra.mxu0 %v303
      %313 = vmatmul.bf16.gmra.mxu0 %v251
      %v314 = vpop.f32.mrf.mxu0
      %v315 = vadd.f32 0.0, %v314
      %v316 = vpop.f32.mrf.mxu0
      %v317 = vadd.f32 0.0, %v316
      %318 = vmatmul.bf16.gmra.mxu0 %v254
      %v319 = vpop.f32.mrf.mxu0
      %v320 = vadd.f32 0.0, %v319
      %v321 = vpop.f32.mrf.mxu0
      %v322 = vadd.f32 0.0, %v321
      %323 = vmatmul.bf16.gmra.mxu0 %v257
      %v324 = vpop.f32.mrf.mxu0
      %v325 = vadd.f32 0.0, %v324
      %v326 = vpop.f32.mrf.mxu0
      %v327 = vadd.f32 0.0, %v326
      %328 = vmatmul.bf16.gmra.mxu0 %v260
      %v329 = vpop.f32.mrf.mxu0
      %v330 = vadd.f32 0.0, %v329
      %v331 = vpop.f32.mrf.mxu0
      %v332 = vadd.f32 0.0, %v331
      %333 = vmatmul.bf16.gmra.mxu0 %v263
      %v334 = vpop.f32.mrf.mxu0
      %v335 = vadd.f32 0.0, %v334
      %v336 = vpop.f32.mrf.mxu0
      %v337 = vadd.f32 0.0, %v336
      %338 = vmatmul.bf16.gmra.mxu0 %v266
      %v339 = vpop.f32.mrf.mxu0
      %v340 = vadd.f32 0.0, %v339
      %v341 = vpop.f32.mrf.mxu0
      %v342 = vadd.f32 0.0, %v341
      %343 = vmatmul.bf16.gmra.mxu0 %v269
      %v344 = vpop.f32.mrf.mxu0
      %v345 = vadd.f32 0.0, %v344
      %v346 = vpop.f32.mrf.mxu0
      %v347 = vadd.f32 0.0, %v346
      %348 = vmatmul.bf16.gmra.mxu0 %v272
      %v349 = vpop.f32.mrf.mxu0
      %v350 = vadd.f32 0.0, %v349
      %v351 = vpop.f32.mrf.mxu0
      %v352 = vadd.f32 0.0, %v351
      %353 = vmatmul.bf16.gmra.mxu0 %v275
      %v354 = vpop.f32.mrf.mxu0
      %v355 = vadd.f32 0.0, %v354
      %v356 = vpop.f32.mrf.mxu0
      %v357 = vadd.f32 0.0, %v356
      %358 = vmatmul.bf16.gmra.mxu0 %v278
      %v359 = vpop.f32.mrf.mxu0
      %v360 = vadd.f32 0.0, %v359
      %v361 = vpop.f32.mrf.mxu0
      %v362 = vadd.f32 0.0, %v361
      %363 = vmatmul.bf16.gmra.mxu0 %v281
      %v364 = vpop.f32.mrf.mxu0
      %v365 = vadd.f32 0.0, %v364
      %v366 = vpop.f32.mrf.mxu0
      %v367 = vadd.f32 0.0, %v366
      %368 = vmatmul.bf16.gmra.mxu0 %v284
      %v369 = vpop.f32.mrf.mxu0
      %v370 = vadd.f32 0.0, %v369
      %v371 = vpop.f32.mrf.mxu0
      %v372 = vadd.f32 0.0, %v371
      %373 = vmatmul.bf16.gmra.mxu0 %v287
      %v374 = vpop.f32.mrf.mxu0
      %v375 = vadd.f32 0.0, %v374
      %v376 = vpop.f32.mrf.mxu0
      %v377 = vadd.f32 0.0, %v376
      %378 = vmatmul.bf16.gmra.mxu0 %v290
      %v379 = vpop.f32.mrf.mxu0
      %v380 = vadd.f32 0.0, %v379
      %v381 = vpop.f32.mrf.mxu0
      %v382 = vadd.f32 0.0, %v381
      %383 = vmatmul.bf16.gmra.mxu0 %v293
      %v384 = vpop.f32.mrf.mxu0
      %v385 = vadd.f32 0.0, %v384
      %v386 = vpop.f32.mrf.mxu0
      %v387 = vadd.f32 0.0, %v386
      %388 = vmatmul.bf16.gmra.mxu0 %v296
      %v389 = vpop.f32.mrf.mxu0
      %v390 = vadd.f32 0.0, %v389
      %v391 = vpop.f32.mrf.mxu0
      %v392 = vadd.f32 0.0, %v391
      %393 = vdwg.mxu0
      %vm394 = vcmask 130048
      %395 = vst.msk [vmem:[#allocation2] sm:$0xff] %vm394, %v315
      %396 = vst.msk [vmem:[#allocation2 + $0x8] sm:$0xff] %vm394, %v317
      %397 = vst.msk [vmem:[#allocation2 + $0x10] sm:$0xff] %vm394, %v320
      %398 = vst.msk [vmem:[#allocation2 + $0x18] sm:$0xff] %vm394, %v322
      %399 = vst.msk [vmem:[#allocation2 + $0x20] sm:$0xff] %vm394, %v325
      %400 = vst.msk [vmem:[#allocation2 + $0x28] sm:$0xff] %vm394, %v327
      %401 = vst.msk [vmem:[#allocation2 + $0x30] sm:$0xff] %vm394, %v330
      %402 = vst.msk [vmem:[#allocation2 + $0x38] sm:$0xff] %vm394, %v332
      %403 = vst.msk [vmem:[#allocation2 + $0x40] sm:$0xff] %vm394, %v335
      %404 = vst.msk [vmem:[#allocation2 + $0x48] sm:$0xff] %vm394, %v337
      %405 = vst.msk [vmem:[#allocation2 + $0x50] sm:$0xff] %vm394, %v340
      %406 = vst.msk [vmem:[#allocation2 + $0x58] sm:$0xff] %vm394, %v342
      %407 = vst.msk [vmem:[#allocation2 + $0x60] sm:$0xff] %vm394, %v345
      %408 = vst.msk [vmem:[#allocation2 + $0x68] sm:$0xff] %vm394, %v347
      %409 = vst.msk [vmem:[#allocation2 + $0x70] sm:$0xff] %vm394, %v350
      %410 = vst.msk [vmem:[#allocation2 + $0x78] sm:$0xff] %vm394, %v352
      %411 = vst.msk [vmem:[#allocation2 + $0x80] sm:$0xff] %vm394, %v355
      %412 = vst.msk [vmem:[#allocation2 + $0x88] sm:$0xff] %vm394, %v357
      %413 = vst.msk [vmem:[#allocation2 + $0x90] sm:$0xff] %vm394, %v360
      %414 = vst.msk [vmem:[#allocation2 + $0x98] sm:$0xff] %vm394, %v362
      %415 = vst.msk [vmem:[#allocation2 + $0xa0] sm:$0xff] %vm394, %v365
      %416 = vst.msk [vmem:[#allocation2 + $0xa8] sm:$0xff] %vm394, %v367
      %417 = vst.msk [vmem:[#allocation2 + $0xb0] sm:$0xff] %vm394, %v370
      %418 = vst.msk [vmem:[#allocation2 + $0xb8] sm:$0xff] %vm394, %v372
      %419 = vst.msk [vmem:[#allocation2 + $0xc0] sm:$0xff] %vm394, %v375
      %420 = vst.msk [vmem:[#allocation2 + $0xc8] sm:$0xff] %vm394, %v377
      %421 = vst.msk [vmem:[#allocation2 + $0xd0] sm:$0xff] %vm394, %v380
      %422 = vst.msk [vmem:[#allocation2 + $0xd8] sm:$0xff] %vm394, %v382
      %423 = vst.msk [vmem:[#allocation2 + $0xe0] sm:$0xff] %vm394, %v385
      %424 = vst.msk [vmem:[#allocation2 + $0xe8] sm:$0xff] %vm394, %v387
      %425 = vst.msk [vmem:[#allocation2 + $0xf0] sm:$0xff] %vm394, %v390
      %426 = vst.msk [vmem:[#allocation2 + $0xf8] sm:$0xff] %vm394, %v392
      %v427 = vld [vmem:[%s199 + $0x1] sm:$0xff]
      %v428 = vld [vmem:[%s199 + $0x9] sm:$0xff]
      %v429 = vld [vmem:[%s199 + $0x11] sm:$0xff]
      %v430 = vld [vmem:[%s199 + $0x19] sm:$0xff]
      %v431 = vld [vmem:[%s199 + $0x29] sm:$0xff]
      %v432 = vld [vmem:[%s199 + $0x31] sm:$0xff]
      %v433 = vld [vmem:[%s199 + $0x39] sm:$0xff]
      %v434 = vld [vmem:[%s199 + $0x41] sm:$0xff]
      %v435 = vld [vmem:[%s199 + $0x51] sm:$0xff]
      %v436 = vld [vmem:[%s199 + $0x59] sm:$0xff]
      %v437 = vld [vmem:[%s199 + $0x61] sm:$0xff]
      %v438 = vld [vmem:[%s199 + $0x69] sm:$0xff]
      %v439 = vld [vmem:[%s199 + $0x79] sm:$0xff]
      %v440 = vld [vmem:[%s199 + $0x81] sm:$0xff]
      %v441 = vld [vmem:[%s199 + $0x89] sm:$0xff]
      %v442 = vld [vmem:[%s199 + $0x91] sm:$0xff]
      %v443 = vld [vmem:[%s199 + $0xa1] sm:$0xff]
      %v444 = vld [vmem:[%s199 + $0xa9] sm:$0xff]
      %v445 = vld [vmem:[%s199 + $0xb1] sm:$0xff]
      %v446 = vld [vmem:[%s199 + $0xb9] sm:$0xff]
      %v447 = vld [vmem:[%s199 + $0xc9] sm:$0xff]
      %v448 = vld [vmem:[%s199 + $0xd1] sm:$0xff]
      %v449 = vld [vmem:[%s199 + $0xd9] sm:$0xff]
      %v450 = vld [vmem:[%s199 + $0xe1] sm:$0xff]
      %v451 = vld [vmem:[%s199 + $0xf1] sm:$0xff]
      %v452 = vld [vmem:[%s199 + $0xf9] sm:$0xff]
      %v453 = vld [vmem:[%s199 + $0x101] sm:$0xff]
      %v454 = vld [vmem:[%s199 + $0x109] sm:$0xff]
      %v455 = vld [vmem:[%s199 + $0x119] sm:$0xff]
      %v456 = vld [vmem:[%s199 + $0x121] sm:$0xff]
      %v457 = vld [vmem:[%s199 + $0x129] sm:$0xff]
      %v458 = vld [vmem:[%s199 + $0x131] sm:$0xff]
      %v459 = vpack.c.bf16 %v428, %v427
      %v460 = vpack.c.bf16 %v430, %v429
      %v461 = vpack.c.bf16 %v432, %v431
      %v462 = vpack.c.bf16 %v434, %v433
      %v463 = vpack.c.bf16 %v436, %v435
      %v464 = vpack.c.bf16 %v438, %v437
      %v465 = vpack.c.bf16 %v440, %v439
      %v466 = vpack.c.bf16 %v442, %v441
      %v467 = vpack.c.bf16 %v444, %v443
      %v468 = vpack.c.bf16 %v446, %v445
      %v469 = vpack.c.bf16 %v448, %v447
      %v470 = vpack.c.bf16 %v450, %v449
      %v471 = vpack.c.bf16 %v452, %v451
      %v472 = vpack.c.bf16 %v454, %v453
      %v473 = vpack.c.bf16 %v456, %v455
      %v474 = vpack.c.bf16 %v458, %v457
      %s475 = scalar_lea.vmem %s1, 2
      %v476 = vld [vmem:[%s475] sm:$0x3]
      %v478 = vsel %vm249, %v459, 0
      %v481 = vsel %vm249, %v460, 0
      %v484 = vsel %vm249, %v461, 0
      %v487 = vsel %vm249, %v462, 0
      %v490 = vsel %vm249, %v463, 0
      %v493 = vsel %vm249, %v464, 0
      %v496 = vsel %vm249, %v465, 0
      %v499 = vsel %vm249, %v466, 0
      %v502 = vsel %vm249, %v467, 0
      %v505 = vsel %vm249, %v468, 0
      %v508 = vsel %vm249, %v469, 0
      %v511 = vsel %vm249, %v470, 0
      %v514 = vsel %vm249, %v471, 0
      %v517 = vsel %vm249, %v472, 0
      %v520 = vsel %vm249, %v473, 0
      %v523 = vsel %vm249, %v474, 0
      %v526 = vand.u32 %v476, %v301
      %528 = vmatpush.bf16.msra.mxu0 0
      %529 = vmatpush.bf16.msra.mxu0 0
      %530 = vmatpush.bf16.msra.mxu0 0
      %531 = vmatpush.bf16.msra.mxu0 0
      %532 = vmatpush.bf16.msra.mxu0 0
      %533 = vmatpush.bf16.msra.mxu0 0
      %534 = vmatpush.bf16.msra.mxu0 0
      %535 = vmatpush.bf16.msra.mxu0 %v526
      %536 = vmatmul.bf16.gmra.mxu0 %v478
      %v537 = vpop.f32.mrf.mxu0
      %v538 = vadd.f32 0.0, %v537
      %v539 = vpop.f32.mrf.mxu0
      %v540 = vadd.f32 0.0, %v539
      %541 = vmatmul.bf16.gmra.mxu0 %v481
      %v542 = vpop.f32.mrf.mxu0
      %v543 = vadd.f32 0.0, %v542
      %v544 = vpop.f32.mrf.mxu0
      %v545 = vadd.f32 0.0, %v544
      %546 = vmatmul.bf16.gmra.mxu0 %v484
      %v547 = vpop.f32.mrf.mxu0
      %v548 = vadd.f32 0.0, %v547
      %v549 = vpop.f32.mrf.mxu0
      %v550 = vadd.f32 0.0, %v549
      %551 = vmatmul.bf16.gmra.mxu0 %v487
      %v552 = vpop.f32.mrf.mxu0
      %v553 = vadd.f32 0.0, %v552
      %v554 = vpop.f32.mrf.mxu0
      %v555 = vadd.f32 0.0, %v554
      %556 = vmatmul.bf16.gmra.mxu0 %v490
      %v557 = vpop.f32.mrf.mxu0
      %v558 = vadd.f32 0.0, %v557
      %v559 = vpop.f32.mrf.mxu0
      %v560 = vadd.f32 0.0, %v559
      %561 = vmatmul.bf16.gmra.mxu0 %v493
      %v562 = vpop.f32.mrf.mxu0
      %v563 = vadd.f32 0.0, %v562
      %v564 = vpop.f32.mrf.mxu0
      %v565 = vadd.f32 0.0, %v564
      %566 = vmatmul.bf16.gmra.mxu0 %v496
      %v567 = vpop.f32.mrf.mxu0
      %v568 = vadd.f32 0.0, %v567
      %v569 = vpop.f32.mrf.mxu0
      %v570 = vadd.f32 0.0, %v569
      %571 = vmatmul.bf16.gmra.mxu0 %v499
      %v572 = vpop.f32.mrf.mxu0
      %v573 = vadd.f32 0.0, %v572
      %v574 = vpop.f32.mrf.mxu0
      %v575 = vadd.f32 0.0, %v574
      %576 = vmatmul.bf16.gmra.mxu0 %v502
      %v577 = vpop.f32.mrf.mxu0
      %v578 = vadd.f32 0.0, %v577
      %v579 = vpop.f32.mrf.mxu0
      %v580 = vadd.f32 0.0, %v579
      %581 = vmatmul.bf16.gmra.mxu0 %v505
      %v582 = vpop.f32.mrf.mxu0
      %v583 = vadd.f32 0.0, %v582
      %v584 = vpop.f32.mrf.mxu0
      %v585 = vadd.f32 0.0, %v584
      %586 = vmatmul.bf16.gmra.mxu0 %v508
      %v587 = vpop.f32.mrf.mxu0
      %v588 = vadd.f32 0.0, %v587
      %v589 = vpop.f32.mrf.mxu0
      %v590 = vadd.f32 0.0, %v589
      %591 = vmatmul.bf16.gmra.mxu0 %v511
      %v592 = vpop.f32.mrf.mxu0
      %v593 = vadd.f32 0.0, %v592
      %v594 = vpop.f32.mrf.mxu0
      %v595 = vadd.f32 0.0, %v594
      %596 = vmatmul.bf16.gmra.mxu0 %v514
      %v597 = vpop.f32.mrf.mxu0
      %v598 = vadd.f32 0.0, %v597
      %v599 = vpop.f32.mrf.mxu0
      %v600 = vadd.f32 0.0, %v599
      %601 = vmatmul.bf16.gmra.mxu0 %v517
      %v602 = vpop.f32.mrf.mxu0
      %v603 = vadd.f32 0.0, %v602
      %v604 = vpop.f32.mrf.mxu0
      %v605 = vadd.f32 0.0, %v604
      %606 = vmatmul.bf16.gmra.mxu0 %v520
      %v607 = vpop.f32.mrf.mxu0
      %v608 = vadd.f32 0.0, %v607
      %v609 = vpop.f32.mrf.mxu0
      %v610 = vadd.f32 0.0, %v609
      %611 = vmatmul.bf16.gmra.mxu0 %v523
      %v612 = vpop.f32.mrf.mxu0
      %v613 = vadd.f32 0.0, %v612
      %v614 = vpop.f32.mrf.mxu0
      %v615 = vadd.f32 0.0, %v614
      %616 = vdwg.mxu0
      %v617 = vld [vmem:[#allocation2] sm:$0xff]
      %v618 = vld [vmem:[#allocation2 + $0x8] sm:$0xff]
      %v619 = vld [vmem:[#allocation2 + $0x10] sm:$0xff]
      %v620 = vld [vmem:[#allocation2 + $0x18] sm:$0xff]
      %v621 = vld [vmem:[#allocation2 + $0x20] sm:$0xff]
      %v622 = vld [vmem:[#allocation2 + $0x28] sm:$0xff]
      %v623 = vld [vmem:[#allocation2 + $0x30] sm:$0xff]
      %v624 = vld [vmem:[#allocation2 + $0x38] sm:$0xff]
      %v625 = vld [vmem:[#allocation2 + $0x40] sm:$0xff]
      %v626 = vld [vmem:[#allocation2 + $0x48] sm:$0xff]
      %v627 = vld [vmem:[#allocation2 + $0x50] sm:$0xff]
      %v628 = vld [vmem:[#allocation2 + $0x58] sm:$0xff]
      %v629 = vld [vmem:[#allocation2 + $0x60] sm:$0xff]
      %v630 = vld [vmem:[#allocation2 + $0x68] sm:$0xff]
      %v631 = vld [vmem:[#allocation2 + $0x70] sm:$0xff]
      %v632 = vld [vmem:[#allocation2 + $0x78] sm:$0xff]
      %v633 = vld [vmem:[#allocation2 + $0x80] sm:$0xff]
      %v634 = vld [vmem:[#allocation2 + $0x88] sm:$0xff]
      %v635 = vld [vmem:[#allocation2 + $0x90] sm:$0xff]
      %v636 = vld [vmem:[#allocation2 + $0x98] sm:$0xff]
      %v637 = vld [vmem:[#allocation2 + $0xa0] sm:$0xff]
      %v638 = vld [vmem:[#allocation2 + $0xa8] sm:$0xff]
      %v639 = vld [vmem:[#allocation2 + $0xb0] sm:$0xff]
      %v640 = vld [vmem:[#allocation2 + $0xb8] sm:$0xff]
      %v641 = vld [vmem:[#allocation2 + $0xc0] sm:$0xff]
      %v642 = vld [vmem:[#allocation2 + $0xc8] sm:$0xff]
      %v643 = vld [vmem:[#allocation2 + $0xd0] sm:$0xff]
      %v644 = vld [vmem:[#allocation2 + $0xd8] sm:$0xff]
      %v645 = vld [vmem:[#allocation2 + $0xe0] sm:$0xff]
      %v646 = vld [vmem:[#allocation2 + $0xe8] sm:$0xff]
      %v647 = vld [vmem:[#allocation2 + $0xf0] sm:$0xff]
      %v648 = vld [vmem:[#allocation2 + $0xf8] sm:$0xff]
      %v649 = vadd.f32 %v617, %v538
      %v650 = vadd.f32 %v618, %v540
      %v651 = vadd.f32 %v619, %v543
      %v652 = vadd.f32 %v620, %v545
      %v653 = vadd.f32 %v621, %v548
      %v654 = vadd.f32 %v622, %v550
      %v655 = vadd.f32 %v623, %v553
      %v656 = vadd.f32 %v624, %v555
      %v657 = vadd.f32 %v625, %v558
      %v658 = vadd.f32 %v626, %v560
      %v659 = vadd.f32 %v627, %v563
      %v660 = vadd.f32 %v628, %v565
      %v661 = vadd.f32 %v629, %v568
      %v662 = vadd.f32 %v630, %v570
      %v663 = vadd.f32 %v631, %v573
      %v664 = vadd.f32 %v632, %v575
      %v665 = vadd.f32 %v633, %v578
      %v666 = vadd.f32 %v634, %v580
      %v667 = vadd.f32 %v635, %v583
      %v668 = vadd.f32 %v636, %v585
      %v669 = vadd.f32 %v637, %v588
      %v670 = vadd.f32 %v638, %v590
      %v671 = vadd.f32 %v639, %v593
      %v672 = vadd.f32 %v640, %v595
      %v673 = vadd.f32 %v641, %v598
      %v674 = vadd.f32 %v642, %v600
      %v675 = vadd.f32 %v643, %v603
      %v676 = vadd.f32 %v644, %v605
      %v677 = vadd.f32 %v645, %v608
      %v678 = vadd.f32 %v646, %v610
      %v679 = vadd.f32 %v647, %v613
      %v680 = vadd.f32 %v648, %v615
      %681 = vst.msk [vmem:[#allocation2] sm:$0xff] %vm394, %v649
      %682 = vst.msk [vmem:[#allocation2 + $0x8] sm:$0xff] %vm394, %v650
      %683 = vst.msk [vmem:[#allocation2 + $0x10] sm:$0xff] %vm394, %v651
      %684 = vst.msk [vmem:[#allocation2 + $0x18] sm:$0xff] %vm394, %v652
      %685 = vst.msk [vmem:[#allocation2 + $0x20] sm:$0xff] %vm394, %v653
      %686 = vst.msk [vmem:[#allocation2 + $0x28] sm:$0xff] %vm394, %v654
      %687 = vst.msk [vmem:[#allocation2 + $0x30] sm:$0xff] %vm394, %v655
      %688 = vst.msk [vmem:[#allocation2 + $0x38] sm:$0xff] %vm394, %v656
      %689 = vst.msk [vmem:[#allocation2 + $0x40] sm:$0xff] %vm394, %v657
      %690 = vst.msk [vmem:[#allocation2 + $0x48] sm:$0xff] %vm394, %v658
      %691 = vst.msk [vmem:[#allocation2 + $0x50] sm:$0xff] %vm394, %v659
      %692 = vst.msk [vmem:[#allocation2 + $0x58] sm:$0xff] %vm394, %v660
      %693 = vst.msk [vmem:[#allocation2 + $0x60] sm:$0xff] %vm394, %v661
      %694 = vst.msk [vmem:[#allocation2 + $0x68] sm:$0xff] %vm394, %v662
      %695 = vst.msk [vmem:[#allocation2 + $0x70] sm:$0xff] %vm394, %v663
      %696 = vst.msk [vmem:[#allocation2 + $0x78] sm:$0xff] %vm394, %v664
      %697 = vst.msk [vmem:[#allocation2 + $0x80] sm:$0xff] %vm394, %v665
      %698 = vst.msk [vmem:[#allocation2 + $0x88] sm:$0xff] %vm394, %v666
      %699 = vst.msk [vmem:[#allocation2 + $0x90] sm:$0xff] %vm394, %v667
      %700 = vst.msk [vmem:[#allocation2 + $0x98] sm:$0xff] %vm394, %v668
      %701 = vst.msk [vmem:[#allocation2 + $0xa0] sm:$0xff] %vm394, %v669
      %702 = vst.msk [vmem:[#allocation2 + $0xa8] sm:$0xff] %vm394, %v670
      %703 = vst.msk [vmem:[#allocation2 + $0xb0] sm:$0xff] %vm394, %v671
      %704 = vst.msk [vmem:[#allocation2 + $0xb8] sm:$0xff] %vm394, %v672
      %705 = vst.msk [vmem:[#allocation2 + $0xc0] sm:$0xff] %vm394, %v673
      %706 = vst.msk [vmem:[#allocation2 + $0xc8] sm:$0xff] %vm394, %v674
      %707 = vst.msk [vmem:[#allocation2 + $0xd0] sm:$0xff] %vm394, %v675
      %708 = vst.msk [vmem:[#allocation2 + $0xd8] sm:$0xff] %vm394, %v676
      %709 = vst.msk [vmem:[#allocation2 + $0xe0] sm:$0xff] %vm394, %v677
      %710 = vst.msk [vmem:[#allocation2 + $0xe8] sm:$0xff] %vm394, %v678
      %711 = vst.msk [vmem:[#allocation2 + $0xf0] sm:$0xff] %vm394, %v679
      %712 = vst.msk [vmem:[#allocation2 + $0xf8] sm:$0xff] %vm394, %v680
      %v713 = vld [vmem:[%s199 + $0x2] sm:$0xff]
      %v714 = vld [vmem:[%s199 + $0xa] sm:$0xff]
      %v715 = vld [vmem:[%s199 + $0x12] sm:$0xff]
      %v716 = vld [vmem:[%s199 + $0x1a] sm:$0xff]
      %v717 = vld [vmem:[%s199 + $0x2a] sm:$0xff]
      %v718 = vld [vmem:[%s199 + $0x32] sm:$0xff]
      %v719 = vld [vmem:[%s199 + $0x3a] sm:$0xff]
      %v720 = vld [vmem:[%s199 + $0x42] sm:$0xff]
      %v721 = vld [vmem:[%s199 + $0x52] sm:$0xff]
      %v722 = vld [vmem:[%s199 + $0x5a] sm:$0xff]
      %v723 = vld [vmem:[%s199 + $0x62] sm:$0xff]
      %v724 = vld [vmem:[%s199 + $0x6a] sm:$0xff]
      %v725 = vld [vmem:[%s199 + $0x7a] sm:$0xff]
      %v726 = vld [vmem:[%s199 + $0x82] sm:$0xff]
      %v727 = vld [vmem:[%s199 + $0x8a] sm:$0xff]
      %v728 = vld [vmem:[%s199 + $0x92] sm:$0xff]
      %v729 = vld [vmem:[%s199 + $0xa2] sm:$0xff]
      %v730 = vld [vmem:[%s199 + $0xaa] sm:$0xff]
      %v731 = vld [vmem:[%s199 + $0xb2] sm:$0xff]
      %v732 = vld [vmem:[%s199 + $0xba] sm:$0xff]
      %v733 = vld [vmem:[%s199 + $0xca] sm:$0xff]
      %v734 = vld [vmem:[%s199 + $0xd2] sm:$0xff]
      %v735 = vld [vmem:[%s199 + $0xda] sm:$0xff]
      %v736 = vld [vmem:[%s199 + $0xe2] sm:$0xff]
      %v737 = vld [vmem:[%s199 + $0xf2] sm:$0xff]
      %v738 = vld [vmem:[%s199 + $0xfa] sm:$0xff]
      %v739 = vld [vmem:[%s199 + $0x102] sm:$0xff]
      %v740 = vld [vmem:[%s199 + $0x10a] sm:$0xff]
      %v741 = vld [vmem:[%s199 + $0x11a] sm:$0xff]
      %v742 = vld [vmem:[%s199 + $0x122] sm:$0xff]
      %v743 = vld [vmem:[%s199 + $0x12a] sm:$0xff]
      %v744 = vld [vmem:[%s199 + $0x132] sm:$0xff]
      %v745 = vpack.c.bf16 %v714, %v713
      %v746 = vpack.c.bf16 %v716, %v715
      %v747 = vpack.c.bf16 %v718, %v717
      %v748 = vpack.c.bf16 %v720, %v719
      %v749 = vpack.c.bf16 %v722, %v721
      %v750 = vpack.c.bf16 %v724, %v723
      %v751 = vpack.c.bf16 %v726, %v725
      %v752 = vpack.c.bf16 %v728, %v727
      %v753 = vpack.c.bf16 %v730, %v729
      %v754 = vpack.c.bf16 %v732, %v731
      %v755 = vpack.c.bf16 %v734, %v733
      %v756 = vpack.c.bf16 %v736, %v735
      %v757 = vpack.c.bf16 %v738, %v737
      %v758 = vpack.c.bf16 %v740, %v739
      %v759 = vpack.c.bf16 %v742, %v741
      %v760 = vpack.c.bf16 %v744, %v743
      %s761 = scalar_lea.vmem %s1, 4
      %v762 = vld [vmem:[%s761] sm:$0x3]
      %v764 = vsel %vm249, %v745, 0
      %v767 = vsel %vm249, %v746, 0
      %v770 = vsel %vm249, %v747, 0
      %v773 = vsel %vm249, %v748, 0
      %v776 = vsel %vm249, %v749, 0
      %v779 = vsel %vm249, %v750, 0
      %v782 = vsel %vm249, %v751, 0
      %v785 = vsel %vm249, %v752, 0
      %v788 = vsel %vm249, %v753, 0
      %v791 = vsel %vm249, %v754, 0
      %v794 = vsel %vm249, %v755, 0
      %v797 = vsel %vm249, %v756, 0
      %v800 = vsel %vm249, %v757, 0
      %v803 = vsel %vm249, %v758, 0
      %v806 = vsel %vm249, %v759, 0
      %v809 = vsel %vm249, %v760, 0
      %v812 = vand.u32 %v762, %v301
      %814 = vmatpush.bf16.msra.mxu0 0
      %815 = vmatpush.bf16.msra.mxu0 0
      %816 = vmatpush.bf16.msra.mxu0 0
      %817 = vmatpush.bf16.msra.mxu0 0
      %818 = vmatpush.bf16.msra.mxu0 0
      %819 = vmatpush.bf16.msra.mxu0 0
      %820 = vmatpush.bf16.msra.mxu0 0
      %821 = vmatpush.bf16.msra.mxu0 %v812
      %822 = vmatmul.bf16.gmra.mxu0 %v764
      %v823 = vpop.f32.mrf.mxu0
      %v824 = vadd.f32 0.0, %v823
      %v825 = vpop.f32.mrf.mxu0
      %v826 = vadd.f32 0.0, %v825
      %827 = vmatmul.bf16.gmra.mxu0 %v767
      %v828 = vpop.f32.mrf.mxu0
      %v829 = vadd.f32 0.0, %v828
      %v830 = vpop.f32.mrf.mxu0
      %v831 = vadd.f32 0.0, %v830
      %832 = vmatmul.bf16.gmra.mxu0 %v770
      %v833 = vpop.f32.mrf.mxu0
      %v834 = vadd.f32 0.0, %v833
      %v835 = vpop.f32.mrf.mxu0
      %v836 = vadd.f32 0.0, %v835
      %837 = vmatmul.bf16.gmra.mxu0 %v773
      %v838 = vpop.f32.mrf.mxu0
      %v839 = vadd.f32 0.0, %v838
      %v840 = vpop.f32.mrf.mxu0
      %v841 = vadd.f32 0.0, %v840
      %842 = vmatmul.bf16.gmra.mxu0 %v776
      %v843 = vpop.f32.mrf.mxu0
      %v844 = vadd.f32 0.0, %v843
      %v845 = vpop.f32.mrf.mxu0
      %v846 = vadd.f32 0.0, %v845
      %847 = vmatmul.bf16.gmra.mxu0 %v779
      %v848 = vpop.f32.mrf.mxu0
      %v849 = vadd.f32 0.0, %v848
      %v850 = vpop.f32.mrf.mxu0
      %v851 = vadd.f32 0.0, %v850
      %852 = vmatmul.bf16.gmra.mxu0 %v782
      %v853 = vpop.f32.mrf.mxu0
      %v854 = vadd.f32 0.0, %v853
      %v855 = vpop.f32.mrf.mxu0
      %v856 = vadd.f32 0.0, %v855
      %857 = vmatmul.bf16.gmra.mxu0 %v785
      %v858 = vpop.f32.mrf.mxu0
      %v859 = vadd.f32 0.0, %v858
      %v860 = vpop.f32.mrf.mxu0
      %v861 = vadd.f32 0.0, %v860
      %862 = vmatmul.bf16.gmra.mxu0 %v788
      %v863 = vpop.f32.mrf.mxu0
      %v864 = vadd.f32 0.0, %v863
      %v865 = vpop.f32.mrf.mxu0
      %v866 = vadd.f32 0.0, %v865
      %867 = vmatmul.bf16.gmra.mxu0 %v791
      %v868 = vpop.f32.mrf.mxu0
      %v869 = vadd.f32 0.0, %v868
      %v870 = vpop.f32.mrf.mxu0
      %v871 = vadd.f32 0.0, %v870
      %872 = vmatmul.bf16.gmra.mxu0 %v794
      %v873 = vpop.f32.mrf.mxu0
      %v874 = vadd.f32 0.0, %v873
      %v875 = vpop.f32.mrf.mxu0
      %v876 = vadd.f32 0.0, %v875
      %877 = vmatmul.bf16.gmra.mxu0 %v797
      %v878 = vpop.f32.mrf.mxu0
      %v879 = vadd.f32 0.0, %v878
      %v880 = vpop.f32.mrf.mxu0
      %v881 = vadd.f32 0.0, %v880
      %882 = vmatmul.bf16.gmra.mxu0 %v800
      %v883 = vpop.f32.mrf.mxu0
      %v884 = vadd.f32 0.0, %v883
      %v885 = vpop.f32.mrf.mxu0
      %v886 = vadd.f32 0.0, %v885
      %887 = vmatmul.bf16.gmra.mxu0 %v803
      %v888 = vpop.f32.mrf.mxu0
      %v889 = vadd.f32 0.0, %v888
      %v890 = vpop.f32.mrf.mxu0
      %v891 = vadd.f32 0.0, %v890
      %892 = vmatmul.bf16.gmra.mxu0 %v806
      %v893 = vpop.f32.mrf.mxu0
      %v894 = vadd.f32 0.0, %v893
      %v895 = vpop.f32.mrf.mxu0
      %v896 = vadd.f32 0.0, %v895
      %897 = vmatmul.bf16.gmra.mxu0 %v809
      %v898 = vpop.f32.mrf.mxu0
      %v899 = vadd.f32 0.0, %v898
      %v900 = vpop.f32.mrf.mxu0
      %v901 = vadd.f32 0.0, %v900
      %902 = vdwg.mxu0
      %v903 = vld [vmem:[#allocation2] sm:$0xff]
      %v904 = vld [vmem:[#allocation2 + $0x8] sm:$0xff]
      %v905 = vld [vmem:[#allocation2 + $0x10] sm:$0xff]
      %v906 = vld [vmem:[#allocation2 + $0x18] sm:$0xff]
      %v907 = vld [vmem:[#allocation2 + $0x20] sm:$0xff]
      %v908 = vld [vmem:[#allocation2 + $0x28] sm:$0xff]
      %v909 = vld [vmem:[#allocation2 + $0x30] sm:$0xff]
      %v910 = vld [vmem:[#allocation2 + $0x38] sm:$0xff]
      %v911 = vld [vmem:[#allocation2 + $0x40] sm:$0xff]
      %v912 = vld [vmem:[#allocation2 + $0x48] sm:$0xff]
      %v913 = vld [vmem:[#allocation2 + $0x50] sm:$0xff]
      %v914 = vld [vmem:[#allocation2 + $0x58] sm:$0xff]
      %v915 = vld [vmem:[#allocation2 + $0x60] sm:$0xff]
      %v916 = vld [vmem:[#allocation2 + $0x68] sm:$0xff]
      %v917 = vld [vmem:[#allocation2 + $0x70] sm:$0xff]
      %v918 = vld [vmem:[#allocation2 + $0x78] sm:$0xff]
      %v919 = vld [vmem:[#allocation2 + $0x80] sm:$0xff]
      %v920 = vld [vmem:[#allocation2 + $0x88] sm:$0xff]
      %v921 = vld [vmem:[#allocation2 + $0x90] sm:$0xff]
      %v922 = vld [vmem:[#allocation2 + $0x98] sm:$0xff]
      %v923 = vld [vmem:[#allocation2 + $0xa0] sm:$0xff]
      %v924 = vld [vmem:[#allocation2 + $0xa8] sm:$0xff]
      %v925 = vld [vmem:[#allocation2 + $0xb0] sm:$0xff]
      %v926 = vld [vmem:[#allocation2 + $0xb8] sm:$0xff]
      %v927 = vld [vmem:[#allocation2 + $0xc0] sm:$0xff]
      %v928 = vld [vmem:[#allocation2 + $0xc8] sm:$0xff]
      %v929 = vld [vmem:[#allocation2 + $0xd0] sm:$0xff]
      %v930 = vld [vmem:[#allocation2 + $0xd8] sm:$0xff]
      %v931 = vld [vmem:[#allocation2 + $0xe0] sm:$0xff]
      %v932 = vld [vmem:[#allocation2 + $0xe8] sm:$0xff]
      %v933 = vld [vmem:[#allocation2 + $0xf0] sm:$0xff]
      %v934 = vld [vmem:[#allocation2 + $0xf8] sm:$0xff]
      %v935 = vadd.f32 %v903, %v824
      %v936 = vadd.f32 %v904, %v826
      %v937 = vadd.f32 %v905, %v829
      %v938 = vadd.f32 %v906, %v831
      %v939 = vadd.f32 %v907, %v834
      %v940 = vadd.f32 %v908, %v836
      %v941 = vadd.f32 %v909, %v839
      %v942 = vadd.f32 %v910, %v841
      %v943 = vadd.f32 %v911, %v844
      %v944 = vadd.f32 %v912, %v846
      %v945 = vadd.f32 %v913, %v849
      %v946 = vadd.f32 %v914, %v851
      %v947 = vadd.f32 %v915, %v854
      %v948 = vadd.f32 %v916, %v856
      %v949 = vadd.f32 %v917, %v859
      %v950 = vadd.f32 %v918, %v861
      %v951 = vadd.f32 %v919, %v864
      %v952 = vadd.f32 %v920, %v866
      %v953 = vadd.f32 %v921, %v869
      %v954 = vadd.f32 %v922, %v871
      %v955 = vadd.f32 %v923, %v874
      %v956 = vadd.f32 %v924, %v876
      %v957 = vadd.f32 %v925, %v879
      %v958 = vadd.f32 %v926, %v881
      %v959 = vadd.f32 %v927, %v884
      %v960 = vadd.f32 %v928, %v886
      %v961 = vadd.f32 %v929, %v889
      %v962 = vadd.f32 %v930, %v891
      %v963 = vadd.f32 %v931, %v894
      %v964 = vadd.f32 %v932, %v896
      %v965 = vadd.f32 %v933, %v899
      %v966 = vadd.f32 %v934, %v901
      %967 = vst.msk [vmem:[#allocation2] sm:$0xff] %vm394, %v935
      %968 = vst.msk [vmem:[#allocation2 + $0x8] sm:$0xff] %vm394, %v936
      %969 = vst.msk [vmem:[#allocation2 + $0x10] sm:$0xff] %vm394, %v937
      %970 = vst.msk [vmem:[#allocation2 + $0x18] sm:$0xff] %vm394, %v938
      %971 = vst.msk [vmem:[#allocation2 + $0x20] sm:$0xff] %vm394, %v939
      %972 = vst.msk [vmem:[#allocation2 + $0x28] sm:$0xff] %vm394, %v940
      %973 = vst.msk [vmem:[#allocation2 + $0x30] sm:$0xff] %vm394, %v941
      %974 = vst.msk [vmem:[#allocation2 + $0x38] sm:$0xff] %vm394, %v942
      %975 = vst.msk [vmem:[#allocation2 + $0x40] sm:$0xff] %vm394, %v943
      %976 = vst.msk [vmem:[#allocation2 + $0x48] sm:$0xff] %vm394, %v944
      %977 = vst.msk [vmem:[#allocation2 + $0x50] sm:$0xff] %vm394, %v945
      %978 = vst.msk [vmem:[#allocation2 + $0x58] sm:$0xff] %vm394, %v946
      %979 = vst.msk [vmem:[#allocation2 + $0x60] sm:$0xff] %vm394, %v947
      %980 = vst.msk [vmem:[#allocation2 + $0x68] sm:$0xff] %vm394, %v948
      %981 = vst.msk [vmem:[#allocation2 + $0x70] sm:$0xff] %vm394, %v949
      %982 = vst.msk [vmem:[#allocation2 + $0x78] sm:$0xff] %vm394, %v950
      %983 = vst.msk [vmem:[#allocation2 + $0x80] sm:$0xff] %vm394, %v951
      %984 = vst.msk [vmem:[#allocation2 + $0x88] sm:$0xff] %vm394, %v952
      %985 = vst.msk [vmem:[#allocation2 + $0x90] sm:$0xff] %vm394, %v953
      %986 = vst.msk [vmem:[#allocation2 + $0x98] sm:$0xff] %vm394, %v954
      %987 = vst.msk [vmem:[#allocation2 + $0xa0] sm:$0xff] %vm394, %v955
      %988 = vst.msk [vmem:[#allocation2 + $0xa8] sm:$0xff] %vm394, %v956
      %989 = vst.msk [vmem:[#allocation2 + $0xb0] sm:$0xff] %vm394, %v957
      %990 = vst.msk [vmem:[#allocation2 + $0xb8] sm:$0xff] %vm394, %v958
      %991 = vst.msk [vmem:[#allocation2 + $0xc0] sm:$0xff] %vm394, %v959
      %992 = vst.msk [vmem:[#allocation2 + $0xc8] sm:$0xff] %vm394, %v960
      %993 = vst.msk [vmem:[#allocation2 + $0xd0] sm:$0xff] %vm394, %v961
      %994 = vst.msk [vmem:[#allocation2 + $0xd8] sm:$0xff] %vm394, %v962
      %995 = vst.msk [vmem:[#allocation2 + $0xe0] sm:$0xff] %vm394, %v963
      %996 = vst.msk [vmem:[#allocation2 + $0xe8] sm:$0xff] %vm394, %v964
      %997 = vst.msk [vmem:[#allocation2 + $0xf0] sm:$0xff] %vm394, %v965
      %998 = vst.msk [vmem:[#allocation2 + $0xf8] sm:$0xff] %vm394, %v966
      %s999 = sadd.s32 %s197, 1
      %s1000 = smul.u32 %s999, 40
      %s1001 = scalar_lea.vmem %s184, %s1000
      %v1002 = vld [vmem:[%s1001] sm:$0xff]
      %v1003 = vld [vmem:[%s1001 + $0x8] sm:$0xff]
      %v1004 = vld [vmem:[%s1001 + $0x10] sm:$0xff]
      %v1005 = vld [vmem:[%s1001 + $0x18] sm:$0xff]
      %v1006 = vld [vmem:[%s1001 + $0x28] sm:$0xff]
      %v1007 = vld [vmem:[%s1001 + $0x30] sm:$0xff]
      %v1008 = vld [vmem:[%s1001 + $0x38] sm:$0xff]
      %v1009 = vld [vmem:[%s1001 + $0x40] sm:$0xff]
      %v1010 = vld [vmem:[%s1001 + $0x50] sm:$0xff]
      %v1011 = vld [vmem:[%s1001 + $0x58] sm:$0xff]
      %v1012 = vld [vmem:[%s1001 + $0x60] sm:$0xff]
      %v1013 = vld [vmem:[%s1001 + $0x68] sm:$0xff]
      %v1014 = vld [vmem:[%s1001 + $0x78] sm:$0xff]
      %v1015 = vld [vmem:[%s1001 + $0x80] sm:$0xff]
      %v1016 = vld [vmem:[%s1001 + $0x88] sm:$0xff]
      %v1017 = vld [vmem:[%s1001 + $0x90] sm:$0xff]
      %v1018 = vld [vmem:[%s1001 + $0xa0] sm:$0xff]
      %v1019 = vld [vmem:[%s1001 + $0xa8] sm:$0xff]
      %v1020 = vld [vmem:[%s1001 + $0xb0] sm:$0xff]
      %v1021 = vld [vmem:[%s1001 + $0xb8] sm:$0xff]
      %v1022 = vld [vmem:[%s1001 + $0xc8] sm:$0xff]
      %v1023 = vld [vmem:[%s1001 + $0xd0] sm:$0xff]
      %v1024 = vld [vmem:[%s1001 + $0xd8] sm:$0xff]
      %v1025 = vld [vmem:[%s1001 + $0xe0] sm:$0xff]
      %v1026 = vld [vmem:[%s1001 + $0xf0] sm:$0xff]
      %v1027 = vld [vmem:[%s1001 + $0xf8] sm:$0xff]
      %v1028 = vld [vmem:[%s1001 + $0x100] sm:$0xff]
      %v1029 = vld [vmem:[%s1001 + $0x108] sm:$0xff]
      %v1030 = vld [vmem:[%s1001 + $0x118] sm:$0xff]
      %v1031 = vld [vmem:[%s1001 + $0x120] sm:$0xff]
      %v1032 = vld [vmem:[%s1001 + $0x128] sm:$0xff]
      %v1033 = vld [vmem:[%s1001 + $0x130] sm:$0xff]
      %v1034 = vpack.c.bf16 %v1003, %v1002
      %v1035 = vpack.c.bf16 %v1005, %v1004
      %v1036 = vpack.c.bf16 %v1007, %v1006
      %v1037 = vpack.c.bf16 %v1009, %v1008
      %v1038 = vpack.c.bf16 %v1011, %v1010
      %v1039 = vpack.c.bf16 %v1013, %v1012
      %v1040 = vpack.c.bf16 %v1015, %v1014
      %v1041 = vpack.c.bf16 %v1017, %v1016
      %v1042 = vpack.c.bf16 %v1019, %v1018
      %v1043 = vpack.c.bf16 %v1021, %v1020
      %v1044 = vpack.c.bf16 %v1023, %v1022
      %v1045 = vpack.c.bf16 %v1025, %v1024
      %v1046 = vpack.c.bf16 %v1027, %v1026
      %v1047 = vpack.c.bf16 %v1029, %v1028
      %v1048 = vpack.c.bf16 %v1031, %v1030
      %v1049 = vpack.c.bf16 %v1033, %v1032
      %s1050 = scalar_lea.vmem %s1, 6
      %v1051 = vld [vmem:[%s1050] sm:$0x3]
      %v1053 = vsel %vm249, %v1034, 0
      %v1056 = vsel %vm249, %v1035, 0
      %v1059 = vsel %vm249, %v1036, 0
      %v1062 = vsel %vm249, %v1037, 0
      %v1065 = vsel %vm249, %v1038, 0
      %v1068 = vsel %vm249, %v1039, 0
      %v1071 = vsel %vm249, %v1040, 0
      %v1074 = vsel %vm249, %v1041, 0
      %v1077 = vsel %vm249, %v1042, 0
      %v1080 = vsel %vm249, %v1043, 0
      %v1083 = vsel %vm249, %v1044, 0
      %v1086 = vsel %vm249, %v1045, 0
      %v1089 = vsel %vm249, %v1046, 0
      %v1092 = vsel %vm249, %v1047, 0
      %v1095 = vsel %vm249, %v1048, 0
      %v1098 = vsel %vm249, %v1049, 0
      %v1101 = vand.u32 %v1051, %v301
      %1103 = vmatpush.bf16.msra.mxu0 0
      %1104 = vmatpush.bf16.msra.mxu0 0
      %1105 = vmatpush.bf16.msra.mxu0 0
      %1106 = vmatpush.bf16.msra.mxu0 0
      %1107 = vmatpush.bf16.msra.mxu0 0
      %1108 = vmatpush.bf16.msra.mxu0 0
      %1109 = vmatpush.bf16.msra.mxu0 0
      %1110 = vmatpush.bf16.msra.mxu0 %v1101
      %1111 = vmatmul.bf16.gmra.mxu0 %v1053
      %v1112 = vpop.f32.mrf.mxu0
      %v1113 = vadd.f32 0.0, %v1112
      %v1114 = vpop.f32.mrf.mxu0
      %v1115 = vadd.f32 0.0, %v1114
      %1116 = vmatmul.bf16.gmra.mxu0 %v1056
      %v1117 = vpop.f32.mrf.mxu0
      %v1118 = vadd.f32 0.0, %v1117
      %v1119 = vpop.f32.mrf.mxu0
      %v1120 = vadd.f32 0.0, %v1119
      %1121 = vmatmul.bf16.gmra.mxu0 %v1059
      %v1122 = vpop.f32.mrf.mxu0
      %v1123 = vadd.f32 0.0, %v1122
      %v1124 = vpop.f32.mrf.mxu0
      %v1125 = vadd.f32 0.0, %v1124
      %1126 = vmatmul.bf16.gmra.mxu0 %v1062
      %v1127 = vpop.f32.mrf.mxu0
      %v1128 = vadd.f32 0.0, %v1127
      %v1129 = vpop.f32.mrf.mxu0
      %v1130 = vadd.f32 0.0, %v1129
      %1131 = vmatmul.bf16.gmra.mxu0 %v1065
      %v1132 = vpop.f32.mrf.mxu0
      %v1133 = vadd.f32 0.0, %v1132
      %v1134 = vpop.f32.mrf.mxu0
      %v1135 = vadd.f32 0.0, %v1134
      %1136 = vmatmul.bf16.gmra.mxu0 %v1068
      %v1137 = vpop.f32.mrf.mxu0
      %v1138 = vadd.f32 0.0, %v1137
      %v1139 = vpop.f32.mrf.mxu0
      %v1140 = vadd.f32 0.0, %v1139
      %1141 = vmatmul.bf16.gmra.mxu0 %v1071
      %v1142 = vpop.f32.mrf.mxu0
      %v1143 = vadd.f32 0.0, %v1142
      %v1144 = vpop.f32.mrf.mxu0
      %v1145 = vadd.f32 0.0, %v1144
      %1146 = vmatmul.bf16.gmra.mxu0 %v1074
      %v1147 = vpop.f32.mrf.mxu0
      %v1148 = vadd.f32 0.0, %v1147
      %v1149 = vpop.f32.mrf.mxu0
      %v1150 = vadd.f32 0.0, %v1149
      %1151 = vmatmul.bf16.gmra.mxu0 %v1077
      %v1152 = vpop.f32.mrf.mxu0
      %v1153 = vadd.f32 0.0, %v1152
      %v1154 = vpop.f32.mrf.mxu0
      %v1155 = vadd.f32 0.0, %v1154
      %1156 = vmatmul.bf16.gmra.mxu0 %v1080
      %v1157 = vpop.f32.mrf.mxu0
      %v1158 = vadd.f32 0.0, %v1157
      %v1159 = vpop.f32.mrf.mxu0
      %v1160 = vadd.f32 0.0, %v1159
      %1161 = vmatmul.bf16.gmra.mxu0 %v1083
      %v1162 = vpop.f32.mrf.mxu0
      %v1163 = vadd.f32 0.0, %v1162
      %v1164 = vpop.f32.mrf.mxu0
      %v1165 = vadd.f32 0.0, %v1164
      %1166 = vmatmul.bf16.gmra.mxu0 %v1086
      %v1167 = vpop.f32.mrf.mxu0
      %v1168 = vadd.f32 0.0, %v1167
      %v1169 = vpop.f32.mrf.mxu0
      %v1170 = vadd.f32 0.0, %v1169
      %1171 = vmatmul.bf16.gmra.mxu0 %v1089
      %v1172 = vpop.f32.mrf.mxu0
      %v1173 = vadd.f32 0.0, %v1172
      %v1174 = vpop.f32.mrf.mxu0
      %v1175 = vadd.f32 0.0, %v1174
      %1176 = vmatmul.bf16.gmra.mxu0 %v1092
      %v1177 = vpop.f32.mrf.mxu0
      %v1178 = vadd.f32 0.0, %v1177
      %v1179 = vpop.f32.mrf.mxu0
      %v1180 = vadd.f32 0.0, %v1179
      %1181 = vmatmul.bf16.gmra.mxu0 %v1095
      %v1182 = vpop.f32.mrf.mxu0
      %v1183 = vadd.f32 0.0, %v1182
      %v1184 = vpop.f32.mrf.mxu0
      %v1185 = vadd.f32 0.0, %v1184
      %1186 = vmatmul.bf16.gmra.mxu0 %v1098
      %v1187 = vpop.f32.mrf.mxu0
      %v1188 = vadd.f32 0.0, %v1187
      %v1189 = vpop.f32.mrf.mxu0
      %v1190 = vadd.f32 0.0, %v1189
      %1191 = vdwg.mxu0
      %v1192 = vld [vmem:[#allocation2] sm:$0xff]
      %v1193 = vld [vmem:[#allocation2 + $0x8] sm:$0xff]
      %v1194 = vld [vmem:[#allocation2 + $0x10] sm:$0xff]
      %v1195 = vld [vmem:[#allocation2 + $0x18] sm:$0xff]
      %v1196 = vld [vmem:[#allocation2 + $0x20] sm:$0xff]
      %v1197 = vld [vmem:[#allocation2 + $0x28] sm:$0xff]
      %v1198 = vld [vmem:[#allocation2 + $0x30] sm:$0xff]
      %v1199 = vld [vmem:[#allocation2 + $0x38] sm:$0xff]
      %v1200 = vld [vmem:[#allocation2 + $0x40] sm:$0xff]
      %v1201 = vld [vmem:[#allocation2 + $0x48] sm:$0xff]
      %v1202 = vld [vmem:[#allocation2 + $0x50] sm:$0xff]
      %v1203 = vld [vmem:[#allocation2 + $0x58] sm:$0xff]
      %v1204 = vld [vmem:[#allocation2 + $0x60] sm:$0xff]
      %v1205 = vld [vmem:[#allocation2 + $0x68] sm:$0xff]
      %v1206 = vld [vmem:[#allocation2 + $0x70] sm:$0xff]
      %v1207 = vld [vmem:[#allocation2 + $0x78] sm:$0xff]
      %v1208 = vld [vmem:[#allocation2 + $0x80] sm:$0xff]
      %v1209 = vld [vmem:[#allocation2 + $0x88] sm:$0xff]
      %v1210 = vld [vmem:[#allocation2 + $0x90] sm:$0xff]
      %v1211 = vld [vmem:[#allocation2 + $0x98] sm:$0xff]
      %v1212 = vld [vmem:[#allocation2 + $0xa0] sm:$0xff]
      %v1213 = vld [vmem:[#allocation2 + $0xa8] sm:$0xff]
      %v1214 = vld [vmem:[#allocation2 + $0xb0] sm:$0xff]
      %v1215 = vld [vmem:[#allocation2 + $0xb8] sm:$0xff]
      %v1216 = vld [vmem:[#allocation2 + $0xc0] sm:$0xff]
      %v1217 = vld [vmem:[#allocation2 + $0xc8] sm:$0xff]
      %v1218 = vld [vmem:[#allocation2 + $0xd0] sm:$0xff]
      %v1219 = vld [vmem:[#allocation2 + $0xd8] sm:$0xff]
      %v1220 = vld [vmem:[#allocation2 + $0xe0] sm:$0xff]
      %v1221 = vld [vmem:[#allocation2 + $0xe8] sm:$0xff]
      %v1222 = vld [vmem:[#allocation2 + $0xf0] sm:$0xff]
      %v1223 = vld [vmem:[#allocation2 + $0xf8] sm:$0xff]
      %v1224 = vadd.f32 %v1192, %v1113
      %v1225 = vadd.f32 %v1193, %v1115
      %v1226 = vadd.f32 %v1194, %v1118
      %v1227 = vadd.f32 %v1195, %v1120
      %v1228 = vadd.f32 %v1196, %v1123
      %v1229 = vadd.f32 %v1197, %v1125
      %v1230 = vadd.f32 %v1198, %v1128
      %v1231 = vadd.f32 %v1199, %v1130
      %v1232 = vadd.f32 %v1200, %v1133
      %v1233 = vadd.f32 %v1201, %v1135
      %v1234 = vadd.f32 %v1202, %v1138
      %v1235 = vadd.f32 %v1203, %v1140
      %v1236 = vadd.f32 %v1204, %v1143
      %v1237 = vadd.f32 %v1205, %v1145
      %v1238 = vadd.f32 %v1206, %v1148
      %v1239 = vadd.f32 %v1207, %v1150
      %v1240 = vadd.f32 %v1208, %v1153
      %v1241 = vadd.f32 %v1209, %v1155
      %v1242 = vadd.f32 %v1210, %v1158
      %v1243 = vadd.f32 %v1211, %v1160
      %v1244 = vadd.f32 %v1212, %v1163
      %v1245 = vadd.f32 %v1213, %v1165
      %v1246 = vadd.f32 %v1214, %v1168
      %v1247 = vadd.f32 %v1215, %v1170
      %v1248 = vadd.f32 %v1216, %v1173
      %v1249 = vadd.f32 %v1217, %v1175
      %v1250 = vadd.f32 %v1218, %v1178
      %v1251 = vadd.f32 %v1219, %v1180
      %v1252 = vadd.f32 %v1220, %v1183
      %v1253 = vadd.f32 %v1221, %v1185
      %v1254 = vadd.f32 %v1222, %v1188
      %v1255 = vadd.f32 %v1223, %v1190
      %1256 = vst.msk [vmem:[#allocation2] sm:$0xff] %vm394, %v1224
      %1257 = vst.msk [vmem:[#allocation2 + $0x8] sm:$0xff] %vm394, %v1225
      %1258 = vst.msk [vmem:[#allocation2 + $0x10] sm:$0xff] %vm394, %v1226
      %1259 = vst.msk [vmem:[#allocation2 + $0x18] sm:$0xff] %vm394, %v1227
      %1260 = vst.msk [vmem:[#allocation2 + $0x20] sm:$0xff] %vm394, %v1228
      %1261 = vst.msk [vmem:[#allocation2 + $0x28] sm:$0xff] %vm394, %v1229
      %1262 = vst.msk [vmem:[#allocation2 + $0x30] sm:$0xff] %vm394, %v1230
      %1263 = vst.msk [vmem:[#allocation2 + $0x38] sm:$0xff] %vm394, %v1231
      %1264 = vst.msk [vmem:[#allocation2 + $0x40] sm:$0xff] %vm394, %v1232
      %1265 = vst.msk [vmem:[#allocation2 + $0x48] sm:$0xff] %vm394, %v1233
      %1266 = vst.msk [vmem:[#allocation2 + $0x50] sm:$0xff] %vm394, %v1234
      %1267 = vst.msk [vmem:[#allocation2 + $0x58] sm:$0xff] %vm394, %v1235
      %1268 = vst.msk [vmem:[#allocation2 + $0x60] sm:$0xff] %vm394, %v1236
      %1269 = vst.msk [vmem:[#allocation2 + $0x68] sm:$0xff] %vm394, %v1237
      %1270 = vst.msk [vmem:[#allocation2 + $0x70] sm:$0xff] %vm394, %v1238
      %1271 = vst.msk [vmem:[#allocation2 + $0x78] sm:$0xff] %vm394, %v1239
      %1272 = vst.msk [vmem:[#allocation2 + $0x80] sm:$0xff] %vm394, %v1240
      %1273 = vst.msk [vmem:[#allocation2 + $0x88] sm:$0xff] %vm394, %v1241
      %1274 = vst.msk [vmem:[#allocation2 + $0x90] sm:$0xff] %vm394, %v1242
      %1275 = vst.msk [vmem:[#allocation2 + $0x98] sm:$0xff] %vm394, %v1243
      %1276 = vst.msk [vmem:[#allocation2 + $0xa0] sm:$0xff] %vm394, %v1244
      %1277 = vst.msk [vmem:[#allocation2 + $0xa8] sm:$0xff] %vm394, %v1245
      %1278 = vst.msk [vmem:[#allocation2 + $0xb0] sm:$0xff] %vm394, %v1246
      %1279 = vst.msk [vmem:[#allocation2 + $0xb8] sm:$0xff] %vm394, %v1247
      %1280 = vst.msk [vmem:[#allocation2 + $0xc0] sm:$0xff] %vm394, %v1248
      %1281 = vst.msk [vmem:[#allocation2 + $0xc8] sm:$0xff] %vm394, %v1249
      %1282 = vst.msk [vmem:[#allocation2 + $0xd0] sm:$0xff] %vm394, %v1250
      %1283 = vst.msk [vmem:[#allocation2 + $0xd8] sm:$0xff] %vm394, %v1251
      %1284 = vst.msk [vmem:[#allocation2 + $0xe0] sm:$0xff] %vm394, %v1252
      %1285 = vst.msk [vmem:[#allocation2 + $0xe8] sm:$0xff] %vm394, %v1253
      %1286 = vst.msk [vmem:[#allocation2 + $0xf0] sm:$0xff] %vm394, %v1254
      %1287 = vst.msk [vmem:[#allocation2 + $0xf8] sm:$0xff] %vm394, %v1255
      %v1288 = vld [vmem:[%s1001 + $0x1] sm:$0xff]
      %v1289 = vld [vmem:[%s1001 + $0x9] sm:$0xff]
      %v1290 = vld [vmem:[%s1001 + $0x11] sm:$0xff]
      %v1291 = vld [vmem:[%s1001 + $0x19] sm:$0xff]
      %v1292 = vld [vmem:[%s1001 + $0x29] sm:$0xff]
      %v1293 = vld [vmem:[%s1001 + $0x31] sm:$0xff]
      %v1294 = vld [vmem:[%s1001 + $0x39] sm:$0xff]
      %v1295 = vld [vmem:[%s1001 + $0x41] sm:$0xff]
      %v1296 = vld [vmem:[%s1001 + $0x51] sm:$0xff]
      %v1297 = vld [vmem:[%s1001 + $0x59] sm:$0xff]
      %v1298 = vld [vmem:[%s1001 + $0x61] sm:$0xff]
      %v1299 = vld [vmem:[%s1001 + $0x69] sm:$0xff]
      %v1300 = vld [vmem:[%s1001 + $0x79] sm:$0xff]
      %v1301 = vld [vmem:[%s1001 + $0x81] sm:$0xff]
      %v1302 = vld [vmem:[%s1001 + $0x89] sm:$0xff]
      %v1303 = vld [vmem:[%s1001 + $0x91] sm:$0xff]
      %v1304 = vld [vmem:[%s1001 + $0xa1] sm:$0xff]
      %v1305 = vld [vmem:[%s1001 + $0xa9] sm:$0xff]
      %v1306 = vld [vmem:[%s1001 + $0xb1] sm:$0xff]
      %v1307 = vld [vmem:[%s1001 + $0xb9] sm:$0xff]
      %v1308 = vld [vmem:[%s1001 + $0xc9] sm:$0xff]
      %v1309 = vld [vmem:[%s1001 + $0xd1] sm:$0xff]
      %v1310 = vld [vmem:[%s1001 + $0xd9] sm:$0xff]
      %v1311 = vld [vmem:[%s1001 + $0xe1] sm:$0xff]
      %v1312 = vld [vmem:[%s1001 + $0xf1] sm:$0xff]
      %v1313 = vld [vmem:[%s1001 + $0xf9] sm:$0xff]
      %v1314 = vld [vmem:[%s1001 + $0x101] sm:$0xff]
      %v1315 = vld [vmem:[%s1001 + $0x109] sm:$0xff]
      %v1316 = vld [vmem:[%s1001 + $0x119] sm:$0xff]
      %v1317 = vld [vmem:[%s1001 + $0x121] sm:$0xff]
      %v1318 = vld [vmem:[%s1001 + $0x129] sm:$0xff]
      %v1319 = vld [vmem:[%s1001 + $0x131] sm:$0xff]
      %v1320 = vpack.c.bf16 %v1289, %v1288
      %v1321 = vpack.c.bf16 %v1291, %v1290
      %v1322 = vpack.c.bf16 %v1293, %v1292
      %v1323 = vpack.c.bf16 %v1295, %v1294
      %v1324 = vpack.c.bf16 %v1297, %v1296
      %v1325 = vpack.c.bf16 %v1299, %v1298
      %v1326 = vpack.c.bf16 %v1301, %v1300
      %v1327 = vpack.c.bf16 %v1303, %v1302
      %v1328 = vpack.c.bf16 %v1305, %v1304
      %v1329 = vpack.c.bf16 %v1307, %v1306
      %v1330 = vpack.c.bf16 %v1309, %v1308
      %v1331 = vpack.c.bf16 %v1311, %v1310
      %v1332 = vpack.c.bf16 %v1313, %v1312
      %v1333 = vpack.c.bf16 %v1315, %v1314
      %v1334 = vpack.c.bf16 %v1317, %v1316
      %v1335 = vpack.c.bf16 %v1319, %v1318
      %s1336 = scalar_lea.vmem %s1, 8
      %v1337 = vld [vmem:[%s1336] sm:$0x3]
      %v1339 = vsel %vm249, %v1320, 0
      %v1342 = vsel %vm249, %v1321, 0
      %v1345 = vsel %vm249, %v1322, 0
      %v1348 = vsel %vm249, %v1323, 0
      %v1351 = vsel %vm249, %v1324, 0
      %v1354 = vsel %vm249, %v1325, 0
      %v1357 = vsel %vm249, %v1326, 0
      %v1360 = vsel %vm249, %v1327, 0
      %v1363 = vsel %vm249, %v1328, 0
      %v1366 = vsel %vm249, %v1329, 0
      %v1369 = vsel %vm249, %v1330, 0
      %v1372 = vsel %vm249, %v1331, 0
      %v1375 = vsel %vm249, %v1332, 0
      %v1378 = vsel %vm249, %v1333, 0
      %v1381 = vsel %vm249, %v1334, 0
      %v1384 = vsel %vm249, %v1335, 0
      %v1387 = vand.u32 %v1337, %v301
      %1389 = vmatpush.bf16.msra.mxu0 0
      %1390 = vmatpush.bf16.msra.mxu0 0
      %1391 = vmatpush.bf16.msra.mxu0 0
      %1392 = vmatpush.bf16.msra.mxu0 0
      %1393 = vmatpush.bf16.msra.mxu0 0
      %1394 = vmatpush.bf16.msra.mxu0 0
      %1395 = vmatpush.bf16.msra.mxu0 0
      %1396 = vmatpush.bf16.msra.mxu0 %v1387
      %1397 = vmatmul.bf16.gmra.mxu0 %v1339
      %v1398 = vpop.f32.mrf.mxu0
      %v1399 = vadd.f32 0.0, %v1398
      %v1400 = vpop.f32.mrf.mxu0
      %v1401 = vadd.f32 0.0, %v1400
      %1402 = vmatmul.bf16.gmra.mxu0 %v1342
      %v1403 = vpop.f32.mrf.mxu0
      %v1404 = vadd.f32 0.0, %v1403
      %v1405 = vpop.f32.mrf.mxu0
      %v1406 = vadd.f32 0.0, %v1405
      %1407 = vmatmul.bf16.gmra.mxu0 %v1345
      %v1408 = vpop.f32.mrf.mxu0
      %v1409 = vadd.f32 0.0, %v1408
      %v1410 = vpop.f32.mrf.mxu0
      %v1411 = vadd.f32 0.0, %v1410
      %1412 = vmatmul.bf16.gmra.mxu0 %v1348
      %v1413 = vpop.f32.mrf.mxu0
      %v1414 = vadd.f32 0.0, %v1413
      %v1415 = vpop.f32.mrf.mxu0
      %v1416 = vadd.f32 0.0, %v1415
      %1417 = vmatmul.bf16.gmra.mxu0 %v1351
      %v1418 = vpop.f32.mrf.mxu0
      %v1419 = vadd.f32 0.0, %v1418
      %v1420 = vpop.f32.mrf.mxu0
      %v1421 = vadd.f32 0.0, %v1420
      %1422 = vmatmul.bf16.gmra.mxu0 %v1354
      %v1423 = vpop.f32.mrf.mxu0
      %v1424 = vadd.f32 0.0, %v1423
      %v1425 = vpop.f32.mrf.mxu0
      %v1426 = vadd.f32 0.0, %v1425
      %1427 = vmatmul.bf16.gmra.mxu0 %v1357
      %v1428 = vpop.f32.mrf.mxu0
      %v1429 = vadd.f32 0.0, %v1428
      %v1430 = vpop.f32.mrf.mxu0
      %v1431 = vadd.f32 0.0, %v1430
      %1432 = vmatmul.bf16.gmra.mxu0 %v1360
      %v1433 = vpop.f32.mrf.mxu0
      %v1434 = vadd.f32 0.0, %v1433
      %v1435 = vpop.f32.mrf.mxu0
      %v1436 = vadd.f32 0.0, %v1435
      %1437 = vmatmul.bf16.gmra.mxu0 %v1363
      %v1438 = vpop.f32.mrf.mxu0
      %v1439 = vadd.f32 0.0, %v1438
      %v1440 = vpop.f32.mrf.mxu0
      %v1441 = vadd.f32 0.0, %v1440
      %1442 = vmatmul.bf16.gmra.mxu0 %v1366
      %v1443 = vpop.f32.mrf.mxu0
      %v1444 = vadd.f32 0.0, %v1443
      %v1445 = vpop.f32.mrf.mxu0
      %v1446 = vadd.f32 0.0, %v1445
      %1447 = vmatmul.bf16.gmra.mxu0 %v1369
      %v1448 = vpop.f32.mrf.mxu0
      %v1449 = vadd.f32 0.0, %v1448
      %v1450 = vpop.f32.mrf.mxu0
      %v1451 = vadd.f32 0.0, %v1450
      %1452 = vmatmul.bf16.gmra.mxu0 %v1372
      %v1453 = vpop.f32.mrf.mxu0
      %v1454 = vadd.f32 0.0, %v1453
      %v1455 = vpop.f32.mrf.mxu0
      %v1456 = vadd.f32 0.0, %v1455
      %1457 = vmatmul.bf16.gmra.mxu0 %v1375
      %v1458 = vpop.f32.mrf.mxu0
      %v1459 = vadd.f32 0.0, %v1458
      %v1460 = vpop.f32.mrf.mxu0
      %v1461 = vadd.f32 0.0, %v1460
      %1462 = vmatmul.bf16.gmra.mxu0 %v1378
      %v1463 = vpop.f32.mrf.mxu0
      %v1464 = vadd.f32 0.0, %v1463
      %v1465 = vpop.f32.mrf.mxu0
      %v1466 = vadd.f32 0.0, %v1465
      %1467 = vmatmul.bf16.gmra.mxu0 %v1381
      %v1468 = vpop.f32.mrf.mxu0
      %v1469 = vadd.f32 0.0, %v1468
      %v1470 = vpop.f32.mrf.mxu0
      %v1471 = vadd.f32 0.0, %v1470
      %1472 = vmatmul.bf16.gmra.mxu0 %v1384
      %v1473 = vpop.f32.mrf.mxu0
      %v1474 = vadd.f32 0.0, %v1473
      %v1475 = vpop.f32.mrf.mxu0
      %v1476 = vadd.f32 0.0, %v1475
      %1477 = vdwg.mxu0
      %v1478 = vld [vmem:[#allocation2] sm:$0xff]
      %v1479 = vld [vmem:[#allocation2 + $0x8] sm:$0xff]
      %v1480 = vld [vmem:[#allocation2 + $0x10] sm:$0xff]
      %v1481 = vld [vmem:[#allocation2 + $0x18] sm:$0xff]
      %v1482 = vld [vmem:[#allocation2 + $0x20] sm:$0xff]
      %v1483 = vld [vmem:[#allocation2 + $0x28] sm:$0xff]
      %v1484 = vld [vmem:[#allocation2 + $0x30] sm:$0xff]
      %v1485 = vld [vmem:[#allocation2 + $0x38] sm:$0xff]
      %v1486 = vld [vmem:[#allocation2 + $0x40] sm:$0xff]
      %v1487 = vld [vmem:[#allocation2 + $0x48] sm:$0xff]
      %v1488 = vld [vmem:[#allocation2 + $0x50] sm:$0xff]
      %v1489 = vld [vmem:[#allocation2 + $0x58] sm:$0xff]
      %v1490 = vld [vmem:[#allocation2 + $0x60] sm:$0xff]
      %v1491 = vld [vmem:[#allocation2 + $0x68] sm:$0xff]
      %v1492 = vld [vmem:[#allocation2 + $0x70] sm:$0xff]
      %v1493 = vld [vmem:[#allocation2 + $0x78] sm:$0xff]
      %v1494 = vld [vmem:[#allocation2 + $0x80] sm:$0xff]
      %v1495 = vld [vmem:[#allocation2 + $0x88] sm:$0xff]
      %v1496 = vld [vmem:[#allocation2 + $0x90] sm:$0xff]
      %v1497 = vld [vmem:[#allocation2 + $0x98] sm:$0xff]
      %v1498 = vld [vmem:[#allocation2 + $0xa0] sm:$0xff]
      %v1499 = vld [vmem:[#allocation2 + $0xa8] sm:$0xff]
      %v1500 = vld [vmem:[#allocation2 + $0xb0] sm:$0xff]
      %v1501 = vld [vmem:[#allocation2 + $0xb8] sm:$0xff]
      %v1502 = vld [vmem:[#allocation2 + $0xc0] sm:$0xff]
      %v1503 = vld [vmem:[#allocation2 + $0xc8] sm:$0xff]
      %v1504 = vld [vmem:[#allocation2 + $0xd0] sm:$0xff]
      %v1505 = vld [vmem:[#allocation2 + $0xd8] sm:$0xff]
      %v1506 = vld [vmem:[#allocation2 + $0xe0] sm:$0xff]
      %v1507 = vld [vmem:[#allocation2 + $0xe8] sm:$0xff]
      %v1508 = vld [vmem:[#allocation2 + $0xf0] sm:$0xff]
      %v1509 = vld [vmem:[#allocation2 + $0xf8] sm:$0xff]
      %v1510 = vadd.f32 %v1478, %v1399
      %v1511 = vadd.f32 %v1479, %v1401
      %v1512 = vadd.f32 %v1480, %v1404
      %v1513 = vadd.f32 %v1481, %v1406
      %v1514 = vadd.f32 %v1482, %v1409
      %v1515 = vadd.f32 %v1483, %v1411
      %v1516 = vadd.f32 %v1484, %v1414
      %v1517 = vadd.f32 %v1485, %v1416
      %v1518 = vadd.f32 %v1486, %v1419
      %v1519 = vadd.f32 %v1487, %v1421
      %v1520 = vadd.f32 %v1488, %v1424
      %v1521 = vadd.f32 %v1489, %v1426
      %v1522 = vadd.f32 %v1490, %v1429
      %v1523 = vadd.f32 %v1491, %v1431
      %v1524 = vadd.f32 %v1492, %v1434
      %v1525 = vadd.f32 %v1493, %v1436
      %v1526 = vadd.f32 %v1494, %v1439
      %v1527 = vadd.f32 %v1495, %v1441
      %v1528 = vadd.f32 %v1496, %v1444
      %v1529 = vadd.f32 %v1497, %v1446
      %v1530 = vadd.f32 %v1498, %v1449
      %v1531 = vadd.f32 %v1499, %v1451
      %v1532 = vadd.f32 %v1500, %v1454
      %v1533 = vadd.f32 %v1501, %v1456
      %v1534 = vadd.f32 %v1502, %v1459
      %v1535 = vadd.f32 %v1503, %v1461
      %v1536 = vadd.f32 %v1504, %v1464
      %v1537 = vadd.f32 %v1505, %v1466
      %v1538 = vadd.f32 %v1506, %v1469
      %v1539 = vadd.f32 %v1507, %v1471
      %v1540 = vadd.f32 %v1508, %v1474
      %v1541 = vadd.f32 %v1509, %v1476
      %1542 = vst.msk [vmem:[#allocation2] sm:$0xff] %vm394, %v1510
      %1543 = vst.msk [vmem:[#allocation2 + $0x8] sm:$0xff] %vm394, %v1511
      %1544 = vst.msk [vmem:[#allocation2 + $0x10] sm:$0xff] %vm394, %v1512
      %1545 = vst.msk [vmem:[#allocation2 + $0x18] sm:$0xff] %vm394, %v1513
      %1546 = vst.msk [vmem:[#allocation2 + $0x20] sm:$0xff] %vm394, %v1514
      %1547 = vst.msk [vmem:[#allocation2 + $0x28] sm:$0xff] %vm394, %v1515
      %1548 = vst.msk [vmem:[#allocation2 + $0x30] sm:$0xff] %vm394, %v1516
      %1549 = vst.msk [vmem:[#allocation2 + $0x38] sm:$0xff] %vm394, %v1517
      %1550 = vst.msk [vmem:[#allocation2 + $0x40] sm:$0xff] %vm394, %v1518
      %1551 = vst.msk [vmem:[#allocation2 + $0x48] sm:$0xff] %vm394, %v1519
      %1552 = vst.msk [vmem:[#allocation2 + $0x50] sm:$0xff] %vm394, %v1520
      %1553 = vst.msk [vmem:[#allocation2 + $0x58] sm:$0xff] %vm394, %v1521
      %1554 = vst.msk [vmem:[#allocation2 + $0x60] sm:$0xff] %vm394, %v1522
      %1555 = vst.msk [vmem:[#allocation2 + $0x68] sm:$0xff] %vm394, %v1523
      %1556 = vst.msk [vmem:[#allocation2 + $0x70] sm:$0xff] %vm394, %v1524
      %1557 = vst.msk [vmem:[#allocation2 + $0x78] sm:$0xff] %vm394, %v1525
      %1558 = vst.msk [vmem:[#allocation2 + $0x80] sm:$0xff] %vm394, %v1526
      %1559 = vst.msk [vmem:[#allocation2 + $0x88] sm:$0xff] %vm394, %v1527
      %1560 = vst.msk [vmem:[#allocation2 + $0x90] sm:$0xff] %vm394, %v1528
      %1561 = vst.msk [vmem:[#allocation2 + $0x98] sm:$0xff] %vm394, %v1529
      %1562 = vst.msk [vmem:[#allocation2 + $0xa0] sm:$0xff] %vm394, %v1530
      %1563 = vst.msk [vmem:[#allocation2 + $0xa8] sm:$0xff] %vm394, %v1531
      %1564 = vst.msk [vmem:[#allocation2 + $0xb0] sm:$0xff] %vm394, %v1532
      %1565 = vst.msk [vmem:[#allocation2 + $0xb8] sm:$0xff] %vm394, %v1533
      %1566 = vst.msk [vmem:[#allocation2 + $0xc0] sm:$0xff] %vm394, %v1534
      %1567 = vst.msk [vmem:[#allocation2 + $0xc8] sm:$0xff] %vm394, %v1535
      %1568 = vst.msk [vmem:[#allocation2 + $0xd0] sm:$0xff] %vm394, %v1536
      %1569 = vst.msk [vmem:[#allocation2 + $0xd8] sm:$0xff] %vm394, %v1537
      %1570 = vst.msk [vmem:[#allocation2 + $0xe0] sm:$0xff] %vm394, %v1538
      %1571 = vst.msk [vmem:[#allocation2 + $0xe8] sm:$0xff] %vm394, %v1539
      %1572 = vst.msk [vmem:[#allocation2 + $0xf0] sm:$0xff] %vm394, %v1540
      %1573 = vst.msk [vmem:[#allocation2 + $0xf8] sm:$0xff] %vm394, %v1541
      %v1574 = vld [vmem:[%s1001 + $0x2] sm:$0xff]
      %v1575 = vld [vmem:[%s1001 + $0xa] sm:$0xff]
      %v1576 = vld [vmem:[%s1001 + $0x12] sm:$0xff]
      %v1577 = vld [vmem:[%s1001 + $0x1a] sm:$0xff]
      %v1578 = vld [vmem:[%s1001 + $0x2a] sm:$0xff]
      %v1579 = vld [vmem:[%s1001 + $0x32] sm:$0xff]
      %v1580 = vld [vmem:[%s1001 + $0x3a] sm:$0xff]
      %v1581 = vld [vmem:[%s1001 + $0x42] sm:$0xff]
      %v1582 = vld [vmem:[%s1001 + $0x52] sm:$0xff]
      %v1583 = vld [vmem:[%s1001 + $0x5a] sm:$0xff]
      %v1584 = vld [vmem:[%s1001 + $0x62] sm:$0xff]
      %v1585 = vld [vmem:[%s1001 + $0x6a] sm:$0xff]
      %v1586 = vld [vmem:[%s1001 + $0x7a] sm:$0xff]
      %v1587 = vld [vmem:[%s1001 + $0x82] sm:$0xff]
      %v1588 = vld [vmem:[%s1001 + $0x8a] sm:$0xff]
      %v1589 = vld [vmem:[%s1001 + $0x92] sm:$0xff]
      %v1590 = vld [vmem:[%s1001 + $0xa2] sm:$0xff]
      %v1591 = vld [vmem:[%s1001 + $0xaa] sm:$0xff]
      %v1592 = vld [vmem:[%s1001 + $0xb2] sm:$0xff]
      %v1593 = vld [vmem:[%s1001 + $0xba] sm:$0xff]
      %v1594 = vld [vmem:[%s1001 + $0xca] sm:$0xff]
      %v1595 = vld [vmem:[%s1001 + $0xd2] sm:$0xff]
      %v1596 = vld [vmem:[%s1001 + $0xda] sm:$0xff]
      %v1597 = vld [vmem:[%s1001 + $0xe2] sm:$0xff]
      %v1598 = vld [vmem:[%s1001 + $0xf2] sm:$0xff]
      %v1599 = vld [vmem:[%s1001 + $0xfa] sm:$0xff]
      %v1600 = vld [vmem:[%s1001 + $0x102] sm:$0xff]
      %v1601 = vld [vmem:[%s1001 + $0x10a] sm:$0xff]
      %v1602 = vld [vmem:[%s1001 + $0x11a] sm:$0xff]
      %v1603 = vld [vmem:[%s1001 + $0x122] sm:$0xff]
      %v1604 = vld [vmem:[%s1001 + $0x12a] sm:$0xff]
      %v1605 = vld [vmem:[%s1001 + $0x132] sm:$0xff]
      %v1606 = vpack.c.bf16 %v1575, %v1574
      %v1607 = vpack.c.bf16 %v1577, %v1576
      %v1608 = vpack.c.bf16 %v1579, %v1578
      %v1609 = vpack.c.bf16 %v1581, %v1580
      %v1610 = vpack.c.bf16 %v1583, %v1582
      %v1611 = vpack.c.bf16 %v1585, %v1584
      %v1612 = vpack.c.bf16 %v1587, %v1586
      %v1613 = vpack.c.bf16 %v1589, %v1588
      %v1614 = vpack.c.bf16 %v1591, %v1590
      %v1615 = vpack.c.bf16 %v1593, %v1592
      %v1616 = vpack.c.bf16 %v1595, %v1594
      %v1617 = vpack.c.bf16 %v1597, %v1596
      %v1618 = vpack.c.bf16 %v1599, %v1598
      %v1619 = vpack.c.bf16 %v1601, %v1600
      %v1620 = vpack.c.bf16 %v1603, %v1602
      %v1621 = vpack.c.bf16 %v1605, %v1604
      %s1622 = scalar_lea.vmem %s1, 10
      %v1623 = vld [vmem:[%s1622] sm:$0x3]
      %v1625 = vsel %vm249, %v1606, 0
      %v1628 = vsel %vm249, %v1607, 0
      %v1631 = vsel %vm249, %v1608, 0
      %v1634 = vsel %vm249, %v1609, 0
      %v1637 = vsel %vm249, %v1610, 0
      %v1640 = vsel %vm249, %v1611, 0
      %v1643 = vsel %vm249, %v1612, 0
      %v1646 = vsel %vm249, %v1613, 0
      %v1649 = vsel %vm249, %v1614, 0
      %v1652 = vsel %vm249, %v1615, 0
      %v1655 = vsel %vm249, %v1616, 0
      %v1658 = vsel %vm249, %v1617, 0
      %v1661 = vsel %vm249, %v1618, 0
      %v1664 = vsel %vm249, %v1619, 0
      %v1667 = vsel %vm249, %v1620, 0
      %v1670 = vsel %vm249, %v1621, 0
      %v1673 = vand.u32 %v1623, %v301
      %1675 = vmatpush.bf16.msra.mxu0 0
      %1676 = vmatpush.bf16.msra.mxu0 0
      %1677 = vmatpush.bf16.msra.mxu0 0
      %1678 = vmatpush.bf16.msra.mxu0 0
      %1679 = vmatpush.bf16.msra.mxu0 0
      %1680 = vmatpush.bf16.msra.mxu0 0
      %1681 = vmatpush.bf16.msra.mxu0 0
      %1682 = vmatpush.bf16.msra.mxu0 %v1673
      %1683 = vmatmul.bf16.gmra.mxu0 %v1625
      %v1684 = vpop.f32.mrf.mxu0
      %v1685 = vadd.f32 0.0, %v1684
      %v1686 = vpop.f32.mrf.mxu0
      %v1687 = vadd.f32 0.0, %v1686
      %1688 = vmatmul.bf16.gmra.mxu0 %v1628
      %v1689 = vpop.f32.mrf.mxu0
      %v1690 = vadd.f32 0.0, %v1689
      %v1691 = vpop.f32.mrf.mxu0
      %v1692 = vadd.f32 0.0, %v1691
      %1693 = vmatmul.bf16.gmra.mxu0 %v1631
      %v1694 = vpop.f32.mrf.mxu0
      %v1695 = vadd.f32 0.0, %v1694
      %v1696 = vpop.f32.mrf.mxu0
      %v1697 = vadd.f32 0.0, %v1696
      %1698 = vmatmul.bf16.gmra.mxu0 %v1634
      %v1699 = vpop.f32.mrf.mxu0
      %v1700 = vadd.f32 0.0, %v1699
      %v1701 = vpop.f32.mrf.mxu0
      %v1702 = vadd.f32 0.0, %v1701
      %1703 = vmatmul.bf16.gmra.mxu0 %v1637
      %v1704 = vpop.f32.mrf.mxu0
      %v1705 = vadd.f32 0.0, %v1704
      %v1706 = vpop.f32.mrf.mxu0
      %v1707 = vadd.f32 0.0, %v1706
      %1708 = vmatmul.bf16.gmra.mxu0 %v1640
      %v1709 = vpop.f32.mrf.mxu0
      %v1710 = vadd.f32 0.0, %v1709
      %v1711 = vpop.f32.mrf.mxu0
      %v1712 = vadd.f32 0.0, %v1711
      %1713 = vmatmul.bf16.gmra.mxu0 %v1643
      %v1714 = vpop.f32.mrf.mxu0
      %v1715 = vadd.f32 0.0, %v1714
      %v1716 = vpop.f32.mrf.mxu0
      %v1717 = vadd.f32 0.0, %v1716
      %1718 = vmatmul.bf16.gmra.mxu0 %v1646
      %v1719 = vpop.f32.mrf.mxu0
      %v1720 = vadd.f32 0.0, %v1719
      %v1721 = vpop.f32.mrf.mxu0
      %v1722 = vadd.f32 0.0, %v1721
      %1723 = vmatmul.bf16.gmra.mxu0 %v1649
      %v1724 = vpop.f32.mrf.mxu0
      %v1725 = vadd.f32 0.0, %v1724
      %v1726 = vpop.f32.mrf.mxu0
      %v1727 = vadd.f32 0.0, %v1726
      %1728 = vmatmul.bf16.gmra.mxu0 %v1652
      %v1729 = vpop.f32.mrf.mxu0
      %v1730 = vadd.f32 0.0, %v1729
      %v1731 = vpop.f32.mrf.mxu0
      %v1732 = vadd.f32 0.0, %v1731
      %1733 = vmatmul.bf16.gmra.mxu0 %v1655
      %v1734 = vpop.f32.mrf.mxu0
      %v1735 = vadd.f32 0.0, %v1734
      %v1736 = vpop.f32.mrf.mxu0
      %v1737 = vadd.f32 0.0, %v1736
      %1738 = vmatmul.bf16.gmra.mxu0 %v1658
      %v1739 = vpop.f32.mrf.mxu0
      %v1740 = vadd.f32 0.0, %v1739
      %v1741 = vpop.f32.mrf.mxu0
      %v1742 = vadd.f32 0.0, %v1741
      %1743 = vmatmul.bf16.gmra.mxu0 %v1661
      %v1744 = vpop.f32.mrf.mxu0
      %v1745 = vadd.f32 0.0, %v1744
      %v1746 = vpop.f32.mrf.mxu0
      %v1747 = vadd.f32 0.0, %v1746
      %1748 = vmatmul.bf16.gmra.mxu0 %v1664
      %v1749 = vpop.f32.mrf.mxu0
      %v1750 = vadd.f32 0.0, %v1749
      %v1751 = vpop.f32.mrf.mxu0
      %v1752 = vadd.f32 0.0, %v1751
      %1753 = vmatmul.bf16.gmra.mxu0 %v1667
      %v1754 = vpop.f32.mrf.mxu0
      %v1755 = vadd.f32 0.0, %v1754
      %v1756 = vpop.f32.mrf.mxu0
      %v1757 = vadd.f32 0.0, %v1756
      %1758 = vmatmul.bf16.gmra.mxu0 %v1670
      %v1759 = vpop.f32.mrf.mxu0
      %v1760 = vadd.f32 0.0, %v1759
      %v1761 = vpop.f32.mrf.mxu0
      %v1762 = vadd.f32 0.0, %v1761
      %1763 = vdwg.mxu0
      %v1764 = vld [vmem:[#allocation2] sm:$0xff]
      %v1765 = vld [vmem:[#allocation2 + $0x8] sm:$0xff]
      %v1766 = vld [vmem:[#allocation2 + $0x10] sm:$0xff]
      %v1767 = vld [vmem:[#allocation2 + $0x18] sm:$0xff]
      %v1768 = vld [vmem:[#allocation2 + $0x20] sm:$0xff]
      %v1769 = vld [vmem:[#allocation2 + $0x28] sm:$0xff]
      %v1770 = vld [vmem:[#allocation2 + $0x30] sm:$0xff]
      %v1771 = vld [vmem:[#allocation2 + $0x38] sm:$0xff]
      %v1772 = vld [vmem:[#allocation2 + $0x40] sm:$0xff]
      %v1773 = vld [vmem:[#allocation2 + $0x48] sm:$0xff]
      %v1774 = vld [vmem:[#allocation2 + $0x50] sm:$0xff]
      %v1775 = vld [vmem:[#allocation2 + $0x58] sm:$0xff]
      %v1776 = vld [vmem:[#allocation2 + $0x60] sm:$0xff]
      %v1777 = vld [vmem:[#allocation2 + $0x68] sm:$0xff]
      %v1778 = vld [vmem:[#allocation2 + $0x70] sm:$0xff]
      %v1779 = vld [vmem:[#allocation2 + $0x78] sm:$0xff]
      %v1780 = vld [vmem:[#allocation2 + $0x80] sm:$0xff]
      %v1781 = vld [vmem:[#allocation2 + $0x88] sm:$0xff]
      %v1782 = vld [vmem:[#allocation2 + $0x90] sm:$0xff]
      %v1783 = vld [vmem:[#allocation2 + $0x98] sm:$0xff]
      %v1784 = vld [vmem:[#allocation2 + $0xa0] sm:$0xff]
      %v1785 = vld [vmem:[#allocation2 + $0xa8] sm:$0xff]
      %v1786 = vld [vmem:[#allocation2 + $0xb0] sm:$0xff]
      %v1787 = vld [vmem:[#allocation2 + $0xb8] sm:$0xff]
      %v1788 = vld [vmem:[#allocation2 + $0xc0] sm:$0xff]
      %v1789 = vld [vmem:[#allocation2 + $0xc8] sm:$0xff]
      %v1790 = vld [vmem:[#allocation2 + $0xd0] sm:$0xff]
      %v1791 = vld [vmem:[#allocation2 + $0xd8] sm:$0xff]
      %v1792 = vld [vmem:[#allocation2 + $0xe0] sm:$0xff]
      %v1793 = vld [vmem:[#allocation2 + $0xe8] sm:$0xff]
      %v1794 = vld [vmem:[#allocation2 + $0xf0] sm:$0xff]
      %v1795 = vld [vmem:[#allocation2 + $0xf8] sm:$0xff]
      %v1796 = vadd.f32 %v1764, %v1685
      %v1797 = vadd.f32 %v1765, %v1687
      %v1798 = vadd.f32 %v1766, %v1690
      %v1799 = vadd.f32 %v1767, %v1692
      %v1800 = vadd.f32 %v1768, %v1695
      %v1801 = vadd.f32 %v1769, %v1697
      %v1802 = vadd.f32 %v1770, %v1700
      %v1803 = vadd.f32 %v1771, %v1702
      %v1804 = vadd.f32 %v1772, %v1705
      %v1805 = vadd.f32 %v1773, %v1707
      %v1806 = vadd.f32 %v1774, %v1710
      %v1807 = vadd.f32 %v1775, %v1712
      %v1808 = vadd.f32 %v1776, %v1715
      %v1809 = vadd.f32 %v1777, %v1717
      %v1810 = vadd.f32 %v1778, %v1720
      %v1811 = vadd.f32 %v1779, %v1722
      %v1812 = vadd.f32 %v1780, %v1725
      %v1813 = vadd.f32 %v1781, %v1727
      %v1814 = vadd.f32 %v1782, %v1730
      %v1815 = vadd.f32 %v1783, %v1732
      %v1816 = vadd.f32 %v1784, %v1735
      %v1817 = vadd.f32 %v1785, %v1737
      %v1818 = vadd.f32 %v1786, %v1740
      %v1819 = vadd.f32 %v1787, %v1742
      %v1820 = vadd.f32 %v1788, %v1745
      %v1821 = vadd.f32 %v1789, %v1747
      %v1822 = vadd.f32 %v1790, %v1750
      %v1823 = vadd.f32 %v1791, %v1752
      %v1824 = vadd.f32 %v1792, %v1755
      %v1825 = vadd.f32 %v1793, %v1757
      %v1826 = vadd.f32 %v1794, %v1760
      %v1827 = vadd.f32 %v1795, %v1762
      %1828 = vst.msk [vmem:[#allocation2] sm:$0xff] %vm394, %v1796
      %1829 = vst.msk [vmem:[#allocation2 + $0x8] sm:$0xff] %vm394, %v1797
      %1830 = vst.msk [vmem:[#allocation2 + $0x10] sm:$0xff] %vm394, %v1798
      %1831 = vst.msk [vmem:[#allocation2 + $0x18] sm:$0xff] %vm394, %v1799
      %1832 = vst.msk [vmem:[#allocation2 + $0x20] sm:$0xff] %vm394, %v1800
      %1833 = vst.msk [vmem:[#allocation2 + $0x28] sm:$0xff] %vm394, %v1801
      %1834 = vst.msk [vmem:[#allocation2 + $0x30] sm:$0xff] %vm394, %v1802
      %1835 = vst.msk [vmem:[#allocation2 + $0x38] sm:$0xff] %vm394, %v1803
      %1836 = vst.msk [vmem:[#allocation2 + $0x40] sm:$0xff] %vm394, %v1804
      %1837 = vst.msk [vmem:[#allocation2 + $0x48] sm:$0xff] %vm394, %v1805
      %1838 = vst.msk [vmem:[#allocation2 + $0x50] sm:$0xff] %vm394, %v1806
      %1839 = vst.msk [vmem:[#allocation2 + $0x58] sm:$0xff] %vm394, %v1807
      %1840 = vst.msk [vmem:[#allocation2 + $0x60] sm:$0xff] %vm394, %v1808
      %1841 = vst.msk [vmem:[#allocation2 + $0x68] sm:$0xff] %vm394, %v1809
      %1842 = vst.msk [vmem:[#allocation2 + $0x70] sm:$0xff] %vm394, %v1810
      %1843 = vst.msk [vmem:[#allocation2 + $0x78] sm:$0xff] %vm394, %v1811
      %1844 = vst.msk [vmem:[#allocation2 + $0x80] sm:$0xff] %vm394, %v1812
      %1845 = vst.msk [vmem:[#allocation2 + $0x88] sm:$0xff] %vm394, %v1813
      %1846 = vst.msk [vmem:[#allocation2 + $0x90] sm:$0xff] %vm394, %v1814
      %1847 = vst.msk [vmem:[#allocation2 + $0x98] sm:$0xff] %vm394, %v1815
      %1848 = vst.msk [vmem:[#allocation2 + $0xa0] sm:$0xff] %vm394, %v1816
      %1849 = vst.msk [vmem:[#allocation2 + $0xa8] sm:$0xff] %vm394, %v1817
      %1850 = vst.msk [vmem:[#allocation2 + $0xb0] sm:$0xff] %vm394, %v1818
      %1851 = vst.msk [vmem:[#allocation2 + $0xb8] sm:$0xff] %vm394, %v1819
      %1852 = vst.msk [vmem:[#allocation2 + $0xc0] sm:$0xff] %vm394, %v1820
      %1853 = vst.msk [vmem:[#allocation2 + $0xc8] sm:$0xff] %vm394, %v1821
      %1854 = vst.msk [vmem:[#allocation2 + $0xd0] sm:$0xff] %vm394, %v1822
      %1855 = vst.msk [vmem:[#allocation2 + $0xd8] sm:$0xff] %vm394, %v1823
      %1856 = vst.msk [vmem:[#allocation2 + $0xe0] sm:$0xff] %vm394, %v1824
      %1857 = vst.msk [vmem:[#allocation2 + $0xe8] sm:$0xff] %vm394, %v1825
      %1858 = vst.msk [vmem:[#allocation2 + $0xf0] sm:$0xff] %vm394, %v1826
      %1859 = vst.msk [vmem:[#allocation2 + $0xf8] sm:$0xff] %vm394, %v1827
      %s1860 = sadd.s32 %s197, 2
      %s1861 = smul.u32 %s1860, 40
      %s1862 = scalar_lea.vmem %s184, %s1861
      %v1863 = vld [vmem:[%s1862] sm:$0xff]
      %v1864 = vld [vmem:[%s1862 + $0x8] sm:$0xff]
      %v1865 = vld [vmem:[%s1862 + $0x10] sm:$0xff]
      %v1866 = vld [vmem:[%s1862 + $0x18] sm:$0xff]
      %v1867 = vld [vmem:[%s1862 + $0x28] sm:$0xff]
      %v1868 = vld [vmem:[%s1862 + $0x30] sm:$0xff]
      %v1869 = vld [vmem:[%s1862 + $0x38] sm:$0xff]
      %v1870 = vld [vmem:[%s1862 + $0x40] sm:$0xff]
      %v1871 = vld [vmem:[%s1862 + $0x50] sm:$0xff]
      %v1872 = vld [vmem:[%s1862 + $0x58] sm:$0xff]
      %v1873 = vld [vmem:[%s1862 + $0x60] sm:$0xff]
      %v1874 = vld [vmem:[%s1862 + $0x68] sm:$0xff]
      %v1875 = vld [vmem:[%s1862 + $0x78] sm:$0xff]
      %v1876 = vld [vmem:[%s1862 + $0x80] sm:$0xff]
      %v1877 = vld [vmem:[%s1862 + $0x88] sm:$0xff]
      %v1878 = vld [vmem:[%s1862 + $0x90] sm:$0xff]
      %v1879 = vld [vmem:[%s1862 + $0xa0] sm:$0xff]
      %v1880 = vld [vmem:[%s1862 + $0xa8] sm:$0xff]
      %v1881 = vld [vmem:[%s1862 + $0xb0] sm:$0xff]
      %v1882 = vld [vmem:[%s1862 + $0xb8] sm:$0xff]
      %v1883 = vld [vmem:[%s1862 + $0xc8] sm:$0xff]
      %v1884 = vld [vmem:[%s1862 + $0xd0] sm:$0xff]
      %v1885 = vld [vmem:[%s1862 + $0xd8] sm:$0xff]
      %v1886 = vld [vmem:[%s1862 + $0xe0] sm:$0xff]
      %v1887 = vld [vmem:[%s1862 + $0xf0] sm:$0xff]
      %v1888 = vld [vmem:[%s1862 + $0xf8] sm:$0xff]
      %v1889 = vld [vmem:[%s1862 + $0x100] sm:$0xff]
      %v1890 = vld [vmem:[%s1862 + $0x108] sm:$0xff]
      %v1891 = vld [vmem:[%s1862 + $0x118] sm:$0xff]
      %v1892 = vld [vmem:[%s1862 + $0x120] sm:$0xff]
      %v1893 = vld [vmem:[%s1862 + $0x128] sm:$0xff]
      %v1894 = vld [vmem:[%s1862 + $0x130] sm:$0xff]
      %v1895 = vpack.c.bf16 %v1864, %v1863
      %v1896 = vpack.c.bf16 %v1866, %v1865
      %v1897 = vpack.c.bf16 %v1868, %v1867
      %v1898 = vpack.c.bf16 %v1870, %v1869
      %v1899 = vpack.c.bf16 %v1872, %v1871
      %v1900 = vpack.c.bf16 %v1874, %v1873
      %v1901 = vpack.c.bf16 %v1876, %v1875
      %v1902 = vpack.c.bf16 %v1878, %v1877
      %v1903 = vpack.c.bf16 %v1880, %v1879
      %v1904 = vpack.c.bf16 %v1882, %v1881
      %v1905 = vpack.c.bf16 %v1884, %v1883
      %v1906 = vpack.c.bf16 %v1886, %v1885
      %v1907 = vpack.c.bf16 %v1888, %v1887
      %v1908 = vpack.c.bf16 %v1890, %v1889
      %v1909 = vpack.c.bf16 %v1892, %v1891
      %v1910 = vpack.c.bf16 %v1894, %v1893
      %s1911 = scalar_lea.vmem %s1, 12
      %v1912 = vld [vmem:[%s1911] sm:$0x3]
      %v1914 = vsel %vm249, %v1895, 0
      %v1917 = vsel %vm249, %v1896, 0
      %v1920 = vsel %vm249, %v1897, 0
      %v1923 = vsel %vm249, %v1898, 0
      %v1926 = vsel %vm249, %v1899, 0
      %v1929 = vsel %vm249, %v1900, 0
      %v1932 = vsel %vm249, %v1901, 0
      %v1935 = vsel %vm249, %v1902, 0
      %v1938 = vsel %vm249, %v1903, 0
      %v1941 = vsel %vm249, %v1904, 0
      %v1944 = vsel %vm249, %v1905, 0
      %v1947 = vsel %vm249, %v1906, 0
      %v1950 = vsel %vm249, %v1907, 0
      %v1953 = vsel %vm249, %v1908, 0
      %v1956 = vsel %vm249, %v1909, 0
      %v1959 = vsel %vm249, %v1910, 0
      %v1962 = vand.u32 %v1912, %v301
      %1964 = vmatpush.bf16.msra.mxu0 0
      %1965 = vmatpush.bf16.msra.mxu0 0
      %1966 = vmatpush.bf16.msra.mxu0 0
      %1967 = vmatpush.bf16.msra.mxu0 0
      %1968 = vmatpush.bf16.msra.mxu0 0
      %1969 = vmatpush.bf16.msra.mxu0 0
      %1970 = vmatpush.bf16.msra.mxu0 0
      %1971 = vmatpush.bf16.msra.mxu0 %v1962
      %1972 = vmatmul.bf16.gmra.mxu0 %v1914
      %v1973 = vpop.f32.mrf.mxu0
      %v1974 = vadd.f32 0.0, %v1973
      %v1975 = vpop.f32.mrf.mxu0
      %v1976 = vadd.f32 0.0, %v1975
      %1977 = vmatmul.bf16.gmra.mxu0 %v1917
      %v1978 = vpop.f32.mrf.mxu0
      %v1979 = vadd.f32 0.0, %v1978
      %v1980 = vpop.f32.mrf.mxu0
      %v1981 = vadd.f32 0.0, %v1980
      %1982 = vmatmul.bf16.gmra.mxu0 %v1920
      %v1983 = vpop.f32.mrf.mxu0
      %v1984 = vadd.f32 0.0, %v1983
      %v1985 = vpop.f32.mrf.mxu0
      %v1986 = vadd.f32 0.0, %v1985
      %1987 = vmatmul.bf16.gmra.mxu0 %v1923
      %v1988 = vpop.f32.mrf.mxu0
      %v1989 = vadd.f32 0.0, %v1988
      %v1990 = vpop.f32.mrf.mxu0
      %v1991 = vadd.f32 0.0, %v1990
      %1992 = vmatmul.bf16.gmra.mxu0 %v1926
      %v1993 = vpop.f32.mrf.mxu0
      %v1994 = vadd.f32 0.0, %v1993
      %v1995 = vpop.f32.mrf.mxu0
      %v1996 = vadd.f32 0.0, %v1995
      %1997 = vmatmul.bf16.gmra.mxu0 %v1929
      %v1998 = vpop.f32.mrf.mxu0
      %v1999 = vadd.f32 0.0, %v1998
      %v2000 = vpop.f32.mrf.mxu0
      %v2001 = vadd.f32 0.0, %v2000
      %2002 = vmatmul.bf16.gmra.mxu0 %v1932
      %v2003 = vpop.f32.mrf.mxu0
      %v2004 = vadd.f32 0.0, %v2003
      %v2005 = vpop.f32.mrf.mxu0
      %v2006 = vadd.f32 0.0, %v2005
      %2007 = vmatmul.bf16.gmra.mxu0 %v1935
      %v2008 = vpop.f32.mrf.mxu0
      %v2009 = vadd.f32 0.0, %v2008
      %v2010 = vpop.f32.mrf.mxu0
      %v2011 = vadd.f32 0.0, %v2010
      %2012 = vmatmul.bf16.gmra.mxu0 %v1938
      %v2013 = vpop.f32.mrf.mxu0
      %v2014 = vadd.f32 0.0, %v2013
      %v2015 = vpop.f32.mrf.mxu0
      %v2016 = vadd.f32 0.0, %v2015
      %2017 = vmatmul.bf16.gmra.mxu0 %v1941
      %v2018 = vpop.f32.mrf.mxu0
      %v2019 = vadd.f32 0.0, %v2018
      %v2020 = vpop.f32.mrf.mxu0
      %v2021 = vadd.f32 0.0, %v2020
      %2022 = vmatmul.bf16.gmra.mxu0 %v1944
      %v2023 = vpop.f32.mrf.mxu0
      %v2024 = vadd.f32 0.0, %v2023
      %v2025 = vpop.f32.mrf.mxu0
      %v2026 = vadd.f32 0.0, %v2025
      %2027 = vmatmul.bf16.gmra.mxu0 %v1947
      %v2028 = vpop.f32.mrf.mxu0
      %v2029 = vadd.f32 0.0, %v2028
      %v2030 = vpop.f32.mrf.mxu0
      %v2031 = vadd.f32 0.0, %v2030
      %2032 = vmatmul.bf16.gmra.mxu0 %v1950
      %v2033 = vpop.f32.mrf.mxu0
      %v2034 = vadd.f32 0.0, %v2033
      %v2035 = vpop.f32.mrf.mxu0
      %v2036 = vadd.f32 0.0, %v2035
      %2037 = vmatmul.bf16.gmra.mxu0 %v1953
      %v2038 = vpop.f32.mrf.mxu0
      %v2039 = vadd.f32 0.0, %v2038
      %v2040 = vpop.f32.mrf.mxu0
      %v2041 = vadd.f32 0.0, %v2040
      %2042 = vmatmul.bf16.gmra.mxu0 %v1956
      %v2043 = vpop.f32.mrf.mxu0
      %v2044 = vadd.f32 0.0, %v2043
      %v2045 = vpop.f32.mrf.mxu0
      %v2046 = vadd.f32 0.0, %v2045
      %2047 = vmatmul.bf16.gmra.mxu0 %v1959
      %v2048 = vpop.f32.mrf.mxu0
      %v2049 = vadd.f32 0.0, %v2048
      %v2050 = vpop.f32.mrf.mxu0
      %v2051 = vadd.f32 0.0, %v2050
      %2052 = vdwg.mxu0
      %v2053 = vld [vmem:[#allocation2] sm:$0xff]
      %v2054 = vld [vmem:[#allocation2 + $0x8] sm:$0xff]
      %v2055 = vld [vmem:[#allocation2 + $0x10] sm:$0xff]
      %v2056 = vld [vmem:[#allocation2 + $0x18] sm:$0xff]
      %v2057 = vld [vmem:[#allocation2 + $0x20] sm:$0xff]
      %v2058 = vld [vmem:[#allocation2 + $0x28] sm:$0xff]
      %v2059 = vld [vmem:[#allocation2 + $0x30] sm:$0xff]
      %v2060 = vld [vmem:[#allocation2 + $0x38] sm:$0xff]
      %v2061 = vld [vmem:[#allocation2 + $0x40] sm:$0xff]
      %v2062 = vld [vmem:[#allocation2 + $0x48] sm:$0xff]
      %v2063 = vld [vmem:[#allocation2 + $0x50] sm:$0xff]
      %v2064 = vld [vmem:[#allocation2 + $0x58] sm:$0xff]
      %v2065 = vld [vmem:[#allocation2 + $0x60] sm:$0xff]
      %v2066 = vld [vmem:[#allocation2 + $0x68] sm:$0xff]
      %v2067 = vld [vmem:[#allocation2 + $0x70] sm:$0xff]
      %v2068 = vld [vmem:[#allocation2 + $0x78] sm:$0xff]
      %v2069 = vld [vmem:[#allocation2 + $0x80] sm:$0xff]
      %v2070 = vld [vmem:[#allocation2 + $0x88] sm:$0xff]
      %v2071 = vld [vmem:[#allocation2 + $0x90] sm:$0xff]
      %v2072 = vld [vmem:[#allocation2 + $0x98] sm:$0xff]
      %v2073 = vld [vmem:[#allocation2 + $0xa0] sm:$0xff]
      %v2074 = vld [vmem:[#allocation2 + $0xa8] sm:$0xff]
      %v2075 = vld [vmem:[#allocation2 + $0xb0] sm:$0xff]
      %v2076 = vld [vmem:[#allocation2 + $0xb8] sm:$0xff]
      %v2077 = vld [vmem:[#allocation2 + $0xc0] sm:$0xff]
      %v2078 = vld [vmem:[#allocation2 + $0xc8] sm:$0xff]
      %v2079 = vld [vmem:[#allocation2 + $0xd0] sm:$0xff]
      %v2080 = vld [vmem:[#allocation2 + $0xd8] sm:$0xff]
      %v2081 = vld [vmem:[#allocation2 + $0xe0] sm:$0xff]
      %v2082 = vld [vmem:[#allocation2 + $0xe8] sm:$0xff]
      %v2083 = vld [vmem:[#allocation2 + $0xf0] sm:$0xff]
      %v2084 = vld [vmem:[#allocation2 + $0xf8] sm:$0xff]
      %v2085 = vadd.f32 %v2053, %v1974
      %v2086 = vadd.f32 %v2054, %v1976
      %v2087 = vadd.f32 %v2055, %v1979
      %v2088 = vadd.f32 %v2056, %v1981
      %v2089 = vadd.f32 %v2057, %v1984
      %v2090 = vadd.f32 %v2058, %v1986
      %v2091 = vadd.f32 %v2059, %v1989
      %v2092 = vadd.f32 %v2060, %v1991
      %v2093 = vadd.f32 %v2061, %v1994
      %v2094 = vadd.f32 %v2062, %v1996
      %v2095 = vadd.f32 %v2063, %v1999
      %v2096 = vadd.f32 %v2064, %v2001
      %v2097 = vadd.f32 %v2065, %v2004
      %v2098 = vadd.f32 %v2066, %v2006
      %v2099 = vadd.f32 %v2067, %v2009
      %v2100 = vadd.f32 %v2068, %v2011
      %v2101 = vadd.f32 %v2069, %v2014
      %v2102 = vadd.f32 %v2070, %v2016
      %v2103 = vadd.f32 %v2071, %v2019
      %v2104 = vadd.f32 %v2072, %v2021
      %v2105 = vadd.f32 %v2073, %v2024
      %v2106 = vadd.f32 %v2074, %v2026
      %v2107 = vadd.f32 %v2075, %v2029
      %v2108 = vadd.f32 %v2076, %v2031
      %v2109 = vadd.f32 %v2077, %v2034
      %v2110 = vadd.f32 %v2078, %v2036
      %v2111 = vadd.f32 %v2079, %v2039
      %v2112 = vadd.f32 %v2080, %v2041
      %v2113 = vadd.f32 %v2081, %v2044
      %v2114 = vadd.f32 %v2082, %v2046
      %v2115 = vadd.f32 %v2083, %v2049
      %v2116 = vadd.f32 %v2084, %v2051
      %2117 = vst.msk [vmem:[#allocation2] sm:$0xff] %vm394, %v2085
      %2118 = vst.msk [vmem:[#allocation2 + $0x8] sm:$0xff] %vm394, %v2086
      %2119 = vst.msk [vmem:[#allocation2 + $0x10] sm:$0xff] %vm394, %v2087
      %2120 = vst.msk [vmem:[#allocation2 + $0x18] sm:$0xff] %vm394, %v2088
      %2121 = vst.msk [vmem:[#allocation2 + $0x20] sm:$0xff] %vm394, %v2089
      %2122 = vst.msk [vmem:[#allocation2 + $0x28] sm:$0xff] %vm394, %v2090
      %2123 = vst.msk [vmem:[#allocation2 + $0x30] sm:$0xff] %vm394, %v2091
      %2124 = vst.msk [vmem:[#allocation2 + $0x38] sm:$0xff] %vm394, %v2092
      %2125 = vst.msk [vmem:[#allocation2 + $0x40] sm:$0xff] %vm394, %v2093
      %2126 = vst.msk [vmem:[#allocation2 + $0x48] sm:$0xff] %vm394, %v2094
      %2127 = vst.msk [vmem:[#allocation2 + $0x50] sm:$0xff] %vm394, %v2095
      %2128 = vst.msk [vmem:[#allocation2 + $0x58] sm:$0xff] %vm394, %v2096
      %2129 = vst.msk [vmem:[#allocation2 + $0x60] sm:$0xff] %vm394, %v2097
      %2130 = vst.msk [vmem:[#allocation2 + $0x68] sm:$0xff] %vm394, %v2098
      %2131 = vst.msk [vmem:[#allocation2 + $0x70] sm:$0xff] %vm394, %v2099
      %2132 = vst.msk [vmem:[#allocation2 + $0x78] sm:$0xff] %vm394, %v2100
      %2133 = vst.msk [vmem:[#allocation2 + $0x80] sm:$0xff] %vm394, %v2101
      %2134 = vst.msk [vmem:[#allocation2 + $0x88] sm:$0xff] %vm394, %v2102
      %2135 = vst.msk [vmem:[#allocation2 + $0x90] sm:$0xff] %vm394, %v2103
      %2136 = vst.msk [vmem:[#allocation2 + $0x98] sm:$0xff] %vm394, %v2104
      %2137 = vst.msk [vmem:[#allocation2 + $0xa0] sm:$0xff] %vm394, %v2105
      %2138 = vst.msk [vmem:[#allocation2 + $0xa8] sm:$0xff] %vm394, %v2106
      %2139 = vst.msk [vmem:[#allocation2 + $0xb0] sm:$0xff] %vm394, %v2107
      %2140 = vst.msk [vmem:[#allocation2 + $0xb8] sm:$0xff] %vm394, %v2108
      %2141 = vst.msk [vmem:[#allocation2 + $0xc0] sm:$0xff] %vm394, %v2109
      %2142 = vst.msk [vmem:[#allocation2 + $0xc8] sm:$0xff] %vm394, %v2110
      %2143 = vst.msk [vmem:[#allocation2 + $0xd0] sm:$0xff] %vm394, %v2111
      %2144 = vst.msk [vmem:[#allocation2 + $0xd8] sm:$0xff] %vm394, %v2112
      %2145 = vst.msk [vmem:[#allocation2 + $0xe0] sm:$0xff] %vm394, %v2113
      %2146 = vst.msk [vmem:[#allocation2 + $0xe8] sm:$0xff] %vm394, %v2114
      %2147 = vst.msk [vmem:[#allocation2 + $0xf0] sm:$0xff] %vm394, %v2115
      %2148 = vst.msk [vmem:[#allocation2 + $0xf8] sm:$0xff] %vm394, %v2116
      %v2149 = vld [vmem:[%s1862 + $0x1] sm:$0xff]
      %v2150 = vld [vmem:[%s1862 + $0x9] sm:$0xff]
      %v2151 = vld [vmem:[%s1862 + $0x11] sm:$0xff]
      %v2152 = vld [vmem:[%s1862 + $0x19] sm:$0xff]
      %v2153 = vld [vmem:[%s1862 + $0x29] sm:$0xff]
      %v2154 = vld [vmem:[%s1862 + $0x31] sm:$0xff]
      %v2155 = vld [vmem:[%s1862 + $0x39] sm:$0xff]
      %v2156 = vld [vmem:[%s1862 + $0x41] sm:$0xff]
      %v2157 = vld [vmem:[%s1862 + $0x51] sm:$0xff]
      %v2158 = vld [vmem:[%s1862 + $0x59] sm:$0xff]
      %v2159 = vld [vmem:[%s1862 + $0x61] sm:$0xff]
      %v2160 = vld [vmem:[%s1862 + $0x69] sm:$0xff]
      %v2161 = vld [vmem:[%s1862 + $0x79] sm:$0xff]
      %v2162 = vld [vmem:[%s1862 + $0x81] sm:$0xff]
      %v2163 = vld [vmem:[%s1862 + $0x89] sm:$0xff]
      %v2164 = vld [vmem:[%s1862 + $0x91] sm:$0xff]
      %v2165 = vld [vmem:[%s1862 + $0xa1] sm:$0xff]
      %v2166 = vld [vmem:[%s1862 + $0xa9] sm:$0xff]
      %v2167 = vld [vmem:[%s1862 + $0xb1] sm:$0xff]
      %v2168 = vld [vmem:[%s1862 + $0xb9] sm:$0xff]
      %v2169 = vld [vmem:[%s1862 + $0xc9] sm:$0xff]
      %v2170 = vld [vmem:[%s1862 + $0xd1] sm:$0xff]
      %v2171 = vld [vmem:[%s1862 + $0xd9] sm:$0xff]
      %v2172 = vld [vmem:[%s1862 + $0xe1] sm:$0xff]
      %v2173 = vld [vmem:[%s1862 + $0xf1] sm:$0xff]
      %v2174 = vld [vmem:[%s1862 + $0xf9] sm:$0xff]
      %v2175 = vld [vmem:[%s1862 + $0x101] sm:$0xff]
      %v2176 = vld [vmem:[%s1862 + $0x109] sm:$0xff]
      %v2177 = vld [vmem:[%s1862 + $0x119] sm:$0xff]
      %v2178 = vld [vmem:[%s1862 + $0x121] sm:$0xff]
      %v2179 = vld [vmem:[%s1862 + $0x129] sm:$0xff]
      %v2180 = vld [vmem:[%s1862 + $0x131] sm:$0xff]
      %v2181 = vpack.c.bf16 %v2150, %v2149
      %v2182 = vpack.c.bf16 %v2152, %v2151
      %v2183 = vpack.c.bf16 %v2154, %v2153
      %v2184 = vpack.c.bf16 %v2156, %v2155
      %v2185 = vpack.c.bf16 %v2158, %v2157
      %v2186 = vpack.c.bf16 %v2160, %v2159
      %v2187 = vpack.c.bf16 %v2162, %v2161
      %v2188 = vpack.c.bf16 %v2164, %v2163
      %v2189 = vpack.c.bf16 %v2166, %v2165
      %v2190 = vpack.c.bf16 %v2168, %v2167
      %v2191 = vpack.c.bf16 %v2170, %v2169
      %v2192 = vpack.c.bf16 %v2172, %v2171
      %v2193 = vpack.c.bf16 %v2174, %v2173
      %v2194 = vpack.c.bf16 %v2176, %v2175
      %v2195 = vpack.c.bf16 %v2178, %v2177
      %v2196 = vpack.c.bf16 %v2180, %v2179
      %s2197 = scalar_lea.vmem %s1, 14
      %v2198 = vld [vmem:[%s2197] sm:$0x3]
      %v2200 = vsel %vm249, %v2181, 0
      %v2203 = vsel %vm249, %v2182, 0
      %v2206 = vsel %vm249, %v2183, 0
      %v2209 = vsel %vm249, %v2184, 0
      %v2212 = vsel %vm249, %v2185, 0
      %v2215 = vsel %vm249, %v2186, 0
      %v2218 = vsel %vm249, %v2187, 0
      %v2221 = vsel %vm249, %v2188, 0
      %v2224 = vsel %vm249, %v2189, 0
      %v2227 = vsel %vm249, %v2190, 0
      %v2230 = vsel %vm249, %v2191, 0
      %v2233 = vsel %vm249, %v2192, 0
      %v2236 = vsel %vm249, %v2193, 0
      %v2239 = vsel %vm249, %v2194, 0
      %v2242 = vsel %vm249, %v2195, 0
      %v2245 = vsel %vm249, %v2196, 0
      %v2248 = vand.u32 %v2198, %v301
      %2250 = vmatpush.bf16.msra.mxu0 0
      %2251 = vmatpush.bf16.msra.mxu0 0
      %2252 = vmatpush.bf16.msra.mxu0 0
      %2253 = vmatpush.bf16.msra.mxu0 0
      %2254 = vmatpush.bf16.msra.mxu0 0
      %2255 = vmatpush.bf16.msra.mxu0 0
      %2256 = vmatpush.bf16.msra.mxu0 0
      %2257 = vmatpush.bf16.msra.mxu0 %v2248
      %2258 = vmatmul.bf16.gmra.mxu0 %v2200
      %v2259 = vpop.f32.mrf.mxu0
      %v2260 = vadd.f32 0.0, %v2259
      %v2261 = vpop.f32.mrf.mxu0
      %v2262 = vadd.f32 0.0, %v2261
      %2263 = vmatmul.bf16.gmra.mxu0 %v2203
      %v2264 = vpop.f32.mrf.mxu0
      %v2265 = vadd.f32 0.0, %v2264
      %v2266 = vpop.f32.mrf.mxu0
      %v2267 = vadd.f32 0.0, %v2266
      %2268 = vmatmul.bf16.gmra.mxu0 %v2206
      %v2269 = vpop.f32.mrf.mxu0
      %v2270 = vadd.f32 0.0, %v2269
      %v2271 = vpop.f32.mrf.mxu0
      %v2272 = vadd.f32 0.0, %v2271
      %2273 = vmatmul.bf16.gmra.mxu0 %v2209
      %v2274 = vpop.f32.mrf.mxu0
      %v2275 = vadd.f32 0.0, %v2274
      %v2276 = vpop.f32.mrf.mxu0
      %v2277 = vadd.f32 0.0, %v2276
      %2278 = vmatmul.bf16.gmra.mxu0 %v2212
      %v2279 = vpop.f32.mrf.mxu0
      %v2280 = vadd.f32 0.0, %v2279
      %v2281 = vpop.f32.mrf.mxu0
      %v2282 = vadd.f32 0.0, %v2281
      %2283 = vmatmul.bf16.gmra.mxu0 %v2215
      %v2284 = vpop.f32.mrf.mxu0
      %v2285 = vadd.f32 0.0, %v2284
      %v2286 = vpop.f32.mrf.mxu0
      %v2287 = vadd.f32 0.0, %v2286
      %2288 = vmatmul.bf16.gmra.mxu0 %v2218
      %v2289 = vpop.f32.mrf.mxu0
      %v2290 = vadd.f32 0.0, %v2289
      %v2291 = vpop.f32.mrf.mxu0
      %v2292 = vadd.f32 0.0, %v2291
      %2293 = vmatmul.bf16.gmra.mxu0 %v2221
      %v2294 = vpop.f32.mrf.mxu0
      %v2295 = vadd.f32 0.0, %v2294
      %v2296 = vpop.f32.mrf.mxu0
      %v2297 = vadd.f32 0.0, %v2296
      %2298 = vmatmul.bf16.gmra.mxu0 %v2224
      %v2299 = vpop.f32.mrf.mxu0
      %v2300 = vadd.f32 0.0, %v2299
      %v2301 = vpop.f32.mrf.mxu0
      %v2302 = vadd.f32 0.0, %v2301
      %2303 = vmatmul.bf16.gmra.mxu0 %v2227
      %v2304 = vpop.f32.mrf.mxu0
      %v2305 = vadd.f32 0.0, %v2304
      %v2306 = vpop.f32.mrf.mxu0
      %v2307 = vadd.f32 0.0, %v2306
      %2308 = vmatmul.bf16.gmra.mxu0 %v2230
      %v2309 = vpop.f32.mrf.mxu0
      %v2310 = vadd.f32 0.0, %v2309
      %v2311 = vpop.f32.mrf.mxu0
      %v2312 = vadd.f32 0.0, %v2311
      %2313 = vmatmul.bf16.gmra.mxu0 %v2233
      %v2314 = vpop.f32.mrf.mxu0
      %v2315 = vadd.f32 0.0, %v2314
      %v2316 = vpop.f32.mrf.mxu0
      %v2317 = vadd.f32 0.0, %v2316
      %2318 = vmatmul.bf16.gmra.mxu0 %v2236
      %v2319 = vpop.f32.mrf.mxu0
      %v2320 = vadd.f32 0.0, %v2319
      %v2321 = vpop.f32.mrf.mxu0
      %v2322 = vadd.f32 0.0, %v2321
      %2323 = vmatmul.bf16.gmra.mxu0 %v2239
      %v2324 = vpop.f32.mrf.mxu0
      %v2325 = vadd.f32 0.0, %v2324
      %v2326 = vpop.f32.mrf.mxu0
      %v2327 = vadd.f32 0.0, %v2326
      %2328 = vmatmul.bf16.gmra.mxu0 %v2242
      %v2329 = vpop.f32.mrf.mxu0
      %v2330 = vadd.f32 0.0, %v2329
      %v2331 = vpop.f32.mrf.mxu0
      %v2332 = vadd.f32 0.0, %v2331
      %2333 = vmatmul.bf16.gmra.mxu0 %v2245
      %v2334 = vpop.f32.mrf.mxu0
      %v2335 = vadd.f32 0.0, %v2334
      %v2336 = vpop.f32.mrf.mxu0
      %v2337 = vadd.f32 0.0, %v2336
      %2338 = vdwg.mxu0
      %v2339 = vld [vmem:[#allocation2] sm:$0xff]
      %v2340 = vld [vmem:[#allocation2 + $0x8] sm:$0xff]
      %v2341 = vld [vmem:[#allocation2 + $0x10] sm:$0xff]
      %v2342 = vld [vmem:[#allocation2 + $0x18] sm:$0xff]
      %v2343 = vld [vmem:[#allocation2 + $0x20] sm:$0xff]
      %v2344 = vld [vmem:[#allocation2 + $0x28] sm:$0xff]
      %v2345 = vld [vmem:[#allocation2 + $0x30] sm:$0xff]
      %v2346 = vld [vmem:[#allocation2 + $0x38] sm:$0xff]
      %v2347 = vld [vmem:[#allocation2 + $0x40] sm:$0xff]
      %v2348 = vld [vmem:[#allocation2 + $0x48] sm:$0xff]
      %v2349 = vld [vmem:[#allocation2 + $0x50] sm:$0xff]
      %v2350 = vld [vmem:[#allocation2 + $0x58] sm:$0xff]
      %v2351 = vld [vmem:[#allocation2 + $0x60] sm:$0xff]
      %v2352 = vld [vmem:[#allocation2 + $0x68] sm:$0xff]
      %v2353 = vld [vmem:[#allocation2 + $0x70] sm:$0xff]
      %v2354 = vld [vmem:[#allocation2 + $0x78] sm:$0xff]
      %v2355 = vld [vmem:[#allocation2 + $0x80] sm:$0xff]
      %v2356 = vld [vmem:[#allocation2 + $0x88] sm:$0xff]
      %v2357 = vld [vmem:[#allocation2 + $0x90] sm:$0xff]
      %v2358 = vld [vmem:[#allocation2 + $0x98] sm:$0xff]
      %v2359 = vld [vmem:[#allocation2 + $0xa0] sm:$0xff]
      %v2360 = vld [vmem:[#allocation2 + $0xa8] sm:$0xff]
      %v2361 = vld [vmem:[#allocation2 + $0xb0] sm:$0xff]
      %v2362 = vld [vmem:[#allocation2 + $0xb8] sm:$0xff]
      %v2363 = vld [vmem:[#allocation2 + $0xc0] sm:$0xff]
      %v2364 = vld [vmem:[#allocation2 + $0xc8] sm:$0xff]
      %v2365 = vld [vmem:[#allocation2 + $0xd0] sm:$0xff]
      %v2366 = vld [vmem:[#allocation2 + $0xd8] sm:$0xff]
      %v2367 = vld [vmem:[#allocation2 + $0xe0] sm:$0xff]
      %v2368 = vld [vmem:[#allocation2 + $0xe8] sm:$0xff]
      %v2369 = vld [vmem:[#allocation2 + $0xf0] sm:$0xff]
      %v2370 = vld [vmem:[#allocation2 + $0xf8] sm:$0xff]
      %v2371 = vadd.f32 %v2339, %v2260
      %v2372 = vadd.f32 %v2340, %v2262
      %v2373 = vadd.f32 %v2341, %v2265
      %v2374 = vadd.f32 %v2342, %v2267
      %v2375 = vadd.f32 %v2343, %v2270
      %v2376 = vadd.f32 %v2344, %v2272
      %v2377 = vadd.f32 %v2345, %v2275
      %v2378 = vadd.f32 %v2346, %v2277
      %v2379 = vadd.f32 %v2347, %v2280
      %v2380 = vadd.f32 %v2348, %v2282
      %v2381 = vadd.f32 %v2349, %v2285
      %v2382 = vadd.f32 %v2350, %v2287
      %v2383 = vadd.f32 %v2351, %v2290
      %v2384 = vadd.f32 %v2352, %v2292
      %v2385 = vadd.f32 %v2353, %v2295
      %v2386 = vadd.f32 %v2354, %v2297
      %v2387 = vadd.f32 %v2355, %v2300
      %v2388 = vadd.f32 %v2356, %v2302
      %v2389 = vadd.f32 %v2357, %v2305
      %v2390 = vadd.f32 %v2358, %v2307
      %v2391 = vadd.f32 %v2359, %v2310
      %v2392 = vadd.f32 %v2360, %v2312
      %v2393 = vadd.f32 %v2361, %v2315
      %v2394 = vadd.f32 %v2362, %v2317
      %v2395 = vadd.f32 %v2363, %v2320
      %v2396 = vadd.f32 %v2364, %v2322
      %v2397 = vadd.f32 %v2365, %v2325
      %v2398 = vadd.f32 %v2366, %v2327
      %v2399 = vadd.f32 %v2367, %v2330
      %v2400 = vadd.f32 %v2368, %v2332
      %v2401 = vadd.f32 %v2369, %v2335
      %v2402 = vadd.f32 %v2370, %v2337
      %2403 = vst.msk [vmem:[#allocation2] sm:$0xff] %vm394, %v2371
      %2404 = vst.msk [vmem:[#allocation2 + $0x8] sm:$0xff] %vm394, %v2372
      %2405 = vst.msk [vmem:[#allocation2 + $0x10] sm:$0xff] %vm394, %v2373
      %2406 = vst.msk [vmem:[#allocation2 + $0x18] sm:$0xff] %vm394, %v2374
      %2407 = vst.msk [vmem:[#allocation2 + $0x20] sm:$0xff] %vm394, %v2375
      %2408 = vst.msk [vmem:[#allocation2 + $0x28] sm:$0xff] %vm394, %v2376
      %2409 = vst.msk [vmem:[#allocation2 + $0x30] sm:$0xff] %vm394, %v2377
      %2410 = vst.msk [vmem:[#allocation2 + $0x38] sm:$0xff] %vm394, %v2378
      %2411 = vst.msk [vmem:[#allocation2 + $0x40] sm:$0xff] %vm394, %v2379
      %2412 = vst.msk [vmem:[#allocation2 + $0x48] sm:$0xff] %vm394, %v2380
      %2413 = vst.msk [vmem:[#allocation2 + $0x50] sm:$0xff] %vm394, %v2381
      %2414 = vst.msk [vmem:[#allocation2 + $0x58] sm:$0xff] %vm394, %v2382
      %2415 = vst.msk [vmem:[#allocation2 + $0x60] sm:$0xff] %vm394, %v2383
      %2416 = vst.msk [vmem:[#allocation2 + $0x68] sm:$0xff] %vm394, %v2384
      %2417 = vst.msk [vmem:[#allocation2 + $0x70] sm:$0xff] %vm394, %v2385
      %2418 = vst.msk [vmem:[#allocation2 + $0x78] sm:$0xff] %vm394, %v2386
      %2419 = vst.msk [vmem:[#allocation2 + $0x80] sm:$0xff] %vm394, %v2387
      %2420 = vst.msk [vmem:[#allocation2 + $0x88] sm:$0xff] %vm394, %v2388
      %2421 = vst.msk [vmem:[#allocation2 + $0x90] sm:$0xff] %vm394, %v2389
      %2422 = vst.msk [vmem:[#allocation2 + $0x98] sm:$0xff] %vm394, %v2390
      %2423 = vst.msk [vmem:[#allocation2 + $0xa0] sm:$0xff] %vm394, %v2391
      %2424 = vst.msk [vmem:[#allocation2 + $0xa8] sm:$0xff] %vm394, %v2392
      %2425 = vst.msk [vmem:[#allocation2 + $0xb0] sm:$0xff] %vm394, %v2393
      %2426 = vst.msk [vmem:[#allocation2 + $0xb8] sm:$0xff] %vm394, %v2394
      %2427 = vst.msk [vmem:[#allocation2 + $0xc0] sm:$0xff] %vm394, %v2395
      %2428 = vst.msk [vmem:[#allocation2 + $0xc8] sm:$0xff] %vm394, %v2396
      %2429 = vst.msk [vmem:[#allocation2 + $0xd0] sm:$0xff] %vm394, %v2397
      %2430 = vst.msk [vmem:[#allocation2 + $0xd8] sm:$0xff] %vm394, %v2398
      %2431 = vst.msk [vmem:[#allocation2 + $0xe0] sm:$0xff] %vm394, %v2399
      %2432 = vst.msk [vmem:[#allocation2 + $0xe8] sm:$0xff] %vm394, %v2400
      %2433 = vst.msk [vmem:[#allocation2 + $0xf0] sm:$0xff] %vm394, %v2401
      %2434 = vst.msk [vmem:[#allocation2 + $0xf8] sm:$0xff] %vm394, %v2402
      %v2435 = vld [vmem:[%s1862 + $0x2] sm:$0xff]
      %v2436 = vld [vmem:[%s1862 + $0xa] sm:$0xff]
      %v2437 = vld [vmem:[%s1862 + $0x12] sm:$0xff]
      %v2438 = vld [vmem:[%s1862 + $0x1a] sm:$0xff]
      %v2439 = vld [vmem:[%s1862 + $0x2a] sm:$0xff]
      %v2440 = vld [vmem:[%s1862 + $0x32] sm:$0xff]
      %v2441 = vld [vmem:[%s1862 + $0x3a] sm:$0xff]
      %v2442 = vld [vmem:[%s1862 + $0x42] sm:$0xff]
      %v2443 = vld [vmem:[%s1862 + $0x52] sm:$0xff]
      %v2444 = vld [vmem:[%s1862 + $0x5a] sm:$0xff]
      %v2445 = vld [vmem:[%s1862 + $0x62] sm:$0xff]
      %v2446 = vld [vmem:[%s1862 + $0x6a] sm:$0xff]
      %v2447 = vld [vmem:[%s1862 + $0x7a] sm:$0xff]
      %v2448 = vld [vmem:[%s1862 + $0x82] sm:$0xff]
      %v2449 = vld [vmem:[%s1862 + $0x8a] sm:$0xff]
      %v2450 = vld [vmem:[%s1862 + $0x92] sm:$0xff]
      %v2451 = vld [vmem:[%s1862 + $0xa2] sm:$0xff]
      %v2452 = vld [vmem:[%s1862 + $0xaa] sm:$0xff]
      %v2453 = vld [vmem:[%s1862 + $0xb2] sm:$0xff]
      %v2454 = vld [vmem:[%s1862 + $0xba] sm:$0xff]
      %v2455 = vld [vmem:[%s1862 + $0xca] sm:$0xff]
      %v2456 = vld [vmem:[%s1862 + $0xd2] sm:$0xff]
      %v2457 = vld [vmem:[%s1862 + $0xda] sm:$0xff]
      %v2458 = vld [vmem:[%s1862 + $0xe2] sm:$0xff]
      %v2459 = vld [vmem:[%s1862 + $0xf2] sm:$0xff]
      %v2460 = vld [vmem:[%s1862 + $0xfa] sm:$0xff]
      %v2461 = vld [vmem:[%s1862 + $0x102] sm:$0xff]
      %v2462 = vld [vmem:[%s1862 + $0x10a] sm:$0xff]
      %v2463 = vld [vmem:[%s1862 + $0x11a] sm:$0xff]
      %v2464 = vld [vmem:[%s1862 + $0x122] sm:$0xff]
      %v2465 = vld [vmem:[%s1862 + $0x12a] sm:$0xff]
      %v2466 = vld [vmem:[%s1862 + $0x132] sm:$0xff]
      %v2467 = vpack.c.bf16 %v2436, %v2435
      %v2468 = vpack.c.bf16 %v2438, %v2437
      %v2469 = vpack.c.bf16 %v2440, %v2439
      %v2470 = vpack.c.bf16 %v2442, %v2441
      %v2471 = vpack.c.bf16 %v2444, %v2443
      %v2472 = vpack.c.bf16 %v2446, %v2445
      %v2473 = vpack.c.bf16 %v2448, %v2447
      %v2474 = vpack.c.bf16 %v2450, %v2449
      %v2475 = vpack.c.bf16 %v2452, %v2451
      %v2476 = vpack.c.bf16 %v2454, %v2453
      %v2477 = vpack.c.bf16 %v2456, %v2455
      %v2478 = vpack.c.bf16 %v2458, %v2457
      %v2479 = vpack.c.bf16 %v2460, %v2459
      %v2480 = vpack.c.bf16 %v2462, %v2461
      %v2481 = vpack.c.bf16 %v2464, %v2463
      %v2482 = vpack.c.bf16 %v2466, %v2465
      %s2483 = scalar_lea.vmem %s1, 16
      %v2484 = vld [vmem:[%s2483] sm:$0x3]
      %v2486 = vsel %vm249, %v2467, 0
      %v2489 = vsel %vm249, %v2468, 0
      %v2492 = vsel %vm249, %v2469, 0
      %v2495 = vsel %vm249, %v2470, 0
      %v2498 = vsel %vm249, %v2471, 0
      %v2501 = vsel %vm249, %v2472, 0
      %v2504 = vsel %vm249, %v2473, 0
      %v2507 = vsel %vm249, %v2474, 0
      %v2510 = vsel %vm249, %v2475, 0
      %v2513 = vsel %vm249, %v2476, 0
      %v2516 = vsel %vm249, %v2477, 0
      %v2519 = vsel %vm249, %v2478, 0
      %v2522 = vsel %vm249, %v2479, 0
      %v2525 = vsel %vm249, %v2480, 0
      %v2528 = vsel %vm249, %v2481, 0
      %v2531 = vsel %vm249, %v2482, 0
      %v2534 = vand.u32 %v2484, %v301
      %2536 = vmatpush.bf16.msra.mxu0 0
      %2537 = vmatpush.bf16.msra.mxu0 0
      %2538 = vmatpush.bf16.msra.mxu0 0
      %2539 = vmatpush.bf16.msra.mxu0 0
      %2540 = vmatpush.bf16.msra.mxu0 0
      %2541 = vmatpush.bf16.msra.mxu0 0
      %2542 = vmatpush.bf16.msra.mxu0 0
      %2543 = vmatpush.bf16.msra.mxu0 %v2534
      %2544 = vmatmul.bf16.gmra.mxu0 %v2486
      %v2545 = vpop.f32.mrf.mxu0
      %v2546 = vadd.f32 0.0, %v2545
      %v2547 = vpop.f32.mrf.mxu0
      %v2548 = vadd.f32 0.0, %v2547
      %2549 = vmatmul.bf16.gmra.mxu0 %v2489
      %v2550 = vpop.f32.mrf.mxu0
      %v2551 = vadd.f32 0.0, %v2550
      %v2552 = vpop.f32.mrf.mxu0
      %v2553 = vadd.f32 0.0, %v2552
      %2554 = vmatmul.bf16.gmra.mxu0 %v2492
      %v2555 = vpop.f32.mrf.mxu0
      %v2556 = vadd.f32 0.0, %v2555
      %v2557 = vpop.f32.mrf.mxu0
      %v2558 = vadd.f32 0.0, %v2557
      %2559 = vmatmul.bf16.gmra.mxu0 %v2495
      %v2560 = vpop.f32.mrf.mxu0
      %v2561 = vadd.f32 0.0, %v2560
      %v2562 = vpop.f32.mrf.mxu0
      %v2563 = vadd.f32 0.0, %v2562
      %2564 = vmatmul.bf16.gmra.mxu0 %v2498
      %v2565 = vpop.f32.mrf.mxu0
      %v2566 = vadd.f32 0.0, %v2565
      %v2567 = vpop.f32.mrf.mxu0
      %v2568 = vadd.f32 0.0, %v2567
      %2569 = vmatmul.bf16.gmra.mxu0 %v2501
      %v2570 = vpop.f32.mrf.mxu0
      %v2571 = vadd.f32 0.0, %v2570
      %v2572 = vpop.f32.mrf.mxu0
      %v2573 = vadd.f32 0.0, %v2572
      %2574 = vmatmul.bf16.gmra.mxu0 %v2504
      %v2575 = vpop.f32.mrf.mxu0
      %v2576 = vadd.f32 0.0, %v2575
      %v2577 = vpop.f32.mrf.mxu0
      %v2578 = vadd.f32 0.0, %v2577
      %2579 = vmatmul.bf16.gmra.mxu0 %v2507
      %v2580 = vpop.f32.mrf.mxu0
      %v2581 = vadd.f32 0.0, %v2580
      %v2582 = vpop.f32.mrf.mxu0
      %v2583 = vadd.f32 0.0, %v2582
      %2584 = vmatmul.bf16.gmra.mxu0 %v2510
      %v2585 = vpop.f32.mrf.mxu0
      %v2586 = vadd.f32 0.0, %v2585
      %v2587 = vpop.f32.mrf.mxu0
      %v2588 = vadd.f32 0.0, %v2587
      %2589 = vmatmul.bf16.gmra.mxu0 %v2513
      %v2590 = vpop.f32.mrf.mxu0
      %v2591 = vadd.f32 0.0, %v2590
      %v2592 = vpop.f32.mrf.mxu0
      %v2593 = vadd.f32 0.0, %v2592
      %2594 = vmatmul.bf16.gmra.mxu0 %v2516
      %v2595 = vpop.f32.mrf.mxu0
      %v2596 = vadd.f32 0.0, %v2595
      %v2597 = vpop.f32.mrf.mxu0
      %v2598 = vadd.f32 0.0, %v2597
      %2599 = vmatmul.bf16.gmra.mxu0 %v2519
      %v2600 = vpop.f32.mrf.mxu0
      %v2601 = vadd.f32 0.0, %v2600
      %v2602 = vpop.f32.mrf.mxu0
      %v2603 = vadd.f32 0.0, %v2602
      %2604 = vmatmul.bf16.gmra.mxu0 %v2522
      %v2605 = vpop.f32.mrf.mxu0
      %v2606 = vadd.f32 0.0, %v2605
      %v2607 = vpop.f32.mrf.mxu0
      %v2608 = vadd.f32 0.0, %v2607
      %2609 = vmatmul.bf16.gmra.mxu0 %v2525
      %v2610 = vpop.f32.mrf.mxu0
      %v2611 = vadd.f32 0.0, %v2610
      %v2612 = vpop.f32.mrf.mxu0
      %v2613 = vadd.f32 0.0, %v2612
      %2614 = vmatmul.bf16.gmra.mxu0 %v2528
      %v2615 = vpop.f32.mrf.mxu0
      %v2616 = vadd.f32 0.0, %v2615
      %v2617 = vpop.f32.mrf.mxu0
      %v2618 = vadd.f32 0.0, %v2617
      %2619 = vmatmul.bf16.gmra.mxu0 %v2531
      %v2620 = vpop.f32.mrf.mxu0
      %v2621 = vadd.f32 0.0, %v2620
      %v2622 = vpop.f32.mrf.mxu0
      %v2623 = vadd.f32 0.0, %v2622
      %2624 = vdwg.mxu0
      %v2625 = vld [vmem:[#allocation2] sm:$0xff]
      %v2626 = vld [vmem:[#allocation2 + $0x8] sm:$0xff]
      %v2627 = vld [vmem:[#allocation2 + $0x10] sm:$0xff]
      %v2628 = vld [vmem:[#allocation2 + $0x18] sm:$0xff]
      %v2629 = vld [vmem:[#allocation2 + $0x20] sm:$0xff]
      %v2630 = vld [vmem:[#allocation2 + $0x28] sm:$0xff]
      %v2631 = vld [vmem:[#allocation2 + $0x30] sm:$0xff]
      %v2632 = vld [vmem:[#allocation2 + $0x38] sm:$0xff]
      %v2633 = vld [vmem:[#allocation2 + $0x40] sm:$0xff]
      %v2634 = vld [vmem:[#allocation2 + $0x48] sm:$0xff]
      %v2635 = vld [vmem:[#allocation2 + $0x50] sm:$0xff]
      %v2636 = vld [vmem:[#allocation2 + $0x58] sm:$0xff]
      %v2637 = vld [vmem:[#allocation2 + $0x60] sm:$0xff]
      %v2638 = vld [vmem:[#allocation2 + $0x68] sm:$0xff]
      %v2639 = vld [vmem:[#allocation2 + $0x70] sm:$0xff]
      %v2640 = vld [vmem:[#allocation2 + $0x78] sm:$0xff]
      %v2641 = vld [vmem:[#allocation2 + $0x80] sm:$0xff]
      %v2642 = vld [vmem:[#allocation2 + $0x88] sm:$0xff]
      %v2643 = vld [vmem:[#allocation2 + $0x90] sm:$0xff]
      %v2644 = vld [vmem:[#allocation2 + $0x98] sm:$0xff]
      %v2645 = vld [vmem:[#allocation2 + $0xa0] sm:$0xff]
      %v2646 = vld [vmem:[#allocation2 + $0xa8] sm:$0xff]
      %v2647 = vld [vmem:[#allocation2 + $0xb0] sm:$0xff]
      %v2648 = vld [vmem:[#allocation2 + $0xb8] sm:$0xff]
      %v2649 = vld [vmem:[#allocation2 + $0xc0] sm:$0xff]
      %v2650 = vld [vmem:[#allocation2 + $0xc8] sm:$0xff]
      %v2651 = vld [vmem:[#allocation2 + $0xd0] sm:$0xff]
      %v2652 = vld [vmem:[#allocation2 + $0xd8] sm:$0xff]
      %v2653 = vld [vmem:[#allocation2 + $0xe0] sm:$0xff]
      %v2654 = vld [vmem:[#allocation2 + $0xe8] sm:$0xff]
      %v2655 = vld [vmem:[#allocation2 + $0xf0] sm:$0xff]
      %v2656 = vld [vmem:[#allocation2 + $0xf8] sm:$0xff]
      %v2657 = vadd.f32 %v2625, %v2546
      %v2658 = vadd.f32 %v2626, %v2548
      %v2659 = vadd.f32 %v2627, %v2551
      %v2660 = vadd.f32 %v2628, %v2553
      %v2661 = vadd.f32 %v2629, %v2556
      %v2662 = vadd.f32 %v2630, %v2558
      %v2663 = vadd.f32 %v2631, %v2561
      %v2664 = vadd.f32 %v2632, %v2563
      %v2665 = vadd.f32 %v2633, %v2566
      %v2666 = vadd.f32 %v2634, %v2568
      %v2667 = vadd.f32 %v2635, %v2571
      %v2668 = vadd.f32 %v2636, %v2573
      %v2669 = vadd.f32 %v2637, %v2576
      %v2670 = vadd.f32 %v2638, %v2578
      %v2671 = vadd.f32 %v2639, %v2581
      %v2672 = vadd.f32 %v2640, %v2583
      %v2673 = vadd.f32 %v2641, %v2586
      %v2674 = vadd.f32 %v2642, %v2588
      %v2675 = vadd.f32 %v2643, %v2591
      %v2676 = vadd.f32 %v2644, %v2593
      %v2677 = vadd.f32 %v2645, %v2596
      %v2678 = vadd.f32 %v2646, %v2598
      %v2679 = vadd.f32 %v2647, %v2601
      %v2680 = vadd.f32 %v2648, %v2603
      %v2681 = vadd.f32 %v2649, %v2606
      %v2682 = vadd.f32 %v2650, %v2608
      %v2683 = vadd.f32 %v2651, %v2611
      %v2684 = vadd.f32 %v2652, %v2613
      %v2685 = vadd.f32 %v2653, %v2616
      %v2686 = vadd.f32 %v2654, %v2618
      %v2687 = vadd.f32 %v2655, %v2621
      %v2688 = vadd.f32 %v2656, %v2623
      %2689 = vst.msk [vmem:[#allocation2] sm:$0xff] %vm394, %v2657
      %2690 = vst.msk [vmem:[#allocation2 + $0x8] sm:$0xff] %vm394, %v2658
      %2691 = vst.msk [vmem:[#allocation2 + $0x10] sm:$0xff] %vm394, %v2659
      %2692 = vst.msk [vmem:[#allocation2 + $0x18] sm:$0xff] %vm394, %v2660
      %2693 = vst.msk [vmem:[#allocation2 + $0x20] sm:$0xff] %vm394, %v2661
      %2694 = vst.msk [vmem:[#allocation2 + $0x28] sm:$0xff] %vm394, %v2662
      %2695 = vst.msk [vmem:[#allocation2 + $0x30] sm:$0xff] %vm394, %v2663
      %2696 = vst.msk [vmem:[#allocation2 + $0x38] sm:$0xff] %vm394, %v2664
      %2697 = vst.msk [vmem:[#allocation2 + $0x40] sm:$0xff] %vm394, %v2665
      %2698 = vst.msk [vmem:[#allocation2 + $0x48] sm:$0xff] %vm394, %v2666
      %2699 = vst.msk [vmem:[#allocation2 + $0x50] sm:$0xff] %vm394, %v2667
      %2700 = vst.msk [vmem:[#allocation2 + $0x58] sm:$0xff] %vm394, %v2668
      %2701 = vst.msk [vmem:[#allocation2 + $0x60] sm:$0xff] %vm394, %v2669
      %2702 = vst.msk [vmem:[#allocation2 + $0x68] sm:$0xff] %vm394, %v2670
      %2703 = vst.msk [vmem:[#allocation2 + $0x70] sm:$0xff] %vm394, %v2671
      %2704 = vst.msk [vmem:[#allocation2 + $0x78] sm:$0xff] %vm394, %v2672
      %2705 = vst.msk [vmem:[#allocation2 + $0x80] sm:$0xff] %vm394, %v2673
      %2706 = vst.msk [vmem:[#allocation2 + $0x88] sm:$0xff] %vm394, %v2674
      %2707 = vst.msk [vmem:[#allocation2 + $0x90] sm:$0xff] %vm394, %v2675
      %2708 = vst.msk [vmem:[#allocation2 + $0x98] sm:$0xff] %vm394, %v2676
      %2709 = vst.msk [vmem:[#allocation2 + $0xa0] sm:$0xff] %vm394, %v2677
      %2710 = vst.msk [vmem:[#allocation2 + $0xa8] sm:$0xff] %vm394, %v2678
      %2711 = vst.msk [vmem:[#allocation2 + $0xb0] sm:$0xff] %vm394, %v2679
      %2712 = vst.msk [vmem:[#allocation2 + $0xb8] sm:$0xff] %vm394, %v2680
      %2713 = vst.msk [vmem:[#allocation2 + $0xc0] sm:$0xff] %vm394, %v2681
      %2714 = vst.msk [vmem:[#allocation2 + $0xc8] sm:$0xff] %vm394, %v2682
      %2715 = vst.msk [vmem:[#allocation2 + $0xd0] sm:$0xff] %vm394, %v2683
      %2716 = vst.msk [vmem:[#allocation2 + $0xd8] sm:$0xff] %vm394, %v2684
      %2717 = vst.msk [vmem:[#allocation2 + $0xe0] sm:$0xff] %vm394, %v2685
      %2718 = vst.msk [vmem:[#allocation2 + $0xe8] sm:$0xff] %vm394, %v2686
      %2719 = vst.msk [vmem:[#allocation2 + $0xf0] sm:$0xff] %vm394, %v2687
      %2720 = vst.msk [vmem:[#allocation2 + $0xf8] sm:$0xff] %vm394, %v2688
      %v2721 = vld [vmem:[#allocation2] sm:$0xff]
      %v2722 = vld [vmem:[#allocation2 + $0x8] sm:$0xff]
      %v2723 = vld [vmem:[#allocation2 + $0x10] sm:$0xff]
      %v2724 = vld [vmem:[#allocation2 + $0x18] sm:$0xff]
      %v2725 = vld [vmem:[#allocation2 + $0x20] sm:$0xff]
      %v2726 = vld [vmem:[#allocation2 + $0x28] sm:$0xff]
      %v2727 = vld [vmem:[#allocation2 + $0x30] sm:$0xff]
      %v2728 = vld [vmem:[#allocation2 + $0x38] sm:$0xff]
      %v2729 = vld [vmem:[#allocation2 + $0x40] sm:$0xff]
      %v2730 = vld [vmem:[#allocation2 + $0x48] sm:$0xff]
      %v2731 = vld [vmem:[#allocation2 + $0x50] sm:$0xff]
      %v2732 = vld [vmem:[#allocation2 + $0x58] sm:$0xff]
      %v2733 = vld [vmem:[#allocation2 + $0x60] sm:$0xff]
      %v2734 = vld [vmem:[#allocation2 + $0x68] sm:$0xff]
      %v2735 = vld [vmem:[#allocation2 + $0x70] sm:$0xff]
      %v2736 = vld [vmem:[#allocation2 + $0x78] sm:$0xff]
      %v2737 = vld [vmem:[#allocation2 + $0x80] sm:$0xff]
      %v2738 = vld [vmem:[#allocation2 + $0x88] sm:$0xff]
      %v2739 = vld [vmem:[#allocation2 + $0x90] sm:$0xff]
      %v2740 = vld [vmem:[#allocation2 + $0x98] sm:$0xff]
      %v2741 = vld [vmem:[#allocation2 + $0xa0] sm:$0xff]
      %v2742 = vld [vmem:[#allocation2 + $0xa8] sm:$0xff]
      %v2743 = vld [vmem:[#allocation2 + $0xb0] sm:$0xff]
      %v2744 = vld [vmem:[#allocation2 + $0xb8] sm:$0xff]
      %v2745 = vld [vmem:[#allocation2 + $0xc0] sm:$0xff]
      %v2746 = vld [vmem:[#allocation2 + $0xc8] sm:$0xff]
      %v2747 = vld [vmem:[#allocation2 + $0xd0] sm:$0xff]
      %v2748 = vld [vmem:[#allocation2 + $0xd8] sm:$0xff]
      %v2749 = vld [vmem:[#allocation2 + $0xe0] sm:$0xff]
      %v2750 = vld [vmem:[#allocation2 + $0xe8] sm:$0xff]
      %v2751 = vld [vmem:[#allocation2 + $0xf0] sm:$0xff]
      %v2752 = vld [vmem:[#allocation2 + $0xf8] sm:$0xff]
      %v2753 = vld [vmem:[%s2] sm:$0x1]
      %v2755 = vperm.slane %v2753, 0
      %v2757 = vadd.f32 %v2721, %v2755
      %v2758 = vadd.f32 %v2722, %v2755
      %v2759 = vadd.f32 %v2723, %v2755
      %v2760 = vadd.f32 %v2724, %v2755
      %v2761 = vadd.f32 %v2725, %v2755
      %v2762 = vadd.f32 %v2726, %v2755
      %v2763 = vadd.f32 %v2727, %v2755
      %v2764 = vadd.f32 %v2728, %v2755
      %v2765 = vadd.f32 %v2729, %v2755
      %v2766 = vadd.f32 %v2730, %v2755
      %v2767 = vadd.f32 %v2731, %v2755
      %v2768 = vadd.f32 %v2732, %v2755
      %v2769 = vadd.f32 %v2733, %v2755
      %v2770 = vadd.f32 %v2734, %v2755
      %v2771 = vadd.f32 %v2735, %v2755
      %v2772 = vadd.f32 %v2736, %v2755
      %v2773 = vadd.f32 %v2737, %v2755
      %v2774 = vadd.f32 %v2738, %v2755
      %v2775 = vadd.f32 %v2739, %v2755
      %v2776 = vadd.f32 %v2740, %v2755
      %v2777 = vadd.f32 %v2741, %v2755
      %v2778 = vadd.f32 %v2742, %v2755
      %v2779 = vadd.f32 %v2743, %v2755
      %v2780 = vadd.f32 %v2744, %v2755
      %v2781 = vadd.f32 %v2745, %v2755
      %v2782 = vadd.f32 %v2746, %v2755
      %v2783 = vadd.f32 %v2747, %v2755
      %v2784 = vadd.f32 %v2748, %v2755
      %v2785 = vadd.f32 %v2749, %v2755
      %v2786 = vadd.f32 %v2750, %v2755
      %v2787 = vadd.f32 %v2751, %v2755
      %v2788 = vadd.f32 %v2752, %v2755
      %v2789 = vmax.f32 %v2757, 0.0
      %v2790 = vmax.f32 %v2758, 0.0
      %v2791 = vmax.f32 %v2759, 0.0
      %v2792 = vmax.f32 %v2760, 0.0
      %v2793 = vmax.f32 %v2761, 0.0
      %v2794 = vmax.f32 %v2762, 0.0
      %v2795 = vmax.f32 %v2763, 0.0
      %v2796 = vmax.f32 %v2764, 0.0
      %v2797 = vmax.f32 %v2765, 0.0
      %v2798 = vmax.f32 %v2766, 0.0
      %v2799 = vmax.f32 %v2767, 0.0
      %v2800 = vmax.f32 %v2768, 0.0
      %v2801 = vmax.f32 %v2769, 0.0
      %v2802 = vmax.f32 %v2770, 0.0
      %v2803 = vmax.f32 %v2771, 0.0
      %v2804 = vmax.f32 %v2772, 0.0
      %v2805 = vmax.f32 %v2773, 0.0
      %v2806 = vmax.f32 %v2774, 0.0
      %v2807 = vmax.f32 %v2775, 0.0
      %v2808 = vmax.f32 %v2776, 0.0
      %v2809 = vmax.f32 %v2777, 0.0
      %v2810 = vmax.f32 %v2778, 0.0
      %v2811 = vmax.f32 %v2779, 0.0
      %v2812 = vmax.f32 %v2780, 0.0
      %v2813 = vmax.f32 %v2781, 0.0
      %v2814 = vmax.f32 %v2782, 0.0
      %v2815 = vmax.f32 %v2783, 0.0
      %v2816 = vmax.f32 %v2784, 0.0
      %v2817 = vmax.f32 %v2785, 0.0
      %v2818 = vmax.f32 %v2786, 0.0
      %v2819 = vmax.f32 %v2787, 0.0
      %v2820 = vmax.f32 %v2788, 0.0
      %2821 = vst.msk [vmem:[%s194] sm:$0xff] %vm394, %v2789
      %2822 = vst.msk [vmem:[%s194 + $0x8] sm:$0xff] %vm394, %v2790
      %2823 = vst.msk [vmem:[%s194 + $0x10] sm:$0xff] %vm394, %v2791
      %2824 = vst.msk [vmem:[%s194 + $0x18] sm:$0xff] %vm394, %v2792
      %2825 = vst.msk [vmem:[%s194 + $0x20] sm:$0xff] %vm394, %v2793
      %2826 = vst.msk [vmem:[%s194 + $0x28] sm:$0xff] %vm394, %v2794
      %2827 = vst.msk [vmem:[%s194 + $0x30] sm:$0xff] %vm394, %v2795
      %2828 = vst.msk [vmem:[%s194 + $0x38] sm:$0xff] %vm394, %v2796
      %2829 = vst.msk [vmem:[%s194 + $0x40] sm:$0xff] %vm394, %v2797
      %2830 = vst.msk [vmem:[%s194 + $0x48] sm:$0xff] %vm394, %v2798
      %2831 = vst.msk [vmem:[%s194 + $0x50] sm:$0xff] %vm394, %v2799
      %2832 = vst.msk [vmem:[%s194 + $0x58] sm:$0xff] %vm394, %v2800
      %2833 = vst.msk [vmem:[%s194 + $0x60] sm:$0xff] %vm394, %v2801
      %2834 = vst.msk [vmem:[%s194 + $0x68] sm:$0xff] %vm394, %v2802
      %2835 = vst.msk [vmem:[%s194 + $0x70] sm:$0xff] %vm394, %v2803
      %2836 = vst.msk [vmem:[%s194 + $0x78] sm:$0xff] %vm394, %v2804
      %2837 = vst.msk [vmem:[%s194 + $0x80] sm:$0xff] %vm394, %v2805
      %2838 = vst.msk [vmem:[%s194 + $0x88] sm:$0xff] %vm394, %v2806
      %2839 = vst.msk [vmem:[%s194 + $0x90] sm:$0xff] %vm394, %v2807
      %2840 = vst.msk [vmem:[%s194 + $0x98] sm:$0xff] %vm394, %v2808
      %2841 = vst.msk [vmem:[%s194 + $0xa0] sm:$0xff] %vm394, %v2809
      %2842 = vst.msk [vmem:[%s194 + $0xa8] sm:$0xff] %vm394, %v2810
      %2843 = vst.msk [vmem:[%s194 + $0xb0] sm:$0xff] %vm394, %v2811
      %2844 = vst.msk [vmem:[%s194 + $0xb8] sm:$0xff] %vm394, %v2812
      %2845 = vst.msk [vmem:[%s194 + $0xc0] sm:$0xff] %vm394, %v2813
      %2846 = vst.msk [vmem:[%s194 + $0xc8] sm:$0xff] %vm394, %v2814
      %2847 = vst.msk [vmem:[%s194 + $0xd0] sm:$0xff] %vm394, %v2815
      %2848 = vst.msk [vmem:[%s194 + $0xd8] sm:$0xff] %vm394, %v2816
      %2849 = vst.msk [vmem:[%s194 + $0xe0] sm:$0xff] %vm394, %v2817
      %2850 = vst.msk [vmem:[%s194 + $0xe8] sm:$0xff] %vm394, %v2818
      %2851 = vst.msk [vmem:[%s194 + $0xf0] sm:$0xff] %vm394, %v2819
      %2852 = vst.msk [vmem:[%s194 + $0xf8] sm:$0xff] %vm394, %v2820
      %s2853 = smul.u32 8, %s19
      %p2854 = scmp.lt.s32.totalorder %s18, 1
      %s2855 = scalar_select %p2854, %s18, 1
      %p2856 = scmp.lt.s32.totalorder %s2853, 31
      %s2857 = scalar_select %p2856, %s2853, 31
      %s2858 = smul.addr %s2857, 4
      %s2859 = smul.addr %s2855, 128
      %s2860 = sadd.s32 %s2858, %s2859
      %s2861 = smul.addr %s2860, 8
      %s2862 = scalar_lea.vmem %s3, %s2861
      // Predicated region
      $region33: #{tpu_custom_call.1} parent=31 // pred_check
        %p2863 = pneg %p114
      $region34: #{tpu_custom_call.1} parent=31 // pred_check_branch
        %2865 = sbr.rel (%p2863) target = $region36
      $region35: #{tpu_custom_call.1} parent=31 // pred_region
        %s2866 = smul.u32 8, %s19
      $region36: #{tpu_custom_call.1} parent=31 // pred_fallthru
        _
    $region32: #{tpu_custom_call.1} parent=5 // pred_fallthru
      _
    %p2867 = scmp.le.s32.totalorder 2, %s9
    // Predicated region
    $region37: #{tpu_custom_call.1} parent=5 // pred_check
      %p2868 = pneg %p2867
    $region38: #{tpu_custom_call.1} parent=5 // pred_check_branch
      %2870 = sbr.rel (%p2868) target = $region40
    $region39: #{tpu_custom_call.1} parent=5 // pred_region
      %s2871 = ssub.s32 %s9, 2
      // Predicated region
      $region41: #{tpu_custom_call.1} parent=39 // pred_check
        %p2872 = pneg %p120
      $region42: #{tpu_custom_call.1} parent=39 // pred_check_branch
        %2874 = sbr.rel (%p2872) target = $region44
      $region43: #{tpu_custom_call.1} parent=39 // pred_region
        %s2875 = smul.u32 8, %s21
        %p2876 = scmp.lt.s32.totalorder %s20, 1
        %s2877 = scalar_select %p2876, %s20, 1
        %p2878 = scmp.lt.s32.totalorder %s2875, 31
        %s2879 = scalar_select %p2878, %s2875, 31
        %s2880 = smul.addr %s2879, 4
        %s2881 = smul.addr %s2877, 128
        %s2882 = sadd.s32 %s2880, %s2881
        %s2883 = smul.addr %s2882, 8
        %s2884 = scalar_lea.vmem %s3, %s2883
      $region44: #{tpu_custom_call.1} parent=39 // pred_fallthru
        _
    $region40: #{tpu_custom_call.1} parent=5 // pred_fallthru
      _
  $region6: #{tpu_custom_call.1} parent=0 // loop_footer
    %s13 = sadd.s32 1, %s9
  $region7: #{tpu_custom_call.1} parent=0 // loop_footer_branch
    %8 = sbr.rel target = $region3
  $region8: #{tpu_custom_call.1} parent=0 // loop_exit
    _

</llo_original>
